<compile_context>
chip_gen: v7x
topology: tpu7x:2x2x1
jax: 0.10.0
libtpu: 0.0.40
codegen_flags: <defaults>
</compile_context>

<pallas_src>
import math
from functools import partial

import jax
import jax.numpy as jnp
from jax import lax
from jax.experimental import pallas as pl
from jax.experimental.pallas import tpu as pltpu  # noqa: F401  (TPU backend)

LANE = 128


# ----------------------------------------------------------------------------
# Config (small, synthetic)
# ----------------------------------------------------------------------------
class Config:
    hidden_size = 32
    num_attention_heads = 4
    qk_rank = 16                 # low-rank Q/K dimension for Sub layers
    intermediate_size = 64       # regular Roberta layer FFN width
    intermediate_rank = 32       # Sub layer FFN width
    num_hidden_layers = 2
    layers_retained = {0}        # layer 0 = regular RobertaLayer, layer 1 = Sub
    layer_norm_eps = 1e-12
    hidden_act = "gelu_new"      # tanh-approx GELU (HF ACT2FN['gelu_new'])
    is_decoder = False
    add_cross_attention = False


# ----------------------------------------------------------------------------
# In-kernel helpers
# ----------------------------------------------------------------------------
def _layer_norm(y, w, b, eps):
    mu = jnp.mean(y, axis=-1, keepdims=True)
    var = jnp.mean((y - mu) ** 2, axis=-1, keepdims=True)
    return (y - mu) * lax.rsqrt(var + eps) * w + b


def _gelu_new(x):
    # HF 'gelu_new': 0.5 * x * (1 + tanh(sqrt(2/pi) * (x + 0.044715 * x**3)))
    c = math.sqrt(2.0 / math.pi)
    return 0.5 * x * (1.0 + jnp.tanh(c * (x + 0.044715 * x * x * x)))


# ----------------------------------------------------------------------------
# Fused encoder kernel (one invocation, no grid)
# ----------------------------------------------------------------------------
def encoder_kernel(x_ref, mask_ref, w_ref, b_ref, out_ref, *,
                   B, S, H, num_heads, eps, layer_meta):
    """Whole encoder fused: per layer QKV -> attention -> out-dense -> +res ->
    LN -> FFN -> gelu_new -> dense -> +res -> LN.  Weights/biases are sliced
    from two packed VMEM slabs with static offsets."""
    nh = num_heads
    x2 = x_ref[...]                                        # (B*S, H)

    # Additive key mask, hoisted and head-tiled ONCE:
    # (B, 1, S) -> (B, S, S) -> (nh*B, S, S), batch index = h*B + b.
    mask3 = jnp.broadcast_to(mask_ref[...], (B, S, S))
    mask_hb = jnp.concatenate([mask3] * nh, axis=0)

    for li, (roff, Dq, I) in enumerate(layer_meta):
        dq = Dq // nh                 # (sub_)attention_head_size
        dv = H // nh                  # attention_head_size
        Nqkv = 2 * Dq + H
        scale = 1.0 / math.sqrt(dq)
        boff = li * 8

        # ---- static slab slices (weights) ---------------------------------
        wqkv = w_ref[roff:roff + H, 0:Nqkv]
        wo   = w_ref[roff + H:roff + 2 * H, 0:H]
        w1   = w_ref[roff + 2 * H:roff + 3 * H, 0:I]
        w2   = w_ref[roff + 3 * H:roff + 3 * H + I, 0:H]

        # ---- static slab slices (biases / LN) ------------------------------
        bqkv = b_ref[boff + 0:boff + 1, 0:Nqkv]
        bo   = b_ref[boff + 1:boff + 2, 0:H]
        ln1w = b_ref[boff + 2:boff + 3, 0:H]
        ln1b = b_ref[boff + 3:boff + 4, 0:H]
        b1   = b_ref[boff + 4:boff + 5, 0:I]
        b2   = b_ref[boff + 5:boff + 6, 0:H]
        ln2w = b_ref[boff + 6:boff + 7, 0:H]
        ln2b = b_ref[boff + 7:boff + 8, 0:H]

        # ---- self-attention -------------------------------------------------
        # Fused QKV projection: one MXU dispatch, one bias add.
        qkv = jnp.dot(x2, wqkv, preferred_element_type=jnp.float32) + bqkv
        q3 = qkv[:, 0:Dq].reshape(B, S, Dq)
        k3 = qkv[:, Dq:2 * Dq].reshape(B, S, Dq)
        v3 = qkv[:, 2 * Dq:Nqkv].reshape(B, S, H)

        # Fold heads into the batch axis (order h-major): (nh*B, S, d).
        qh = jnp.concatenate([q3[:, :, h * dq:(h + 1) * dq] for h in range(nh)], axis=0)
        kh = jnp.concatenate([k3[:, :, h * dq:(h + 1) * dq] for h in range(nh)], axis=0)
        vh = jnp.concatenate([v3[:, :, h * dv:(h + 1) * dv] for h in range(nh)], axis=0)

        s = jnp.einsum("bqd,bkd->bqk", qh, kh, preferred_element_type=jnp.float32)
        s = s * scale + mask_hb
        s = s - jnp.max(s, axis=-1, keepdims=True)
        p = jnp.exp(s)
        denom = jnp.sum(p, axis=-1, keepdims=True)         # (nh*B, S, 1)
        ctx_hb = jnp.einsum("bqk,bkd->bqd", p, vh, preferred_element_type=jnp.float32)
        ctx_hb = ctx_hb / denom                            # deferred normalization

        # Merge heads back: (nh*B, S, dv) -> (B, S, H) -> (B*S, H).
        ctx = jnp.concatenate([ctx_hb[h * B:(h + 1) * B] for h in range(nh)],
                              axis=-1).reshape(B * S, H)

        attn_out = jnp.dot(ctx, wo, preferred_element_type=jnp.float32) + bo
        x2 = _layer_norm(attn_out + x2, ln1w, ln1b, eps)

        # ---- feed-forward ----------------------------------------------------
        hmid = _gelu_new(jnp.dot(x2, w1, preferred_element_type=jnp.float32) + b1)
        y2 = jnp.dot(hmid, w2, preferred_element_type=jnp.float32) + b2 + x2
        x2 = _layer_norm(y2, ln2w, ln2b, eps)

    # Lane-dense store: regroup (B*S, H) -> (B*S*H/128, 128) so the HBM
    # writeback is an unmasked, full-lane store.
    group = LANE // H
    x4 = x2.reshape((B * S) // group, group, H)
    out_ref[...] = jnp.concatenate([x4[:, j, :] for j in range(group)], axis=-1)


# ----------------------------------------------------------------------------
# Parameter packing (two contiguous f32 slabs, lane width 128)
# ----------------------------------------------------------------------------
def _pad_lanes(m, lane=LANE):
    return jnp.pad(m, ((0, 0), (0, lane - m.shape[1])))


def pack_params(layer_params, H):
    """Weights slab: per layer rows [wqkv(H) | wo(H) | w1(H) | w2(I)], width 128.
    Bias slab: per layer 8 rows [bqkv, bo, ln1w, ln1b, b1, b2, ln2w, ln2b]."""
    w_blocks, b_rows, meta = [], [], []
    roff = 0
    for lp in layer_params:
        a, f = lp["attn"], lp["ffn"]
        Dq = a["wq"].shape[1]
        I = f["w1"].shape[1]
        wqkv = jnp.concatenate([a["wq"], a["wk"], a["wv"]], axis=1)   # (H, 2Dq+H)
        for m in (wqkv, a["wo"], f["w1"], f["w2"]):
            w_blocks.append(_pad_lanes(m))
        bqkv = jnp.concatenate([a["bq"], a["bk"], a["bv"]], axis=1)   # (1, 2Dq+H)
        for r in (bqkv, a["bo"], a["ln_w"], a["ln_b"],
                  f["b1"], f["b2"], f["ln_w"], f["ln_b"]):
            b_rows.append(_pad_lanes(r))
        meta.append((roff, Dq, I))
        roff += 3 * H + I
    w_slab = jnp.concatenate(w_blocks, axis=0)    # (sum(3H+I), 128)
    b_slab = jnp.concatenate(b_rows, axis=0)      # (8*L, 128)
    return w_slab, b_slab, tuple(meta)


# ----------------------------------------------------------------------------
# Wrapper (single pallas_call for the whole encoder)
# ----------------------------------------------------------------------------
def encoder_forward(hidden_states, attention_mask, layer_params, cfg):
    """SubRobertaEncoder.forward (return_dict=False, eval mode).

    hidden_states: (B, S, H); attention_mask: additive mask (B, S) with 0 for
    keep and large-negative for masked positions (HF "extended" mask)."""
    B, S, H = hidden_states.shape
    nh = cfg.num_attention_heads
    assert LANE % H == 0 and (B * S) % (LANE // H) == 0 and (B * S * H) % LANE == 0

    x_flat = hidden_states.reshape(B * S, H)       # pre-flattened: no in-kernel reshape
    mask_b1s = attention_mask[:, None, :]          # (B, 1, S), O(S) HBM

    w_slab, b_slab, meta = pack_params(layer_params, H)

    # Advisory cost estimate for the XLA scheduler.
    BS = B * S
    flops, trans = 0, 0
    for (_, Dq, I) in meta:
        Nqkv = 2 * Dq + H
        flops += 2 * BS * H * Nqkv            # fused QKV
        flops += 2 * B * S * S * Dq           # QK^T (all heads)
        flops += 2 * B * S * S * H            # PV   (all heads)
        flops += 2 * BS * H * H               # attention output dense
        flops += 2 * BS * H * I + 2 * BS * I * H   # FFN
        trans += B * nh * S * S               # exp (softmax)
        trans += BS * I                       # tanh (gelu_new)
    bytes_accessed = 4 * (x_flat.size + mask_b1s.size + w_slab.size
                          + b_slab.size + BS * H)

    kern = partial(encoder_kernel, B=B, S=S, H=H, num_heads=nh,
                   eps=cfg.layer_norm_eps, layer_meta=meta)

    # No grid: all weights (<100 KiB packed) + activations (2 KiB) live in
    # VMEM for the whole forward pass; inputs = 4 DMAs total.
    out2d = pl.pallas_call(
        kern,
        out_shape=jax.ShapeDtypeStruct((BS * H // LANE, LANE), jnp.float32),
        cost_estimate=pl.CostEstimate(flops=flops, transcendentals=trans,
                                      bytes_accessed=bytes_accessed),
    )(x_flat, mask_b1s, w_slab, b_slab)

    return out2d.reshape(B, S, H)


# ----------------------------------------------------------------------------
# Pure-JAX reference (for correctness check)
# ----------------------------------------------------------------------------
def reference_forward(hidden_states, attention_mask, layer_params, cfg):
    B, S, H = hidden_states.shape
    nh = cfg.num_attention_heads
    eps = cfg.layer_norm_eps

    def ln(y, w, b):
        mu = y.mean(-1, keepdims=True)
        var = ((y - mu) ** 2).mean(-1, keepdims=True)
        return (y - mu) / jnp.sqrt(var + eps) * w + b

    x = hidden_states
    for lp in layer_params:
        a = lp["attn"]
        Dq = a["wq"].shape[1]
        dq, dv = Dq // nh, H // nh
        q = (x @ a["wq"] + a["bq"][0]).reshape(B, S, nh, dq).transpose(0, 2, 1, 3)
        k = (x @ a["wk"] + a["bk"][0]).reshape(B, S, nh, dq).transpose(0, 2, 1, 3)
        v = (x @ a["wv"] + a["bv"][0]).reshape(B, S, nh, dv).transpose(0, 2, 1, 3)
        s = jnp.einsum("bhqd,bhkd->bhqk", q, k) / math.sqrt(dq)
        s = s + attention_mask[:, None, None, :]
        p = jax.nn.softmax(s, axis=-1)
        ctx = jnp.einsum("bhqk,bhkd->bhqd", p, v).transpose(0, 2, 1, 3).reshape(B, S, H)
        x = ln(ctx @ a["wo"] + a["bo"][0] + x, a["ln_w"][0], a["ln_b"][0])

        f = lp["ffn"]
        h = x @ f["w1"] + f["b1"][0]
        h = 0.5 * h * (1.0 + jnp.tanh(math.sqrt(2.0 / math.pi)
                                      * (h + 0.044715 * h ** 3)))
        x = ln(h @ f["w2"] + f["b2"][0] + x, f["ln_w"][0], f["ln_b"][0])
    return x


# ----------------------------------------------------------------------------
# Deterministic parameter init (non-trivial biases/LN to exercise the packing)
# ----------------------------------------------------------------------------
def init_params(cfg, key):
    H = cfg.hidden_size
    params = []
    for i in range(cfg.num_hidden_layers):
        retained = i in cfg.layers_retained
        Dq = H if retained else cfg.qk_rank                       # Q/K width
        I = cfg.intermediate_size if retained else cfg.intermediate_rank

        def nxt():
            nonlocal key
            key, sub = jax.random.split(key)
            return sub

        def w(shape):
            return (0.02 * jax.random.normal(nxt(), shape)).astype(jnp.float32)

        attn = dict(
            wq=w((H, Dq)), bq=w((1, Dq)),
            wk=w((H, Dq)), bk=w((1, Dq)),
            wv=w((H, H)), bv=w((1, H)),
            wo=w((H, H)), bo=w((1, H)),
            ln_w=(1.0 + w((1, H))).astype(jnp.float32),
            ln_b=w((1, H)),
        )
        ffn = dict(
            w1=w((H, I)), b1=w((1, I)),
            w2=w((I, H)), b2=w((1, H)),
            ln_w=(1.0 + w((1, H))).astype(jnp.float32),
            ln_b=w((1, H)),
        )
        params.append(dict(attn=attn, ffn=ffn))
    return params


# ----------------------------------------------------------------------------
# Main
# ----------------------------------------------------------------------------
if __name__ == "__main__":
    cfg = Config()
    B, S, H = 2, 8, cfg.hidden_size

    key = jax.random.PRNGKey(0)
    key, k_x = jax.random.split(key)
    hidden_states = jax.random.normal(k_x, (B, S, H), dtype=jnp.float32)

    # additive extended attention mask: 0 = keep, -1e9 = masked.
    # mask out the last two positions of batch element 1.
    attention_mask = jnp.zeros((B, S), jnp.float32)
    attention_mask = attention_mask.at[1, -2:].set(-1e9)

    layer_params = init_params(cfg, key)

    out = encoder_forward(hidden_states, attention_mask, layer_params, cfg)
    out = jax.block_until_ready(out)

    ref = reference_forward(hidden_states, attention_mask, layer_params, cfg)
    assert out.shape == (B, S, H)
    assert jnp.allclose(out, ref, rtol=1e-4, atol=1e-4), (
        float(jnp.max(jnp.abs(out - ref))))

    print("KERNEL_OK")
</pallas_src>

<mosaic_0001>
module attributes {stable_mosaic.version = 11 : i64} {
  func.func @encoder_kernel(%arg0: memref<16x32xf32, #tpu.memory_space<vmem>>, %arg1: memref<2x1x8xf32, #tpu.memory_space<vmem>>, %arg2: memref<288x128xf32, #tpu.memory_space<vmem>>, %arg3: memref<16x128xf32, #tpu.memory_space<vmem>>, %arg4: memref<4x128xf32, #tpu.memory_space<vmem>>) attributes {dimension_semantics = [], scalar_prefetch = 0 : i64, scratch_operands = 0 : i64, tpu.core_type = #tpu.core_type<tc>} {
    %c0 = arith.constant 0 : index
    %c0_0 = arith.constant 0 : index
    %0 = vector.load %arg0[%c0, %c0_0] : memref<16x32xf32, #tpu.memory_space<vmem>>, vector<16x32xf32>
    %c0_1 = arith.constant 0 : index
    %c0_2 = arith.constant 0 : index
    %c0_3 = arith.constant 0 : index
    %1 = vector.load %arg1[%c0_1, %c0_2, %c0_3] : memref<2x1x8xf32, #tpu.memory_space<vmem>>, vector<2x1x8xf32>
    %2 = vector.shape_cast %1 : vector<2x1x8xf32> to vector<2x1x8xf32>
    %3 = vector.broadcast %2 : vector<2x1x8xf32> to vector<2x8x8xf32>
    %4 = tpu.concatenate %3, %3, %3, %3 in 0 : vector<2x8x8xf32>, vector<2x8x8xf32>, vector<2x8x8xf32>, vector<2x8x8xf32> -> vector<8x8x8xf32>
    %c0_4 = arith.constant 0 : index
    %c0_5 = arith.constant 0 : index
    %5 = vector.load %arg2[%c0_4, %c0_5] : memref<288x128xf32, #tpu.memory_space<vmem>>, vector<32x96xf32>
    %c32 = arith.constant 32 : index
    %c0_6 = arith.constant 0 : index
    %6 = vector.load %arg2[%c32, %c0_6] : memref<288x128xf32, #tpu.memory_space<vmem>>, vector<32x32xf32>
    %c64 = arith.constant 64 : index
    %c0_7 = arith.constant 0 : index
    %7 = vector.load %arg2[%c64, %c0_7] : memref<288x128xf32, #tpu.memory_space<vmem>>, vector<32x64xf32>
    %c96 = arith.constant 96 : index
    %c0_8 = arith.constant 0 : index
    %8 = vector.load %arg2[%c96, %c0_8] : memref<288x128xf32, #tpu.memory_space<vmem>>, vector<64x32xf32>
    %c0_9 = arith.constant 0 : index
    %c0_10 = arith.constant 0 : index
    %9 = vector.load %arg3[%c0_9, %c0_10] : memref<16x128xf32, #tpu.memory_space<vmem>>, vector<1x96xf32>
    %c1 = arith.constant 1 : index
    %c0_11 = arith.constant 0 : index
    %10 = vector.load %arg3[%c1, %c0_11] : memref<16x128xf32, #tpu.memory_space<vmem>>, vector<1x32xf32>
    %c2 = arith.constant 2 : index
    %c0_12 = arith.constant 0 : index
    %11 = vector.load %arg3[%c2, %c0_12] : memref<16x128xf32, #tpu.memory_space<vmem>>, vector<1x32xf32>
    %c3 = arith.constant 3 : index
    %c0_13 = arith.constant 0 : index
    %12 = vector.load %arg3[%c3, %c0_13] : memref<16x128xf32, #tpu.memory_space<vmem>>, vector<1x32xf32>
    %c4 = arith.constant 4 : index
    %c0_14 = arith.constant 0 : index
    %13 = vector.load %arg3[%c4, %c0_14] : memref<16x128xf32, #tpu.memory_space<vmem>>, vector<1x64xf32>
    %c5 = arith.constant 5 : index
    %c0_15 = arith.constant 0 : index
    %14 = vector.load %arg3[%c5, %c0_15] : memref<16x128xf32, #tpu.memory_space<vmem>>, vector<1x32xf32>
    %c6 = arith.constant 6 : index
    %c0_16 = arith.constant 0 : index
    %15 = vector.load %arg3[%c6, %c0_16] : memref<16x128xf32, #tpu.memory_space<vmem>>, vector<1x32xf32>
    %c7 = arith.constant 7 : index
    %c0_17 = arith.constant 0 : index
    %16 = vector.load %arg3[%c7, %c0_17] : memref<16x128xf32, #tpu.memory_space<vmem>>, vector<1x32xf32>
    %cst = arith.constant dense<0.000000e+00> : vector<16x96xf32>
    %17 = tpu.matmul %0, %5, %cst {dimension_numbers = #tpu.dot_dimension_numbers<[1], [0], [0], [1], [0, 0, 1, 1], [], []>} : vector<16x32xf32>, vector<32x96xf32>, vector<16x96xf32> -> vector<16x96xf32>
    %18 = vector.broadcast %9 : vector<1x96xf32> to vector<16x96xf32>
    %19 = arith.addf %17, %18 : vector<16x96xf32>
    %20 = vector.extract_strided_slice %19 {offsets = [0, 0], sizes = [16, 32], strides = [1, 1]} : vector<16x96xf32> to vector<16x32xf32>
    %21 = vector.shape_cast %20 : vector<16x32xf32> to vector<2x8x32xf32>
    %22 = vector.extract_strided_slice %19 {offsets = [0, 32], sizes = [16, 32], strides = [1, 1]} : vector<16x96xf32> to vector<16x32xf32>
    %23 = vector.shape_cast %22 : vector<16x32xf32> to vector<2x8x32xf32>
    %24 = vector.extract_strided_slice %19 {offsets = [0, 64], sizes = [16, 32], strides = [1, 1]} : vector<16x96xf32> to vector<16x32xf32>
    %25 = vector.shape_cast %24 : vector<16x32xf32> to vector<2x8x32xf32>
    %26 = vector.extract_strided_slice %21 {offsets = [0, 0, 0], sizes = [2, 8, 8], strides = [1, 1, 1]} : vector<2x8x32xf32> to vector<2x8x8xf32>
    %27 = vector.extract_strided_slice %21 {offsets = [0, 0, 8], sizes = [2, 8, 8], strides = [1, 1, 1]} : vector<2x8x32xf32> to vector<2x8x8xf32>
    %28 = vector.extract_strided_slice %21 {offsets = [0, 0, 16], sizes = [2, 8, 8], strides = [1, 1, 1]} : vector<2x8x32xf32> to vector<2x8x8xf32>
    %29 = vector.extract_strided_slice %21 {offsets = [0, 0, 24], sizes = [2, 8, 8], strides = [1, 1, 1]} : vector<2x8x32xf32> to vector<2x8x8xf32>
    %30 = tpu.concatenate %26, %27, %28, %29 in 0 : vector<2x8x8xf32>, vector<2x8x8xf32>, vector<2x8x8xf32>, vector<2x8x8xf32> -> vector<8x8x8xf32>
    %31 = vector.extract_strided_slice %23 {offsets = [0, 0, 0], sizes = [2, 8, 8], strides = [1, 1, 1]} : vector<2x8x32xf32> to vector<2x8x8xf32>
    %32 = vector.extract_strided_slice %23 {offsets = [0, 0, 8], sizes = [2, 8, 8], strides = [1, 1, 1]} : vector<2x8x32xf32> to vector<2x8x8xf32>
    %33 = vector.extract_strided_slice %23 {offsets = [0, 0, 16], sizes = [2, 8, 8], strides = [1, 1, 1]} : vector<2x8x32xf32> to vector<2x8x8xf32>
    %34 = vector.extract_strided_slice %23 {offsets = [0, 0, 24], sizes = [2, 8, 8], strides = [1, 1, 1]} : vector<2x8x32xf32> to vector<2x8x8xf32>
    %35 = tpu.concatenate %31, %32, %33, %34 in 0 : vector<2x8x8xf32>, vector<2x8x8xf32>, vector<2x8x8xf32>, vector<2x8x8xf32> -> vector<8x8x8xf32>
    %36 = vector.extract_strided_slice %25 {offsets = [0, 0, 0], sizes = [2, 8, 8], strides = [1, 1, 1]} : vector<2x8x32xf32> to vector<2x8x8xf32>
    %37 = vector.extract_strided_slice %25 {offsets = [0, 0, 8], sizes = [2, 8, 8], strides = [1, 1, 1]} : vector<2x8x32xf32> to vector<2x8x8xf32>
    %38 = vector.extract_strided_slice %25 {offsets = [0, 0, 16], sizes = [2, 8, 8], strides = [1, 1, 1]} : vector<2x8x32xf32> to vector<2x8x8xf32>
    %39 = vector.extract_strided_slice %25 {offsets = [0, 0, 24], sizes = [2, 8, 8], strides = [1, 1, 1]} : vector<2x8x32xf32> to vector<2x8x8xf32>
    %40 = tpu.concatenate %36, %37, %38, %39 in 0 : vector<2x8x8xf32>, vector<2x8x8xf32>, vector<2x8x8xf32>, vector<2x8x8xf32> -> vector<8x8x8xf32>
    "tpu.trace_start"() <{level = 10 : i32, message = "bqd,bkd->bqk"}> : () -> ()
    %cst_18 = arith.constant dense<0.000000e+00> : vector<8x8x8xf32>
    %41 = tpu.matmul %30, %35, %cst_18 {dimension_numbers = #tpu.dot_dimension_numbers<[2], [2], [1], [1], [0, 0, 0, 1, 1, 1], [0], [0]>} : vector<8x8x8xf32>, vector<8x8x8xf32>, vector<8x8x8xf32> -> vector<8x8x8xf32>
    "tpu.trace_stop"() : () -> ()
    %cst_19 = arith.constant 0.353553385 : f32
    %42 = vector.broadcast %cst_19 : f32 to vector<8x8x8xf32>
    %43 = arith.mulf %41, %42 : vector<8x8x8xf32>
    %44 = arith.addf %43, %4 : vector<8x8x8xf32>
    %cst_20 = arith.constant dense<0xFF800000> : vector<8x8xf32>
    %45 = vector.multi_reduction <maximumf>, %44, %cst_20 [2] : vector<8x8x8xf32> to vector<8x8xf32>
    %46 = vector.shape_cast %45 : vector<8x8xf32> to vector<8x8x1xf32>
    %47 = vector.broadcast %46 : vector<8x8x1xf32> to vector<8x8x8xf32>
    %48 = arith.subf %44, %47 : vector<8x8x8xf32>
    %49 = math.exp %48 : vector<8x8x8xf32>
    %cst_21 = arith.constant dense<0.000000e+00> : vector<8x8xf32>
    %50 = vector.multi_reduction <add>, %49, %cst_21 [2] : vector<8x8x8xf32> to vector<8x8xf32>
    %51 = vector.shape_cast %50 : vector<8x8xf32> to vector<8x8x1xf32>
    "tpu.trace_start"() <{level = 10 : i32, message = "bqk,bkd->bqd"}> : () -> ()
    %cst_22 = arith.constant dense<0.000000e+00> : vector<8x8x8xf32>
    %52 = tpu.matmul %49, %40, %cst_22 {dimension_numbers = #tpu.dot_dimension_numbers<[2], [1], [1], [2], [0, 0, 0, 1, 1, 2], [0], [0]>} : vector<8x8x8xf32>, vector<8x8x8xf32>, vector<8x8x8xf32> -> vector<8x8x8xf32>
    "tpu.trace_stop"() : () -> ()
    %53 = vector.broadcast %51 : vector<8x8x1xf32> to vector<8x8x8xf32>
    %54 = arith.divf %52, %53 : vector<8x8x8xf32>
    %55 = vector.extract_strided_slice %54 {offsets = [0, 0, 0], sizes = [2, 8, 8], strides = [1, 1, 1]} : vector<8x8x8xf32> to vector<2x8x8xf32>
    %56 = vector.extract_strided_slice %54 {offsets = [2, 0, 0], sizes = [2, 8, 8], strides = [1, 1, 1]} : vector<8x8x8xf32> to vector<2x8x8xf32>
    %57 = vector.extract_strided_slice %54 {offsets = [4, 0, 0], sizes = [2, 8, 8], strides = [1, 1, 1]} : vector<8x8x8xf32> to vector<2x8x8xf32>
    %58 = vector.extract_strided_slice %54 {offsets = [6, 0, 0], sizes = [2, 8, 8], strides = [1, 1, 1]} : vector<8x8x8xf32> to vector<2x8x8xf32>
    %59 = tpu.concatenate %55, %56, %57, %58 in 2 : vector<2x8x8xf32>, vector<2x8x8xf32>, vector<2x8x8xf32>, vector<2x8x8xf32> -> vector<2x8x32xf32>
    %60 = vector.shape_cast %59 : vector<2x8x32xf32> to vector<16x32xf32>
    %cst_23 = arith.constant dense<0.000000e+00> : vector<16x32xf32>
    %61 = tpu.matmul %60, %6, %cst_23 {dimension_numbers = #tpu.dot_dimension_numbers<[1], [0], [0], [1], [0, 0, 1, 1], [], []>} : vector<16x32xf32>, vector<32x32xf32>, vector<16x32xf32> -> vector<16x32xf32>
    %62 = vector.broadcast %10 : vector<1x32xf32> to vector<16x32xf32>
    %63 = arith.addf %61, %62 : vector<16x32xf32>
    %64 = arith.addf %63, %0 : vector<16x32xf32>
    %cst_24 = arith.constant dense<0.000000e+00> : vector<16xf32>
    %65 = vector.multi_reduction <add>, %64, %cst_24 [1] : vector<16x32xf32> to vector<16xf32>
    %66 = vector.shape_cast %65 : vector<16xf32> to vector<16x1xf32>
    %cst_25 = arith.constant 3.200000e+01 : f32
    %67 = vector.broadcast %cst_25 : f32 to vector<16x1xf32>
    %68 = arith.divf %66, %67 : vector<16x1xf32>
    %69 = vector.broadcast %68 : vector<16x1xf32> to vector<16x32xf32>
    %70 = arith.subf %64, %69 : vector<16x32xf32>
    %71 = arith.mulf %70, %70 : vector<16x32xf32>
    %cst_26 = arith.constant dense<0.000000e+00> : vector<16xf32>
    %72 = vector.multi_reduction <add>, %71, %cst_26 [1] : vector<16x32xf32> to vector<16xf32>
    %73 = vector.shape_cast %72 : vector<16xf32> to vector<16x1xf32>
    %cst_27 = arith.constant 3.200000e+01 : f32
    %74 = vector.broadcast %cst_27 : f32 to vector<16x1xf32>
    %75 = arith.divf %73, %74 : vector<16x1xf32>
    %76 = vector.broadcast %68 : vector<16x1xf32> to vector<16x32xf32>
    %77 = arith.subf %64, %76 : vector<16x32xf32>
    %cst_28 = arith.constant 9.99999996E-13 : f32
    %78 = vector.broadcast %cst_28 : f32 to vector<16x1xf32>
    %79 = arith.addf %75, %78 : vector<16x1xf32>
    %80 = math.rsqrt %79 : vector<16x1xf32>
    %81 = vector.broadcast %80 : vector<16x1xf32> to vector<16x32xf32>
    %82 = arith.mulf %77, %81 : vector<16x32xf32>
    %83 = vector.broadcast %11 : vector<1x32xf32> to vector<16x32xf32>
    %84 = arith.mulf %82, %83 : vector<16x32xf32>
    %85 = vector.broadcast %12 : vector<1x32xf32> to vector<16x32xf32>
    %86 = arith.addf %84, %85 : vector<16x32xf32>
    %cst_29 = arith.constant dense<0.000000e+00> : vector<16x64xf32>
    %87 = tpu.matmul %86, %7, %cst_29 {dimension_numbers = #tpu.dot_dimension_numbers<[1], [0], [0], [1], [0, 0, 1, 1], [], []>} : vector<16x32xf32>, vector<32x64xf32>, vector<16x64xf32> -> vector<16x64xf32>
    %88 = vector.broadcast %13 : vector<1x64xf32> to vector<16x64xf32>
    %89 = arith.addf %87, %88 : vector<16x64xf32>
    %cst_30 = arith.constant 5.000000e-01 : f32
    %90 = vector.broadcast %cst_30 : f32 to vector<16x64xf32>
    %91 = arith.mulf %90, %89 : vector<16x64xf32>
    %cst_31 = arith.constant 4.471500e-02 : f32
    %92 = vector.broadcast %cst_31 : f32 to vector<16x64xf32>
    %93 = arith.mulf %92, %89 : vector<16x64xf32>
    %94 = arith.mulf %93, %89 : vector<16x64xf32>
    %95 = arith.mulf %94, %89 : vector<16x64xf32>
    %96 = arith.addf %89, %95 : vector<16x64xf32>
    %cst_32 = arith.constant 0.797884583 : f32
    %97 = vector.broadcast %cst_32 : f32 to vector<16x64xf32>
    %98 = arith.mulf %97, %96 : vector<16x64xf32>
    %99 = math.tanh %98 : vector<16x64xf32>
    %cst_33 = arith.constant 1.000000e+00 : f32
    %100 = vector.broadcast %cst_33 : f32 to vector<16x64xf32>
    %101 = arith.addf %100, %99 : vector<16x64xf32>
    %102 = arith.mulf %91, %101 : vector<16x64xf32>
    %cst_34 = arith.constant dense<0.000000e+00> : vector<16x32xf32>
    %103 = tpu.matmul %102, %8, %cst_34 {dimension_numbers = #tpu.dot_dimension_numbers<[1], [0], [0], [1], [0, 0, 1, 1], [], []>} : vector<16x64xf32>, vector<64x32xf32>, vector<16x32xf32> -> vector<16x32xf32>
    %104 = vector.broadcast %14 : vector<1x32xf32> to vector<16x32xf32>
    %105 = arith.addf %103, %104 : vector<16x32xf32>
    %106 = arith.addf %105, %86 : vector<16x32xf32>
    %cst_35 = arith.constant dense<0.000000e+00> : vector<16xf32>
    %107 = vector.multi_reduction <add>, %106, %cst_35 [1] : vector<16x32xf32> to vector<16xf32>
    %108 = vector.shape_cast %107 : vector<16xf32> to vector<16x1xf32>
    %cst_36 = arith.constant 3.200000e+01 : f32
    %109 = vector.broadcast %cst_36 : f32 to vector<16x1xf32>
    %110 = arith.divf %108, %109 : vector<16x1xf32>
    %111 = vector.broadcast %110 : vector<16x1xf32> to vector<16x32xf32>
    %112 = arith.subf %106, %111 : vector<16x32xf32>
    %113 = arith.mulf %112, %112 : vector<16x32xf32>
    %cst_37 = arith.constant dense<0.000000e+00> : vector<16xf32>
    %114 = vector.multi_reduction <add>, %113, %cst_37 [1] : vector<16x32xf32> to vector<16xf32>
    %115 = vector.shape_cast %114 : vector<16xf32> to vector<16x1xf32>
    %cst_38 = arith.constant 3.200000e+01 : f32
    %116 = vector.broadcast %cst_38 : f32 to vector<16x1xf32>
    %117 = arith.divf %115, %116 : vector<16x1xf32>
    %118 = vector.broadcast %110 : vector<16x1xf32> to vector<16x32xf32>
    %119 = arith.subf %106, %118 : vector<16x32xf32>
    %cst_39 = arith.constant 9.99999996E-13 : f32
    %120 = vector.broadcast %cst_39 : f32 to vector<16x1xf32>
    %121 = arith.addf %117, %120 : vector<16x1xf32>
    %122 = math.rsqrt %121 : vector<16x1xf32>
    %123 = vector.broadcast %122 : vector<16x1xf32> to vector<16x32xf32>
    %124 = arith.mulf %119, %123 : vector<16x32xf32>
    %125 = vector.broadcast %15 : vector<1x32xf32> to vector<16x32xf32>
    %126 = arith.mulf %124, %125 : vector<16x32xf32>
    %127 = vector.broadcast %16 : vector<1x32xf32> to vector<16x32xf32>
    %128 = arith.addf %126, %127 : vector<16x32xf32>
    %c160 = arith.constant 160 : index
    %c0_40 = arith.constant 0 : index
    %129 = vector.load %arg2[%c160, %c0_40] : memref<288x128xf32, #tpu.memory_space<vmem>>, vector<32x64xf32>
    %c192 = arith.constant 192 : index
    %c0_41 = arith.constant 0 : index
    %130 = vector.load %arg2[%c192, %c0_41] : memref<288x128xf32, #tpu.memory_space<vmem>>, vector<32x32xf32>
    %c224 = arith.constant 224 : index
    %c0_42 = arith.constant 0 : index
    %131 = vector.load %arg2[%c224, %c0_42] : memref<288x128xf32, #tpu.memory_space<vmem>>, vector<32x32xf32>
    %c256 = arith.constant 256 : index
    %c0_43 = arith.constant 0 : index
    %132 = vector.load %arg2[%c256, %c0_43] : memref<288x128xf32, #tpu.memory_space<vmem>>, vector<32x32xf32>
    %c8 = arith.constant 8 : index
    %c0_44 = arith.constant 0 : index
    %133 = vector.load %arg3[%c8, %c0_44] : memref<16x128xf32, #tpu.memory_space<vmem>>, vector<1x64xf32>
    %c9 = arith.constant 9 : index
    %c0_45 = arith.constant 0 : index
    %134 = vector.load %arg3[%c9, %c0_45] : memref<16x128xf32, #tpu.memory_space<vmem>>, vector<1x32xf32>
    %c10 = arith.constant 10 : index
    %c0_46 = arith.constant 0 : index
    %135 = vector.load %arg3[%c10, %c0_46] : memref<16x128xf32, #tpu.memory_space<vmem>>, vector<1x32xf32>
    %c11 = arith.constant 11 : index
    %c0_47 = arith.constant 0 : index
    %136 = vector.load %arg3[%c11, %c0_47] : memref<16x128xf32, #tpu.memory_space<vmem>>, vector<1x32xf32>
    %c12 = arith.constant 12 : index
    %c0_48 = arith.constant 0 : index
    %137 = vector.load %arg3[%c12, %c0_48] : memref<16x128xf32, #tpu.memory_space<vmem>>, vector<1x32xf32>
    %c13 = arith.constant 13 : index
    %c0_49 = arith.constant 0 : index
    %138 = vector.load %arg3[%c13, %c0_49] : memref<16x128xf32, #tpu.memory_space<vmem>>, vector<1x32xf32>
    %c14 = arith.constant 14 : index
    %c0_50 = arith.constant 0 : index
    %139 = vector.load %arg3[%c14, %c0_50] : memref<16x128xf32, #tpu.memory_space<vmem>>, vector<1x32xf32>
    %c15 = arith.constant 15 : index
    %c0_51 = arith.constant 0 : index
    %140 = vector.load %arg3[%c15, %c0_51] : memref<16x128xf32, #tpu.memory_space<vmem>>, vector<1x32xf32>
    %cst_52 = arith.constant dense<0.000000e+00> : vector<16x64xf32>
    %141 = tpu.matmul %128, %129, %cst_52 {dimension_numbers = #tpu.dot_dimension_numbers<[1], [0], [0], [1], [0, 0, 1, 1], [], []>} : vector<16x32xf32>, vector<32x64xf32>, vector<16x64xf32> -> vector<16x64xf32>
    %142 = vector.broadcast %133 : vector<1x64xf32> to vector<16x64xf32>
    %143 = arith.addf %141, %142 : vector<16x64xf32>
    %144 = vector.extract_strided_slice %143 {offsets = [0, 0], sizes = [16, 16], strides = [1, 1]} : vector<16x64xf32> to vector<16x16xf32>
    %145 = vector.shape_cast %144 : vector<16x16xf32> to vector<2x8x16xf32>
    %146 = vector.extract_strided_slice %143 {offsets = [0, 16], sizes = [16, 16], strides = [1, 1]} : vector<16x64xf32> to vector<16x16xf32>
    %147 = vector.shape_cast %146 : vector<16x16xf32> to vector<2x8x16xf32>
    %148 = vector.extract_strided_slice %143 {offsets = [0, 32], sizes = [16, 32], strides = [1, 1]} : vector<16x64xf32> to vector<16x32xf32>
    %149 = vector.shape_cast %148 : vector<16x32xf32> to vector<2x8x32xf32>
    %150 = vector.extract_strided_slice %145 {offsets = [0, 0, 0], sizes = [2, 8, 4], strides = [1, 1, 1]} : vector<2x8x16xf32> to vector<2x8x4xf32>
    %151 = vector.extract_strided_slice %145 {offsets = [0, 0, 4], sizes = [2, 8, 4], strides = [1, 1, 1]} : vector<2x8x16xf32> to vector<2x8x4xf32>
    %152 = vector.extract_strided_slice %145 {offsets = [0, 0, 8], sizes = [2, 8, 4], strides = [1, 1, 1]} : vector<2x8x16xf32> to vector<2x8x4xf32>
    %153 = vector.extract_strided_slice %145 {offsets = [0, 0, 12], sizes = [2, 8, 4], strides = [1, 1, 1]} : vector<2x8x16xf32> to vector<2x8x4xf32>
    %154 = tpu.concatenate %150, %151, %152, %153 in 0 : vector<2x8x4xf32>, vector<2x8x4xf32>, vector<2x8x4xf32>, vector<2x8x4xf32> -> vector<8x8x4xf32>
    %155 = vector.extract_strided_slice %147 {offsets = [0, 0, 0], sizes = [2, 8, 4], strides = [1, 1, 1]} : vector<2x8x16xf32> to vector<2x8x4xf32>
    %156 = vector.extract_strided_slice %147 {offsets = [0, 0, 4], sizes = [2, 8, 4], strides = [1, 1, 1]} : vector<2x8x16xf32> to vector<2x8x4xf32>
    %157 = vector.extract_strided_slice %147 {offsets = [0, 0, 8], sizes = [2, 8, 4], strides = [1, 1, 1]} : vector<2x8x16xf32> to vector<2x8x4xf32>
    %158 = vector.extract_strided_slice %147 {offsets = [0, 0, 12], sizes = [2, 8, 4], strides = [1, 1, 1]} : vector<2x8x16xf32> to vector<2x8x4xf32>
    %159 = tpu.concatenate %155, %156, %157, %158 in 0 : vector<2x8x4xf32>, vector<2x8x4xf32>, vector<2x8x4xf32>, vector<2x8x4xf32> -> vector<8x8x4xf32>
    %160 = vector.extract_strided_slice %149 {offsets = [0, 0, 0], sizes = [2, 8, 8], strides = [1, 1, 1]} : vector<2x8x32xf32> to vector<2x8x8xf32>
    %161 = vector.extract_strided_slice %149 {offsets = [0, 0, 8], sizes = [2, 8, 8], strides = [1, 1, 1]} : vector<2x8x32xf32> to vector<2x8x8xf32>
    %162 = vector.extract_strided_slice %149 {offsets = [0, 0, 16], sizes = [2, 8, 8], strides = [1, 1, 1]} : vector<2x8x32xf32> to vector<2x8x8xf32>
    %163 = vector.extract_strided_slice %149 {offsets = [0, 0, 24], sizes = [2, 8, 8], strides = [1, 1, 1]} : vector<2x8x32xf32> to vector<2x8x8xf32>
    %164 = tpu.concatenate %160, %161, %162, %163 in 0 : vector<2x8x8xf32>, vector<2x8x8xf32>, vector<2x8x8xf32>, vector<2x8x8xf32> -> vector<8x8x8xf32>
    "tpu.trace_start"() <{level = 10 : i32, message = "bqd,bkd->bqk"}> : () -> ()
    %cst_53 = arith.constant dense<0.000000e+00> : vector<8x8x8xf32>
    %165 = tpu.matmul %154, %159, %cst_53 {dimension_numbers = #tpu.dot_dimension_numbers<[2], [2], [1], [1], [0, 0, 0, 1, 1, 1], [0], [0]>} : vector<8x8x4xf32>, vector<8x8x4xf32>, vector<8x8x8xf32> -> vector<8x8x8xf32>
    "tpu.trace_stop"() : () -> ()
    %cst_54 = arith.constant 5.000000e-01 : f32
    %166 = vector.broadcast %cst_54 : f32 to vector<8x8x8xf32>
    %167 = arith.mulf %165, %166 : vector<8x8x8xf32>
    %168 = arith.addf %167, %4 : vector<8x8x8xf32>
    %cst_55 = arith.constant dense<0xFF800000> : vector<8x8xf32>
    %169 = vector.multi_reduction <maximumf>, %168, %cst_55 [2] : vector<8x8x8xf32> to vector<8x8xf32>
    %170 = vector.shape_cast %169 : vector<8x8xf32> to vector<8x8x1xf32>
    %171 = vector.broadcast %170 : vector<8x8x1xf32> to vector<8x8x8xf32>
    %172 = arith.subf %168, %171 : vector<8x8x8xf32>
    %173 = math.exp %172 : vector<8x8x8xf32>
    %cst_56 = arith.constant dense<0.000000e+00> : vector<8x8xf32>
    %174 = vector.multi_reduction <add>, %173, %cst_56 [2] : vector<8x8x8xf32> to vector<8x8xf32>
    %175 = vector.shape_cast %174 : vector<8x8xf32> to vector<8x8x1xf32>
    "tpu.trace_start"() <{level = 10 : i32, message = "bqk,bkd->bqd"}> : () -> ()
    %cst_57 = arith.constant dense<0.000000e+00> : vector<8x8x8xf32>
    %176 = tpu.matmul %173, %164, %cst_57 {dimension_numbers = #tpu.dot_dimension_numbers<[2], [1], [1], [2], [0, 0, 0, 1, 1, 2], [0], [0]>} : vector<8x8x8xf32>, vector<8x8x8xf32>, vector<8x8x8xf32> -> vector<8x8x8xf32>
    "tpu.trace_stop"() : () -> ()
    %177 = vector.broadcast %175 : vector<8x8x1xf32> to vector<8x8x8xf32>
    %178 = arith.divf %176, %177 : vector<8x8x8xf32>
    %179 = vector.extract_strided_slice %178 {offsets = [0, 0, 0], sizes = [2, 8, 8], strides = [1, 1, 1]} : vector<8x8x8xf32> to vector<2x8x8xf32>
    %180 = vector.extract_strided_slice %178 {offsets = [2, 0, 0], sizes = [2, 8, 8], strides = [1, 1, 1]} : vector<8x8x8xf32> to vector<2x8x8xf32>
    %181 = vector.extract_strided_slice %178 {offsets = [4, 0, 0], sizes = [2, 8, 8], strides = [1, 1, 1]} : vector<8x8x8xf32> to vector<2x8x8xf32>
    %182 = vector.extract_strided_slice %178 {offsets = [6, 0, 0], sizes = [2, 8, 8], strides = [1, 1, 1]} : vector<8x8x8xf32> to vector<2x8x8xf32>
    %183 = tpu.concatenate %179, %180, %181, %182 in 2 : vector<2x8x8xf32>, vector<2x8x8xf32>, vector<2x8x8xf32>, vector<2x8x8xf32> -> vector<2x8x32xf32>
    %184 = vector.shape_cast %183 : vector<2x8x32xf32> to vector<16x32xf32>
    %cst_58 = arith.constant dense<0.000000e+00> : vector<16x32xf32>
    %185 = tpu.matmul %184, %130, %cst_58 {dimension_numbers = #tpu.dot_dimension_numbers<[1], [0], [0], [1], [0, 0, 1, 1], [], []>} : vector<16x32xf32>, vector<32x32xf32>, vector<16x32xf32> -> vector<16x32xf32>
    %186 = vector.broadcast %134 : vector<1x32xf32> to vector<16x32xf32>
    %187 = arith.addf %185, %186 : vector<16x32xf32>
    %188 = arith.addf %187, %128 : vector<16x32xf32>
    %cst_59 = arith.constant dense<0.000000e+00> : vector<16xf32>
    %189 = vector.multi_reduction <add>, %188, %cst_59 [1] : vector<16x32xf32> to vector<16xf32>
    %190 = vector.shape_cast %189 : vector<16xf32> to vector<16x1xf32>
    %cst_60 = arith.constant 3.200000e+01 : f32
    %191 = vector.broadcast %cst_60 : f32 to vector<16x1xf32>
    %192 = arith.divf %190, %191 : vector<16x1xf32>
    %193 = vector.broadcast %192 : vector<16x1xf32> to vector<16x32xf32>
    %194 = arith.subf %188, %193 : vector<16x32xf32>
    %195 = arith.mulf %194, %194 : vector<16x32xf32>
    %cst_61 = arith.constant dense<0.000000e+00> : vector<16xf32>
    %196 = vector.multi_reduction <add>, %195, %cst_61 [1] : vector<16x32xf32> to vector<16xf32>
    %197 = vector.shape_cast %196 : vector<16xf32> to vector<16x1xf32>
    %cst_62 = arith.constant 3.200000e+01 : f32
    %198 = vector.broadcast %cst_62 : f32 to vector<16x1xf32>
    %199 = arith.divf %197, %198 : vector<16x1xf32>
    %200 = vector.broadcast %192 : vector<16x1xf32> to vector<16x32xf32>
    %201 = arith.subf %188, %200 : vector<16x32xf32>
    %cst_63 = arith.constant 9.99999996E-13 : f32
    %202 = vector.broadcast %cst_63 : f32 to vector<16x1xf32>
    %203 = arith.addf %199, %202 : vector<16x1xf32>
    %204 = math.rsqrt %203 : vector<16x1xf32>
    %205 = vector.broadcast %204 : vector<16x1xf32> to vector<16x32xf32>
    %206 = arith.mulf %201, %205 : vector<16x32xf32>
    %207 = vector.broadcast %135 : vector<1x32xf32> to vector<16x32xf32>
    %208 = arith.mulf %206, %207 : vector<16x32xf32>
    %209 = vector.broadcast %136 : vector<1x32xf32> to vector<16x32xf32>
    %210 = arith.addf %208, %209 : vector<16x32xf32>
    %cst_64 = arith.constant dense<0.000000e+00> : vector<16x32xf32>
    %211 = tpu.matmul %210, %131, %cst_64 {dimension_numbers = #tpu.dot_dimension_numbers<[1], [0], [0], [1], [0, 0, 1, 1], [], []>} : vector<16x32xf32>, vector<32x32xf32>, vector<16x32xf32> -> vector<16x32xf32>
    %212 = vector.broadcast %137 : vector<1x32xf32> to vector<16x32xf32>
    %213 = arith.addf %211, %212 : vector<16x32xf32>
    %cst_65 = arith.constant 5.000000e-01 : f32
    %214 = vector.broadcast %cst_65 : f32 to vector<16x32xf32>
    %215 = arith.mulf %214, %213 : vector<16x32xf32>
    %cst_66 = arith.constant 4.471500e-02 : f32
    %216 = vector.broadcast %cst_66 : f32 to vector<16x32xf32>
    %217 = arith.mulf %216, %213 : vector<16x32xf32>
    %218 = arith.mulf %217, %213 : vector<16x32xf32>
    %219 = arith.mulf %218, %213 : vector<16x32xf32>
    %220 = arith.addf %213, %219 : vector<16x32xf32>
    %cst_67 = arith.constant 0.797884583 : f32
    %221 = vector.broadcast %cst_67 : f32 to vector<16x32xf32>
    %222 = arith.mulf %221, %220 : vector<16x32xf32>
    %223 = math.tanh %222 : vector<16x32xf32>
    %cst_68 = arith.constant 1.000000e+00 : f32
    %224 = vector.broadcast %cst_68 : f32 to vector<16x32xf32>
    %225 = arith.addf %224, %223 : vector<16x32xf32>
    %226 = arith.mulf %215, %225 : vector<16x32xf32>
    %cst_69 = arith.constant dense<0.000000e+00> : vector<16x32xf32>
    %227 = tpu.matmul %226, %132, %cst_69 {dimension_numbers = #tpu.dot_dimension_numbers<[1], [0], [0], [1], [0, 0, 1, 1], [], []>} : vector<16x32xf32>, vector<32x32xf32>, vector<16x32xf32> -> vector<16x32xf32>
    %228 = vector.broadcast %138 : vector<1x32xf32> to vector<16x32xf32>
    %229 = arith.addf %227, %228 : vector<16x32xf32>
    %230 = arith.addf %229, %210 : vector<16x32xf32>
    %cst_70 = arith.constant dense<0.000000e+00> : vector<16xf32>
    %231 = vector.multi_reduction <add>, %230, %cst_70 [1] : vector<16x32xf32> to vector<16xf32>
    %232 = vector.shape_cast %231 : vector<16xf32> to vector<16x1xf32>
    %cst_71 = arith.constant 3.200000e+01 : f32
    %233 = vector.broadcast %cst_71 : f32 to vector<16x1xf32>
    %234 = arith.divf %232, %233 : vector<16x1xf32>
    %235 = vector.broadcast %234 : vector<16x1xf32> to vector<16x32xf32>
    %236 = arith.subf %230, %235 : vector<16x32xf32>
    %237 = arith.mulf %236, %236 : vector<16x32xf32>
    %cst_72 = arith.constant dense<0.000000e+00> : vector<16xf32>
    %238 = vector.multi_reduction <add>, %237, %cst_72 [1] : vector<16x32xf32> to vector<16xf32>
    %239 = vector.shape_cast %238 : vector<16xf32> to vector<16x1xf32>
    %cst_73 = arith.constant 3.200000e+01 : f32
    %240 = vector.broadcast %cst_73 : f32 to vector<16x1xf32>
    %241 = arith.divf %239, %240 : vector<16x1xf32>
    %242 = vector.broadcast %234 : vector<16x1xf32> to vector<16x32xf32>
    %243 = arith.subf %230, %242 : vector<16x32xf32>
    %cst_74 = arith.constant 9.99999996E-13 : f32
    %244 = vector.broadcast %cst_74 : f32 to vector<16x1xf32>
    %245 = arith.addf %241, %244 : vector<16x1xf32>
    %246 = math.rsqrt %245 : vector<16x1xf32>
    %247 = vector.broadcast %246 : vector<16x1xf32> to vector<16x32xf32>
    %248 = arith.mulf %243, %247 : vector<16x32xf32>
    %249 = vector.broadcast %139 : vector<1x32xf32> to vector<16x32xf32>
    %250 = arith.mulf %248, %249 : vector<16x32xf32>
    %251 = vector.broadcast %140 : vector<1x32xf32> to vector<16x32xf32>
    %252 = arith.addf %250, %251 : vector<16x32xf32>
    %253 = vector.shape_cast %252 : vector<16x32xf32> to vector<4x4x32xf32>
    %254 = vector.extract_strided_slice %253 {offsets = [0, 0, 0], sizes = [4, 1, 32], strides = [1, 1, 1]} : vector<4x4x32xf32> to vector<4x1x32xf32>
    %255 = vector.shape_cast %254 : vector<4x1x32xf32> to vector<4x32xf32>
    %256 = vector.extract_strided_slice %253 {offsets = [0, 1, 0], sizes = [4, 1, 32], strides = [1, 1, 1]} : vector<4x4x32xf32> to vector<4x1x32xf32>
    %257 = vector.shape_cast %256 : vector<4x1x32xf32> to vector<4x32xf32>
    %258 = vector.extract_strided_slice %253 {offsets = [0, 2, 0], sizes = [4, 1, 32], strides = [1, 1, 1]} : vector<4x4x32xf32> to vector<4x1x32xf32>
    %259 = vector.shape_cast %258 : vector<4x1x32xf32> to vector<4x32xf32>
    %260 = vector.extract_strided_slice %253 {offsets = [0, 3, 0], sizes = [4, 1, 32], strides = [1, 1, 1]} : vector<4x4x32xf32> to vector<4x1x32xf32>
    %261 = vector.shape_cast %260 : vector<4x1x32xf32> to vector<4x32xf32>
    %262 = tpu.concatenate %255, %257, %259, %261 in 1 : vector<4x32xf32>, vector<4x32xf32>, vector<4x32xf32>, vector<4x32xf32> -> vector<4x128xf32>
    %c0_75 = arith.constant 0 : index
    %c0_76 = arith.constant 0 : index
    %263 = vector.load %arg4[%c0_75, %c0_76] : memref<4x128xf32, #tpu.memory_space<vmem>>, vector<4x128xf32>
    tpu.vector_store %arg4[%c0_75, %c0_76], %262 {strides = array<i32>} : memref<4x128xf32, #tpu.memory_space<vmem>>, vector<4x128xf32>,
    return
  }
}

</mosaic_0001>

<llo_original>
// kernel: tpu_custom_call.1
$region0: #{tpu_custom_call.1}
  #allocation0 [shape = 'u32[]', space=smem, size = 0x4, offset = 0x4, fixed_abs, tag = 'smem constant byte address 0x4 - core index']
  #allocation1 [shape = 'u32[144,128]{1,0:T(1,128)}', space=vmem, size = 0x12000, scoped, tag = 'internal scratch']
  %s0 = inlined_call_operand.hbm [shape: f32[16,32], index: 0, kind: input, shape index: {}]
  %s1 = inlined_call_operand.vmem [shape: f32[2,1,8], index: 1, kind: input, shape index: {}]
  %s2 = inlined_call_operand.hbm [shape: f32[288,128], index: 2, kind: input, shape index: {}]
  %s3 = inlined_call_operand.hbm [shape: f32[16,128], index: 3, kind: input, shape index: {}]
  %s4 = inlined_call_operand.hbm [shape: f32[4,128], index: 4, kind: output, shape index: {}]
  %s5 = sld [smem:[#allocation0]]
  $region38: #{tpu_custom_call.1} parent=0
    _
  %s7 = ssub.s32 1, %s5
  %s8 = scalar_select 0, %s7, %s5
  $region1: #{tpu_custom_call.1} parent=0
    #allocation2 [shape = 'u8[8192]{0}', space=vmem, size = 0x2000, scoped, tag = 'input window, operand 0, single buffered']
    #allocation3 [shape = 's32[1]{0}', space=sflag, size = 0x4, scoped, tag = 'scoped memory for tpu_custom_call.1']
    #allocation4 [shape = 's32[1]{0}', space=sflag, size = 0x4, scoped, tag = 'scoped memory for tpu_custom_call.1']
    #allocation5 [shape = 'u8[147456]{0}', space=vmem, size = 0x24000, scoped, tag = 'input window, operand 2, single buffered']
    #allocation6 [shape = 's32[1]{0}', space=sflag, size = 0x4, scoped, tag = 'scoped memory for tpu_custom_call.1']
    #allocation7 [shape = 'u8[8192]{0}', space=vmem, size = 0x2000, scoped, tag = 'input window, operand 3, single buffered']
    #allocation8 [shape = 'u8[2048]{0}', space=vmem, size = 0x800, scoped, tag = 'output window, operand 0, single buffered']
    %9 = vsyncpa [#allocation3], 0
    %10 = vsyncpa [#allocation6], 0
    %11 = vsyncpa [#allocation4], 0
    // Predicated region
    $region2: #{tpu_custom_call.1} parent=1 // pred_check
      _
    $region3: #{tpu_custom_call.1} parent=1 // pred_check_branch
      %13 = sbr.rel (0) target = $region5
    $region4: #{tpu_custom_call.1} parent=1 // pred_region
      %s15 = ssub.s32 256, 256
      %16 = vsyncadd [#allocation3], %s15
      %s17 = sshll.u32 [#allocation2], 4
      %s18 = int_to_ptr.vmem [resolvable:$true] %s17
      %23 = dma.hbm_to_vmem [thread:$0]  %s0, 256, %s18, [#allocation3], 128, 128, 8
    $region5: #{tpu_custom_call.1} parent=1 // pred_fallthru
      _
    // Predicated region
    $region6: #{tpu_custom_call.1} parent=1 // pred_check
      _
    $region7: #{tpu_custom_call.1} parent=1 // pred_check_branch
      %25 = sbr.rel (0) target = $region9
    $region8: #{tpu_custom_call.1} parent=1 // pred_region
      _
    $region9: #{tpu_custom_call.1} parent=1 // pred_fallthru
      _
    // Predicated region
    $region10: #{tpu_custom_call.1} parent=1 // pred_check
      _
    $region11: #{tpu_custom_call.1} parent=1 // pred_check_branch
      %27 = sbr.rel (0) target = $region13
    $region12: #{tpu_custom_call.1} parent=1 // pred_region
      %s29 = ssub.s32 4608, 4608
      %30 = vsyncadd [#allocation6], %s29
      %s31 = sshll.u32 [#allocation5], 4
      %s32 = int_to_ptr.vmem [resolvable:$true] %s31
      %37 = dma.hbm_to_vmem [thread:$0]  %s2, 4608, %s32, [#allocation6], 128, 128, 8
    $region13: #{tpu_custom_call.1} parent=1 // pred_fallthru
      _
    // Predicated region
    $region14: #{tpu_custom_call.1} parent=1 // pred_check
      _
    $region15: #{tpu_custom_call.1} parent=1 // pred_check_branch
      %39 = sbr.rel (0) target = $region17
    $region16: #{tpu_custom_call.1} parent=1 // pred_region
      %s41 = ssub.s32 256, 256
      %42 = vsyncadd [#allocation6], %s41
      %s43 = sshll.u32 [#allocation7], 4
      %s44 = int_to_ptr.vmem [resolvable:$true] %s43
      %49 = dma.hbm_to_vmem [thread:$0]  %s3, 256, %s44, [#allocation6], 128, 128, 8
    $region17: #{tpu_custom_call.1} parent=1 // pred_fallthru
      _
    // Predicated region
    $region18: #{tpu_custom_call.1} parent=1 // pred_check
      _
    $region19: #{tpu_custom_call.1} parent=1 // pred_check_branch
      %51 = sbr.rel (0) target = $region21
    $region20: #{tpu_custom_call.1} parent=1 // pred_region
      %52 = dma.done [#allocation3], 256
    $region21: #{tpu_custom_call.1} parent=1 // pred_fallthru
      _
    // Predicated region
    $region22: #{tpu_custom_call.1} parent=1 // pred_check
      _
    $region23: #{tpu_custom_call.1} parent=1 // pred_check_branch
      %54 = sbr.rel (0) target = $region25
    $region24: #{tpu_custom_call.1} parent=1 // pred_region
      %55 = dma.done [#allocation6], 4608
    $region25: #{tpu_custom_call.1} parent=1 // pred_fallthru
      _
    // Predicated region
    $region26: #{tpu_custom_call.1} parent=1 // pred_check
      _
    $region27: #{tpu_custom_call.1} parent=1 // pred_check_branch
      %57 = sbr.rel (0) target = $region29
    $region28: #{tpu_custom_call.1} parent=1 // pred_region
      %58 = dma.done [#allocation6], 256
    $region29: #{tpu_custom_call.1} parent=1 // pred_fallthru
      _
    %v59 = vld [vmem:[#allocation2] sm:$0xff]
    %v60 = vld [vmem:[#allocation2 + $0x8] sm:$0xff]
    %v61 = vld [vmem:[%s1] sm:$0x1]
    %v62 = vld [vmem:[%s1 + $0x1] sm:$0x1]
    %v65 = vlaneseq
    %v66 = vshrl.u32 %v65, 7
    %v67 = vsub.s32 0, %v66
    %v68 = vrot.slane %v61, %v67
    %v69 = vlaneseq
    %v70 = vshrl.u32 %v69, 7
    %v71 = vsub.s32 0, %v70
    %v72 = vrot.slane %v62, %v71
    %v75 = vld [vmem:[#allocation5] sm:$0xff]
    %v76 = vld [vmem:[#allocation5 + $0x8] sm:$0xff]
    %v77 = vld [vmem:[#allocation5 + $0x10] sm:$0xff]
    %v78 = vld [vmem:[#allocation5 + $0x18] sm:$0xff]
    %v79 = vld [vmem:[#allocation5 + $0x20] sm:$0xff]
    %v80 = vld [vmem:[#allocation5 + $0x28] sm:$0xff]
    %v81 = vld [vmem:[#allocation5 + $0x30] sm:$0xff]
    %v82 = vld [vmem:[#allocation5 + $0x38] sm:$0xff]
    %v83 = vld [vmem:[#allocation5 + $0x40] sm:$0xff]
    %v84 = vld [vmem:[#allocation5 + $0x48] sm:$0xff]
    %v85 = vld [vmem:[#allocation5 + $0x50] sm:$0xff]
    %v86 = vld [vmem:[#allocation5 + $0x58] sm:$0xff]
    %v87 = vld [vmem:[#allocation5 + $0x60] sm:$0xff]
    %v88 = vld [vmem:[#allocation5 + $0x68] sm:$0xff]
    %v89 = vld [vmem:[#allocation5 + $0x70] sm:$0xff]
    %v90 = vld [vmem:[#allocation5 + $0x78] sm:$0xff]
    %v91 = vld [vmem:[#allocation5 + $0x80] sm:$0xff]
    %v92 = vld [vmem:[#allocation5 + $0x88] sm:$0xff]
    %v93 = vld [vmem:[#allocation5 + $0x90] sm:$0xff]
    %v94 = vld [vmem:[#allocation5 + $0x98] sm:$0xff]
    %v95 = vld [vmem:[#allocation7] sm:$0x1]
    %v96 = vld [vmem:[#allocation7 + $0x1] sm:$0x1]
    %v97 = vld [vmem:[#allocation7 + $0x2] sm:$0x1]
    %v98 = vld [vmem:[#allocation7 + $0x3] sm:$0x1]
    %v99 = vld [vmem:[#allocation7 + $0x4] sm:$0x1]
    %v100 = vld [vmem:[#allocation7 + $0x5] sm:$0x1]
    %v101 = vld [vmem:[#allocation7 + $0x6] sm:$0x1]
    %v102 = vld [vmem:[#allocation7 + $0x7] sm:$0x1]
    %v103 = vlaneseq
    %v104 = vshrl.u32 %v103, 7
    %v105 = vsub.s32 0, %v104
    %v106 = vrot.slane %v95, %v105
    %vm107 = vcmask 261120
    %v109 = vsel %vm107, %v59, 0
    %v112 = vsel %vm107, %v60, 0
    %114 = vmatprep.subr.mxu0 0.0
    %115 = vmatpush1.msra.mxu0 %v75
    %116 = vmatprep.subr.mxu0 0.0
    %117 = vmatpush1.msra.mxu0 %v76
    %118 = vmatprep.subr.mxu0 0.0
    %119 = vmatpush1.msra.mxu0 %v77
    %120 = vmatprep.subr.mxu0 0.0
    %121 = vmatpush1.msra.mxu0 %v78
    %122 = vmatprep.subr.mxu0 0.0
    %123 = vmatpush1.msra.mxu0 0.0
    %124 = vmatprep.subr.mxu0 0.0
    %125 = vmatpush1.msra.mxu0 0.0
    %126 = vmatprep.subr.mxu0 0.0
    %127 = vmatpush1.msra.mxu0 0.0
    %128 = vmatprep.subr.mxu0 0.0
    %129 = vmatpush1.msra.mxu0 0.0
    %130 = vmatprep.subr.mxu0 0.0
    %131 = vmatpush1.msra.mxu0 0.0
    %132 = vmatprep.subr.mxu0 0.0
    %133 = vmatpush1.msra.mxu0 0.0
    %134 = vmatprep.subr.mxu0 0.0
    %135 = vmatpush1.msra.mxu0 0.0
    %136 = vmatprep.subr.mxu0 0.0
    %137 = vmatpush1.msra.mxu0 0.0
    %138 = vmatprep.subr.mxu0 0.0
    %139 = vmatpush1.msra.mxu0 0.0
    %140 = vmatprep.subr.mxu0 0.0
    %141 = vmatpush1.msra.mxu0 0.0
    %142 = vmatprep.subr.mxu0 0.0
    %143 = vmatpush1.msra.mxu0 0.0
    %144 = vmatprep.subr.mxu0 0.0
    %145 = vmatpush1.msra.mxu0 0.0
    %146 = vmatprep.subr.mxu0 0.0
    %147 = vmatpush1.msra.mxu0 0.0
    %148 = vmatprep.subr.mxu0 0.0
    %149 = vmatpush1.msra.mxu0 0.0
    %150 = vmatprep.subr.mxu0 0.0
    %151 = vmatpush1.msra.mxu0 0.0
    %152 = vmatprep.subr.mxu0 0.0
    %153 = vmatpush1.msra.mxu0 0.0
    %154 = vmatprep.subr.mxu0 0.0
    %155 = vmatpush1.msra.mxu0 0.0
    %156 = vmatprep.subr.mxu0 0.0
    %157 = vmatpush1.msra.mxu0 0.0
    %158 = vmatprep.subr.mxu0 0.0
    %159 = vmatpush1.msra.mxu0 0.0
    %160 = vmatprep.subr.mxu0 0.0
    %161 = vmatpush1.msra.mxu0 0.0
    %162 = vmatprep.subr.mxu0 0.0
    %163 = vmatpush1.msra.mxu0 0.0
    %164 = vmatprep.subr.mxu0 0.0
    %165 = vmatpush1.msra.mxu0 0.0
    %166 = vmatprep.subr.mxu0 0.0
    %167 = vmatpush1.msra.mxu0 0.0
    %168 = vmatprep.subr.mxu0 0.0
    %169 = vmatpush1.msra.mxu0 0.0
    %170 = vmatprep.subr.mxu0 0.0
    %171 = vmatpush1.msra.mxu0 0.0
    %172 = vmatprep.subr.mxu0 0.0
    %173 = vmatpush1.msra.mxu0 0.0
    %174 = vmatprep.subr.mxu0 0.0
    %175 = vmatpush1.msra.mxu0 0.0
    %176 = vmatprep.subr.mxu0 0.0
    %177 = vmatpush1.msra.mxu0 0.0
    %178 = vmatprep.mubr.f32.mxu0 0.0
    %179 = vmatmul.mubr.f32.gmra.mrb[0].mxu0 %v109
    %v180 = vpop.f32.mrb[0].mxu0
    %v181 = vadd.f32 %v106, %v180
    %v182 = vpop.f32.mrb[0].mxu0
    %183 = vmatprep.mubr.f32.mxu0 0.0
    %184 = vmatmul.mubr.f32.gmra.mrb[0].mxu0 %v112
    %v185 = vpop.f32.mrb[0].mxu0
    %v186 = vadd.f32 %v106, %v185
    %v187 = vpop.f32.mrb[0].mxu0
    %188 = vdwg.mxu0
    %191 = vrot.lane.b32.xlu0 %v181, 120
    %v192 = vpop.permute.xlu0 %191
    %193 = vrot.lane.b32.xlu0 %v186, 120
    %v194 = vpop.permute.xlu0 %193
    %195 = vrot.lane.b32.xlu0 %v181, 112
    %v196 = vpop.permute.xlu0 %195
    %197 = vrot.lane.b32.xlu0 %v186, 112
    %v198 = vpop.permute.xlu0 %197
    %199 = vrot.lane.b32.xlu0 %v181, 104
    %v200 = vpop.permute.xlu0 %199
    %201 = vrot.lane.b32.xlu0 %v186, 104
    %v202 = vpop.permute.xlu0 %201
    %203 = vrot.lane.b32.xlu0 %v181, 96
    %v204 = vpop.permute.xlu0 %203
    %vm205 = vcmask 64512
    %v206 = vsel %vm205, %v181, 0
    %v208 = vsel %vm205, %v204, 0
    %210 = vmatprep.subr.mxu0 0.0
    %211 = vmatpush1.xpose.msra.mxu0 %v208
    %212 = vmatprep.subr.mxu0 0.0
    %213 = vmatpush1.xpose.msra.mxu0 0.0
    %214 = vmatprep.subr.mxu0 0.0
    %215 = vmatpush1.xpose.msra.mxu0 0.0
    %216 = vmatprep.subr.mxu0 0.0
    %217 = vmatpush1.xpose.msra.mxu0 0.0
    %218 = vmatprep.subr.mxu0 0.0
    %219 = vmatpush1.xpose.msra.mxu0 0.0
    %220 = vmatprep.subr.mxu0 0.0
    %221 = vmatpush1.xpose.msra.mxu0 0.0
    %222 = vmatprep.subr.mxu0 0.0
    %223 = vmatpush1.xpose.msra.mxu0 0.0
    %224 = vmatprep.subr.mxu0 0.0
    %225 = vmatpush1.xpose.msra.mxu0 0.0
    %226 = vmatprep.subr.mxu0 0.0
    %227 = vmatpush1.xpose.msra.mxu0 0.0
    %228 = vmatprep.subr.mxu0 0.0
    %229 = vmatpush1.xpose.msra.mxu0 0.0
    %230 = vmatprep.subr.mxu0 0.0
    %231 = vmatpush1.xpose.msra.mxu0 0.0
    %232 = vmatprep.subr.mxu0 0.0
    %233 = vmatpush1.xpose.msra.mxu0 0.0
    %234 = vmatprep.subr.mxu0 0.0
    %235 = vmatpush1.xpose.msra.mxu0 0.0
    %236 = vmatprep.subr.mxu0 0.0
    %237 = vmatpush1.xpose.msra.mxu0 0.0
    %238 = vmatprep.subr.mxu0 0.0
    %239 = vmatpush1.xpose.msra.mxu0 0.0
    %240 = vmatprep.subr.mxu0 0.0
    %241 = vmatpush1.xpose.msra.mxu0 0.0
    %242 = vmatprep.subr.mxu0 0.0
    %243 = vmatpush1.xpose.msra.mxu0 0.0
    %244 = vmatprep.subr.mxu0 0.0
    %245 = vmatpush1.xpose.msra.mxu0 0.0
    %246 = vmatprep.subr.mxu0 0.0
    %247 = vmatpush1.xpose.msra.mxu0 0.0
    %248 = vmatprep.subr.mxu0 0.0
    %249 = vmatpush1.xpose.msra.mxu0 0.0
    %250 = vmatprep.subr.mxu0 0.0
    %251 = vmatpush1.xpose.msra.mxu0 0.0
    %252 = vmatprep.subr.mxu0 0.0
    %253 = vmatpush1.xpose.msra.mxu0 0.0
    %254 = vmatprep.subr.mxu0 0.0
    %255 = vmatpush1.xpose.msra.mxu0 0.0
    %256 = vmatprep.subr.mxu0 0.0
    %257 = vmatpush1.xpose.msra.mxu0 0.0
    %258 = vmatprep.subr.mxu0 0.0
    %259 = vmatpush1.xpose.msra.mxu0 0.0
    %260 = vmatprep.subr.mxu0 0.0
    %261 = vmatpush1.xpose.msra.mxu0 0.0
    %262 = vmatprep.subr.mxu0 0.0
    %263 = vmatpush1.xpose.msra.mxu0 0.0
    %264 = vmatprep.subr.mxu0 0.0
    %265 = vmatpush1.xpose.msra.mxu0 0.0
    %266 = vmatprep.subr.mxu0 0.0
    %267 = vmatpush1.xpose.msra.mxu0 0.0
    %268 = vmatprep.subr.mxu0 0.0
    %269 = vmatpush1.xpose.msra.mxu0 0.0
    %270 = vmatprep.subr.mxu0 0.0
    %271 = vmatpush1.xpose.msra.mxu0 0.0
    %272 = vmatprep.subr.mxu0 0.0
    %273 = vmatpush1.xpose.msra.mxu0 0.0
    %274 = vmatprep.mubr.f32.mxu0 0.0
    %275 = vmatmul.mubr.f32.gmra.mrb[0].mxu0 %v206
    %v276 = vpop.f32.mrb[0].mxu0
    %v277 = vadd.f32 0.0, %v276
    %v278 = vpop.f32.mrb[0].mxu0
    %279 = vdwg.mxu0
    %280 = vrot.lane.b32.xlu0 %v186, 96
    %v281 = vpop.permute.xlu0 %280
    %v282 = vsel %vm205, %v186, 0
    %v284 = vsel %vm205, %v281, 0
    %286 = vmatprep.subr.mxu0 0.0
    %287 = vmatpush1.xpose.msra.mxu0 %v284
    %288 = vmatprep.subr.mxu0 0.0
    %289 = vmatpush1.xpose.msra.mxu0 0.0
    %290 = vmatprep.subr.mxu0 0.0
    %291 = vmatpush1.xpose.msra.mxu0 0.0
    %292 = vmatprep.subr.mxu0 0.0
    %293 = vmatpush1.xpose.msra.mxu0 0.0
    %294 = vmatprep.subr.mxu0 0.0
    %295 = vmatpush1.xpose.msra.mxu0 0.0
    %296 = vmatprep.subr.mxu0 0.0
    %297 = vmatpush1.xpose.msra.mxu0 0.0
    %298 = vmatprep.subr.mxu0 0.0
    %299 = vmatpush1.xpose.msra.mxu0 0.0
    %300 = vmatprep.subr.mxu0 0.0
    %301 = vmatpush1.xpose.msra.mxu0 0.0
    %302 = vmatprep.subr.mxu0 0.0
    %303 = vmatpush1.xpose.msra.mxu0 0.0
    %304 = vmatprep.subr.mxu0 0.0
    %305 = vmatpush1.xpose.msra.mxu0 0.0
    %306 = vmatprep.subr.mxu0 0.0
    %307 = vmatpush1.xpose.msra.mxu0 0.0
    %308 = vmatprep.subr.mxu0 0.0
    %309 = vmatpush1.xpose.msra.mxu0 0.0
    %310 = vmatprep.subr.mxu0 0.0
    %311 = vmatpush1.xpose.msra.mxu0 0.0
    %312 = vmatprep.subr.mxu0 0.0
    %313 = vmatpush1.xpose.msra.mxu0 0.0
    %314 = vmatprep.subr.mxu0 0.0
    %315 = vmatpush1.xpose.msra.mxu0 0.0
    %316 = vmatprep.subr.mxu0 0.0
    %317 = vmatpush1.xpose.msra.mxu0 0.0
    %318 = vmatprep.subr.mxu0 0.0
    %319 = vmatpush1.xpose.msra.mxu0 0.0
    %320 = vmatprep.subr.mxu0 0.0
    %321 = vmatpush1.xpose.msra.mxu0 0.0
    %322 = vmatprep.subr.mxu0 0.0
    %323 = vmatpush1.xpose.msra.mxu0 0.0
    %324 = vmatprep.subr.mxu0 0.0
    %325 = vmatpush1.xpose.msra.mxu0 0.0
    %326 = vmatprep.subr.mxu0 0.0
    %327 = vmatpush1.xpose.msra.mxu0 0.0
    %328 = vmatprep.subr.mxu0 0.0
    %329 = vmatpush1.xpose.msra.mxu0 0.0
    %330 = vmatprep.subr.mxu0 0.0
    %331 = vmatpush1.xpose.msra.mxu0 0.0
    %332 = vmatprep.subr.mxu0 0.0
    %333 = vmatpush1.xpose.msra.mxu0 0.0
    %334 = vmatprep.subr.mxu0 0.0
    %335 = vmatpush1.xpose.msra.mxu0 0.0
    %336 = vmatprep.subr.mxu0 0.0
    %337 = vmatpush1.xpose.msra.mxu0 0.0
    %338 = vmatprep.subr.mxu0 0.0
    %339 = vmatpush1.xpose.msra.mxu0 0.0
    %340 = vmatprep.subr.mxu0 0.0
    %341 = vmatpush1.xpose.msra.mxu0 0.0
    %342 = vmatprep.subr.mxu0 0.0
    %343 = vmatpush1.xpose.msra.mxu0 0.0
    %344 = vmatprep.subr.mxu0 0.0
    %345 = vmatpush1.xpose.msra.mxu0 0.0
    %346 = vmatprep.subr.mxu0 0.0
    %347 = vmatpush1.xpose.msra.mxu0 0.0
    %348 = vmatprep.subr.mxu0 0.0
    %349 = vmatpush1.xpose.msra.mxu0 0.0
    %350 = vmatprep.mubr.f32.mxu0 0.0
    %351 = vmatmul.mubr.f32.gmra.mrb[0].mxu0 %v282
    %v352 = vpop.f32.mrb[0].mxu0
    %v353 = vadd.f32 0.0, %v352
    %v354 = vpop.f32.mrb[0].mxu0
    %355 = vdwg.mxu0
    %356 = vrot.lane.b32.xlu0 %v192, 96
    %v357 = vpop.permute.xlu0 %356
    %v358 = vsel %vm205, %v192, 0
    %v360 = vsel %vm205, %v357, 0
    %362 = vmatprep.subr.mxu0 0.0
    %363 = vmatpush1.xpose.msra.mxu0 %v360
    %364 = vmatprep.subr.mxu0 0.0
    %365 = vmatpush1.xpose.msra.mxu0 0.0
    %366 = vmatprep.subr.mxu0 0.0
    %367 = vmatpush1.xpose.msra.mxu0 0.0
    %368 = vmatprep.subr.mxu0 0.0
    %369 = vmatpush1.xpose.msra.mxu0 0.0
    %370 = vmatprep.subr.mxu0 0.0
    %371 = vmatpush1.xpose.msra.mxu0 0.0
    %372 = vmatprep.subr.mxu0 0.0
    %373 = vmatpush1.xpose.msra.mxu0 0.0
    %374 = vmatprep.subr.mxu0 0.0
    %375 = vmatpush1.xpose.msra.mxu0 0.0
    %376 = vmatprep.subr.mxu0 0.0
    %377 = vmatpush1.xpose.msra.mxu0 0.0
    %378 = vmatprep.subr.mxu0 0.0
    %379 = vmatpush1.xpose.msra.mxu0 0.0
    %380 = vmatprep.subr.mxu0 0.0
    %381 = vmatpush1.xpose.msra.mxu0 0.0
    %382 = vmatprep.subr.mxu0 0.0
    %383 = vmatpush1.xpose.msra.mxu0 0.0
    %384 = vmatprep.subr.mxu0 0.0
    %385 = vmatpush1.xpose.msra.mxu0 0.0
    %386 = vmatprep.subr.mxu0 0.0
    %387 = vmatpush1.xpose.msra.mxu0 0.0
    %388 = vmatprep.subr.mxu0 0.0
    %389 = vmatpush1.xpose.msra.mxu0 0.0
    %390 = vmatprep.subr.mxu0 0.0
    %391 = vmatpush1.xpose.msra.mxu0 0.0
    %392 = vmatprep.subr.mxu0 0.0
    %393 = vmatpush1.xpose.msra.mxu0 0.0
    %394 = vmatprep.subr.mxu0 0.0
    %395 = vmatpush1.xpose.msra.mxu0 0.0
    %396 = vmatprep.subr.mxu0 0.0
    %397 = vmatpush1.xpose.msra.mxu0 0.0
    %398 = vmatprep.subr.mxu0 0.0
    %399 = vmatpush1.xpose.msra.mxu0 0.0
    %400 = vmatprep.subr.mxu0 0.0
    %401 = vmatpush1.xpose.msra.mxu0 0.0
    %402 = vmatprep.subr.mxu0 0.0
    %403 = vmatpush1.xpose.msra.mxu0 0.0
    %404 = vmatprep.subr.mxu0 0.0
    %405 = vmatpush1.xpose.msra.mxu0 0.0
    %406 = vmatprep.subr.mxu0 0.0
    %407 = vmatpush1.xpose.msra.mxu0 0.0
    %408 = vmatprep.subr.mxu0 0.0
    %409 = vmatpush1.xpose.msra.mxu0 0.0
    %410 = vmatprep.subr.mxu0 0.0
    %411 = vmatpush1.xpose.msra.mxu0 0.0
    %412 = vmatprep.subr.mxu0 0.0
    %413 = vmatpush1.xpose.msra.mxu0 0.0
    %414 = vmatprep.subr.mxu0 0.0
    %415 = vmatpush1.xpose.msra.mxu0 0.0
    %416 = vmatprep.subr.mxu0 0.0
    %417 = vmatpush1.xpose.msra.mxu0 0.0
    %418 = vmatprep.subr.mxu0 0.0
    %419 = vmatpush1.xpose.msra.mxu0 0.0
    %420 = vmatprep.subr.mxu0 0.0
    %421 = vmatpush1.xpose.msra.mxu0 0.0
    %422 = vmatprep.subr.mxu0 0.0
    %423 = vmatpush1.xpose.msra.mxu0 0.0
    %424 = vmatprep.subr.mxu0 0.0
    %425 = vmatpush1.xpose.msra.mxu0 0.0
    %426 = vmatprep.mubr.f32.mxu0 0.0
    %427 = vmatmul.mubr.f32.gmra.mrb[0].mxu0 %v358
    %v428 = vpop.f32.mrb[0].mxu0
    %v429 = vadd.f32 0.0, %v428
    %v430 = vpop.f32.mrb[0].mxu0
    %431 = vdwg.mxu0
    %432 = vrot.lane.b32.xlu0 %v194, 96
    %v433 = vpop.permute.xlu0 %432
    %v434 = vsel %vm205, %v194, 0
    %v436 = vsel %vm205, %v433, 0
    %438 = vmatprep.subr.mxu0 0.0
    %439 = vmatpush1.xpose.msra.mxu0 %v436
    %440 = vmatprep.subr.mxu0 0.0
    %441 = vmatpush1.xpose.msra.mxu0 0.0
    %442 = vmatprep.subr.mxu0 0.0
    %443 = vmatpush1.xpose.msra.mxu0 0.0
    %444 = vmatprep.subr.mxu0 0.0
    %445 = vmatpush1.xpose.msra.mxu0 0.0
    %446 = vmatprep.subr.mxu0 0.0
    %447 = vmatpush1.xpose.msra.mxu0 0.0
    %448 = vmatprep.subr.mxu0 0.0
    %449 = vmatpush1.xpose.msra.mxu0 0.0
    %450 = vmatprep.subr.mxu0 0.0
    %451 = vmatpush1.xpose.msra.mxu0 0.0
    %452 = vmatprep.subr.mxu0 0.0
    %453 = vmatpush1.xpose.msra.mxu0 0.0
    %454 = vmatprep.subr.mxu0 0.0
    %455 = vmatpush1.xpose.msra.mxu0 0.0
    %456 = vmatprep.subr.mxu0 0.0
    %457 = vmatpush1.xpose.msra.mxu0 0.0
    %458 = vmatprep.subr.mxu0 0.0
    %459 = vmatpush1.xpose.msra.mxu0 0.0
    %460 = vmatprep.subr.mxu0 0.0
    %461 = vmatpush1.xpose.msra.mxu0 0.0
    %462 = vmatprep.subr.mxu0 0.0
    %463 = vmatpush1.xpose.msra.mxu0 0.0
    %464 = vmatprep.subr.mxu0 0.0
    %465 = vmatpush1.xpose.msra.mxu0 0.0
    %466 = vmatprep.subr.mxu0 0.0
    %467 = vmatpush1.xpose.msra.mxu0 0.0
    %468 = vmatprep.subr.mxu0 0.0
    %469 = vmatpush1.xpose.msra.mxu0 0.0
    %470 = vmatprep.subr.mxu0 0.0
    %471 = vmatpush1.xpose.msra.mxu0 0.0
    %472 = vmatprep.subr.mxu0 0.0
    %473 = vmatpush1.xpose.msra.mxu0 0.0
    %474 = vmatprep.subr.mxu0 0.0
    %475 = vmatpush1.xpose.msra.mxu0 0.0
    %476 = vmatprep.subr.mxu0 0.0
    %477 = vmatpush1.xpose.msra.mxu0 0.0
    %478 = vmatprep.subr.mxu0 0.0
    %479 = vmatpush1.xpose.msra.mxu0 0.0
    %480 = vmatprep.subr.mxu0 0.0
    %481 = vmatpush1.xpose.msra.mxu0 0.0
    %482 = vmatprep.subr.mxu0 0.0
    %483 = vmatpush1.xpose.msra.mxu0 0.0
    %484 = vmatprep.subr.mxu0 0.0
    %485 = vmatpush1.xpose.msra.mxu0 0.0
    %486 = vmatprep.subr.mxu0 0.0
    %487 = vmatpush1.xpose.msra.mxu0 0.0
    %488 = vmatprep.subr.mxu0 0.0
    %489 = vmatpush1.xpose.msra.mxu0 0.0
    %490 = vmatprep.subr.mxu0 0.0
    %491 = vmatpush1.xpose.msra.mxu0 0.0
    %492 = vmatprep.subr.mxu0 0.0
    %493 = vmatpush1.xpose.msra.mxu0 0.0
    %494 = vmatprep.subr.mxu0 0.0
    %495 = vmatpush1.xpose.msra.mxu0 0.0
    %496 = vmatprep.subr.mxu0 0.0
    %497 = vmatpush1.xpose.msra.mxu0 0.0
    %498 = vmatprep.subr.mxu0 0.0
    %499 = vmatpush1.xpose.msra.mxu0 0.0
    %500 = vmatprep.subr.mxu0 0.0
    %501 = vmatpush1.xpose.msra.mxu0 0.0
    %502 = vmatprep.mubr.f32.mxu0 0.0
    %503 = vmatmul.mubr.f32.gmra.mrb[0].mxu0 %v434
    %v504 = vpop.f32.mrb[0].mxu0
    %v505 = vadd.f32 0.0, %v504
    %v506 = vpop.f32.mrb[0].mxu0
    %507 = vdwg.mxu0
    %508 = vrot.lane.b32.xlu0 %v196, 96
    %v509 = vpop.permute.xlu0 %508
    %v510 = vsel %vm205, %v196, 0
    %v512 = vsel %vm205, %v509, 0
    %514 = vmatprep.subr.mxu0 0.0
    %515 = vmatpush1.xpose.msra.mxu0 %v512
    %516 = vmatprep.subr.mxu0 0.0
    %517 = vmatpush1.xpose.msra.mxu0 0.0
    %518 = vmatprep.subr.mxu0 0.0
    %519 = vmatpush1.xpose.msra.mxu0 0.0
    %520 = vmatprep.subr.mxu0 0.0
    %521 = vmatpush1.xpose.msra.mxu0 0.0
    %522 = vmatprep.subr.mxu0 0.0
    %523 = vmatpush1.xpose.msra.mxu0 0.0
    %524 = vmatprep.subr.mxu0 0.0
    %525 = vmatpush1.xpose.msra.mxu0 0.0
    %526 = vmatprep.subr.mxu0 0.0
    %527 = vmatpush1.xpose.msra.mxu0 0.0
    %528 = vmatprep.subr.mxu0 0.0
    %529 = vmatpush1.xpose.msra.mxu0 0.0
    %530 = vmatprep.subr.mxu0 0.0
    %531 = vmatpush1.xpose.msra.mxu0 0.0
    %532 = vmatprep.subr.mxu0 0.0
    %533 = vmatpush1.xpose.msra.mxu0 0.0
    %534 = vmatprep.subr.mxu0 0.0
    %535 = vmatpush1.xpose.msra.mxu0 0.0
    %536 = vmatprep.subr.mxu0 0.0
    %537 = vmatpush1.xpose.msra.mxu0 0.0
    %538 = vmatprep.subr.mxu0 0.0
    %539 = vmatpush1.xpose.msra.mxu0 0.0
    %540 = vmatprep.subr.mxu0 0.0
    %541 = vmatpush1.xpose.msra.mxu0 0.0
    %542 = vmatprep.subr.mxu0 0.0
    %543 = vmatpush1.xpose.msra.mxu0 0.0
    %544 = vmatprep.subr.mxu0 0.0
    %545 = vmatpush1.xpose.msra.mxu0 0.0
    %546 = vmatprep.subr.mxu0 0.0
    %547 = vmatpush1.xpose.msra.mxu0 0.0
    %548 = vmatprep.subr.mxu0 0.0
    %549 = vmatpush1.xpose.msra.mxu0 0.0
    %550 = vmatprep.subr.mxu0 0.0
    %551 = vmatpush1.xpose.msra.mxu0 0.0
    %552 = vmatprep.subr.mxu0 0.0
    %553 = vmatpush1.xpose.msra.mxu0 0.0
    %554 = vmatprep.subr.mxu0 0.0
    %555 = vmatpush1.xpose.msra.mxu0 0.0
    %556 = vmatprep.subr.mxu0 0.0
    %557 = vmatpush1.xpose.msra.mxu0 0.0
    %558 = vmatprep.subr.mxu0 0.0
    %559 = vmatpush1.xpose.msra.mxu0 0.0
    %560 = vmatprep.subr.mxu0 0.0
    %561 = vmatpush1.xpose.msra.mxu0 0.0
    %562 = vmatprep.subr.mxu0 0.0
    %563 = vmatpush1.xpose.msra.mxu0 0.0
    %564 = vmatprep.subr.mxu0 0.0
    %565 = vmatpush1.xpose.msra.mxu0 0.0
    %566 = vmatprep.subr.mxu0 0.0
    %567 = vmatpush1.xpose.msra.mxu0 0.0
    %568 = vmatprep.subr.mxu0 0.0
    %569 = vmatpush1.xpose.msra.mxu0 0.0
    %570 = vmatprep.subr.mxu0 0.0
    %571 = vmatpush1.xpose.msra.mxu0 0.0
    %572 = vmatprep.subr.mxu0 0.0
    %573 = vmatpush1.xpose.msra.mxu0 0.0
    %574 = vmatprep.subr.mxu0 0.0
    %575 = vmatpush1.xpose.msra.mxu0 0.0
    %576 = vmatprep.subr.mxu0 0.0
    %577 = vmatpush1.xpose.msra.mxu0 0.0
    %578 = vmatprep.mubr.f32.mxu0 0.0
    %579 = vmatmul.mubr.f32.gmra.mrb[0].mxu0 %v510
    %v580 = vpop.f32.mrb[0].mxu0
    %v581 = vadd.f32 0.0, %v580
    %v582 = vpop.f32.mrb[0].mxu0
    %583 = vdwg.mxu0
    %584 = vrot.lane.b32.xlu0 %v198, 96
    %v585 = vpop.permute.xlu0 %584
    %v586 = vsel %vm205, %v198, 0
    %v588 = vsel %vm205, %v585, 0
    %590 = vmatprep.subr.mxu0 0.0
    %591 = vmatpush1.xpose.msra.mxu0 %v588
    %592 = vmatprep.subr.mxu0 0.0
    %593 = vmatpush1.xpose.msra.mxu0 0.0
    %594 = vmatprep.subr.mxu0 0.0
    %595 = vmatpush1.xpose.msra.mxu0 0.0
    %596 = vmatprep.subr.mxu0 0.0
    %597 = vmatpush1.xpose.msra.mxu0 0.0
    %598 = vmatprep.subr.mxu0 0.0
    %599 = vmatpush1.xpose.msra.mxu0 0.0
    %600 = vmatprep.subr.mxu0 0.0
    %601 = vmatpush1.xpose.msra.mxu0 0.0
    %602 = vmatprep.subr.mxu0 0.0
    %603 = vmatpush1.xpose.msra.mxu0 0.0
    %604 = vmatprep.subr.mxu0 0.0
    %605 = vmatpush1.xpose.msra.mxu0 0.0
    %606 = vmatprep.subr.mxu0 0.0
    %607 = vmatpush1.xpose.msra.mxu0 0.0
    %608 = vmatprep.subr.mxu0 0.0
    %609 = vmatpush1.xpose.msra.mxu0 0.0
    %610 = vmatprep.subr.mxu0 0.0
    %611 = vmatpush1.xpose.msra.mxu0 0.0
    %612 = vmatprep.subr.mxu0 0.0
    %613 = vmatpush1.xpose.msra.mxu0 0.0
    %614 = vmatprep.subr.mxu0 0.0
    %615 = vmatpush1.xpose.msra.mxu0 0.0
    %616 = vmatprep.subr.mxu0 0.0
    %617 = vmatpush1.xpose.msra.mxu0 0.0
    %618 = vmatprep.subr.mxu0 0.0
    %619 = vmatpush1.xpose.msra.mxu0 0.0
    %620 = vmatprep.subr.mxu0 0.0
    %621 = vmatpush1.xpose.msra.mxu0 0.0
    %622 = vmatprep.subr.mxu0 0.0
    %623 = vmatpush1.xpose.msra.mxu0 0.0
    %624 = vmatprep.subr.mxu0 0.0
    %625 = vmatpush1.xpose.msra.mxu0 0.0
    %626 = vmatprep.subr.mxu0 0.0
    %627 = vmatpush1.xpose.msra.mxu0 0.0
    %628 = vmatprep.subr.mxu0 0.0
    %629 = vmatpush1.xpose.msra.mxu0 0.0
    %630 = vmatprep.subr.mxu0 0.0
    %631 = vmatpush1.xpose.msra.mxu0 0.0
    %632 = vmatprep.subr.mxu0 0.0
    %633 = vmatpush1.xpose.msra.mxu0 0.0
    %634 = vmatprep.subr.mxu0 0.0
    %635 = vmatpush1.xpose.msra.mxu0 0.0
    %636 = vmatprep.subr.mxu0 0.0
    %637 = vmatpush1.xpose.msra.mxu0 0.0
    %638 = vmatprep.subr.mxu0 0.0
    %639 = vmatpush1.xpose.msra.mxu0 0.0
    %640 = vmatprep.subr.mxu0 0.0
    %641 = vmatpush1.xpose.msra.mxu0 0.0
    %642 = vmatprep.subr.mxu0 0.0
    %643 = vmatpush1.xpose.msra.mxu0 0.0
    %644 = vmatprep.subr.mxu0 0.0
    %645 = vmatpush1.xpose.msra.mxu0 0.0
    %646 = vmatprep.subr.mxu0 0.0
    %647 = vmatpush1.xpose.msra.mxu0 0.0
    %648 = vmatprep.subr.mxu0 0.0
    %649 = vmatpush1.xpose.msra.mxu0 0.0
    %650 = vmatprep.subr.mxu0 0.0
    %651 = vmatpush1.xpose.msra.mxu0 0.0
    %652 = vmatprep.subr.mxu0 0.0
    %653 = vmatpush1.xpose.msra.mxu0 0.0
    %654 = vmatprep.mubr.f32.mxu0 0.0
    %655 = vmatmul.mubr.f32.gmra.mrb[0].mxu0 %v586
    %v656 = vpop.f32.mrb[0].mxu0
    %v657 = vadd.f32 0.0, %v656
    %v658 = vpop.f32.mrb[0].mxu0
    %659 = vdwg.mxu0
    %660 = vrot.lane.b32.xlu0 %v200, 96
    %v661 = vpop.permute.xlu0 %660
    %v662 = vsel %vm205, %v200, 0
    %v664 = vsel %vm205, %v661, 0
    %666 = vmatprep.subr.mxu0 0.0
    %667 = vmatpush1.xpose.msra.mxu0 %v664
    %668 = vmatprep.subr.mxu0 0.0
    %669 = vmatpush1.xpose.msra.mxu0 0.0
    %670 = vmatprep.subr.mxu0 0.0
    %671 = vmatpush1.xpose.msra.mxu0 0.0
    %672 = vmatprep.subr.mxu0 0.0
    %673 = vmatpush1.xpose.msra.mxu0 0.0
    %674 = vmatprep.subr.mxu0 0.0
    %675 = vmatpush1.xpose.msra.mxu0 0.0
    %676 = vmatprep.subr.mxu0 0.0
    %677 = vmatpush1.xpose.msra.mxu0 0.0
    %678 = vmatprep.subr.mxu0 0.0
    %679 = vmatpush1.xpose.msra.mxu0 0.0
    %680 = vmatprep.subr.mxu0 0.0
    %681 = vmatpush1.xpose.msra.mxu0 0.0
    %682 = vmatprep.subr.mxu0 0.0
    %683 = vmatpush1.xpose.msra.mxu0 0.0
    %684 = vmatprep.subr.mxu0 0.0
    %685 = vmatpush1.xpose.msra.mxu0 0.0
    %686 = vmatprep.subr.mxu0 0.0
    %687 = vmatpush1.xpose.msra.mxu0 0.0
    %688 = vmatprep.subr.mxu0 0.0
    %689 = vmatpush1.xpose.msra.mxu0 0.0
    %690 = vmatprep.subr.mxu0 0.0
    %691 = vmatpush1.xpose.msra.mxu0 0.0
    %692 = vmatprep.subr.mxu0 0.0
    %693 = vmatpush1.xpose.msra.mxu0 0.0
    %694 = vmatprep.subr.mxu0 0.0
    %695 = vmatpush1.xpose.msra.mxu0 0.0
    %696 = vmatprep.subr.mxu0 0.0
    %697 = vmatpush1.xpose.msra.mxu0 0.0
    %698 = vmatprep.subr.mxu0 0.0
    %699 = vmatpush1.xpose.msra.mxu0 0.0
    %700 = vmatprep.subr.mxu0 0.0
    %701 = vmatpush1.xpose.msra.mxu0 0.0
    %702 = vmatprep.subr.mxu0 0.0
    %703 = vmatpush1.xpose.msra.mxu0 0.0
    %704 = vmatprep.subr.mxu0 0.0
    %705 = vmatpush1.xpose.msra.mxu0 0.0
    %706 = vmatprep.subr.mxu0 0.0
    %707 = vmatpush1.xpose.msra.mxu0 0.0
    %708 = vmatprep.subr.mxu0 0.0
    %709 = vmatpush1.xpose.msra.mxu0 0.0
    %710 = vmatprep.subr.mxu0 0.0
    %711 = vmatpush1.xpose.msra.mxu0 0.0
    %712 = vmatprep.subr.mxu0 0.0
    %713 = vmatpush1.xpose.msra.mxu0 0.0
    %714 = vmatprep.subr.mxu0 0.0
    %715 = vmatpush1.xpose.msra.mxu0 0.0
    %716 = vmatprep.subr.mxu0 0.0
    %717 = vmatpush1.xpose.msra.mxu0 0.0
    %718 = vmatprep.subr.mxu0 0.0
    %719 = vmatpush1.xpose.msra.mxu0 0.0
    %720 = vmatprep.subr.mxu0 0.0
    %721 = vmatpush1.xpose.msra.mxu0 0.0
    %722 = vmatprep.subr.mxu0 0.0
    %723 = vmatpush1.xpose.msra.mxu0 0.0
    %724 = vmatprep.subr.mxu0 0.0
    %725 = vmatpush1.xpose.msra.mxu0 0.0
    %726 = vmatprep.subr.mxu0 0.0
    %727 = vmatpush1.xpose.msra.mxu0 0.0
    %728 = vmatprep.subr.mxu0 0.0
    %729 = vmatpush1.xpose.msra.mxu0 0.0
    %730 = vmatprep.mubr.f32.mxu0 0.0
    %731 = vmatmul.mubr.f32.gmra.mrb[0].mxu0 %v662
    %v732 = vpop.f32.mrb[0].mxu0
    %v733 = vadd.f32 0.0, %v732
    %v734 = vpop.f32.mrb[0].mxu0
    %735 = vdwg.mxu0
    %736 = vrot.lane.b32.xlu0 %v202, 96
    %v737 = vpop.permute.xlu0 %736
    %v738 = vsel %vm205, %v202, 0
    %v740 = vsel %vm205, %v737, 0
    %742 = vmatprep.subr.mxu0 0.0
    %743 = vmatpush1.xpose.msra.mxu0 %v740
    %744 = vmatprep.subr.mxu0 0.0
    %745 = vmatpush1.xpose.msra.mxu0 0.0
    %746 = vmatprep.subr.mxu0 0.0
    %747 = vmatpush1.xpose.msra.mxu0 0.0
    %748 = vmatprep.subr.mxu0 0.0
    %749 = vmatpush1.xpose.msra.mxu0 0.0
    %750 = vmatprep.subr.mxu0 0.0
    %751 = vmatpush1.xpose.msra.mxu0 0.0
    %752 = vmatprep.subr.mxu0 0.0
    %753 = vmatpush1.xpose.msra.mxu0 0.0
    %754 = vmatprep.subr.mxu0 0.0
    %755 = vmatpush1.xpose.msra.mxu0 0.0
    %756 = vmatprep.subr.mxu0 0.0
    %757 = vmatpush1.xpose.msra.mxu0 0.0
    %758 = vmatprep.subr.mxu0 0.0
    %759 = vmatpush1.xpose.msra.mxu0 0.0
    %760 = vmatprep.subr.mxu0 0.0
    %761 = vmatpush1.xpose.msra.mxu0 0.0
    %762 = vmatprep.subr.mxu0 0.0
    %763 = vmatpush1.xpose.msra.mxu0 0.0
    %764 = vmatprep.subr.mxu0 0.0
    %765 = vmatpush1.xpose.msra.mxu0 0.0
    %766 = vmatprep.subr.mxu0 0.0
    %767 = vmatpush1.xpose.msra.mxu0 0.0
    %768 = vmatprep.subr.mxu0 0.0
    %769 = vmatpush1.xpose.msra.mxu0 0.0
    %770 = vmatprep.subr.mxu0 0.0
    %771 = vmatpush1.xpose.msra.mxu0 0.0
    %772 = vmatprep.subr.mxu0 0.0
    %773 = vmatpush1.xpose.msra.mxu0 0.0
    %774 = vmatprep.subr.mxu0 0.0
    %775 = vmatpush1.xpose.msra.mxu0 0.0
    %776 = vmatprep.subr.mxu0 0.0
    %777 = vmatpush1.xpose.msra.mxu0 0.0
    %778 = vmatprep.subr.mxu0 0.0
    %779 = vmatpush1.xpose.msra.mxu0 0.0
    %780 = vmatprep.subr.mxu0 0.0
    %781 = vmatpush1.xpose.msra.mxu0 0.0
    %782 = vmatprep.subr.mxu0 0.0
    %783 = vmatpush1.xpose.msra.mxu0 0.0
    %784 = vmatprep.subr.mxu0 0.0
    %785 = vmatpush1.xpose.msra.mxu0 0.0
    %786 = vmatprep.subr.mxu0 0.0
    %787 = vmatpush1.xpose.msra.mxu0 0.0
    %788 = vmatprep.subr.mxu0 0.0
    %789 = vmatpush1.xpose.msra.mxu0 0.0
    %790 = vmatprep.subr.mxu0 0.0
    %791 = vmatpush1.xpose.msra.mxu0 0.0
    %792 = vmatprep.subr.mxu0 0.0
    %793 = vmatpush1.xpose.msra.mxu0 0.0
    %794 = vmatprep.subr.mxu0 0.0
    %795 = vmatpush1.xpose.msra.mxu0 0.0
    %796 = vmatprep.subr.mxu0 0.0
    %797 = vmatpush1.xpose.msra.mxu0 0.0
    %798 = vmatprep.subr.mxu0 0.0
    %799 = vmatpush1.xpose.msra.mxu0 0.0
    %800 = vmatprep.subr.mxu0 0.0
    %801 = vmatpush1.xpose.msra.mxu0 0.0
    %802 = vmatprep.subr.mxu0 0.0
    %803 = vmatpush1.xpose.msra.mxu0 0.0
    %804 = vmatprep.subr.mxu0 0.0
    %805 = vmatpush1.xpose.msra.mxu0 0.0
    %806 = vmatprep.mubr.f32.mxu0 0.0
    %807 = vmatmul.mubr.f32.gmra.mrb[0].mxu0 %v738
    %v808 = vpop.f32.mrb[0].mxu0
    %v809 = vadd.f32 0.0, %v808
    %v810 = vpop.f32.mrb[0].mxu0
    %811 = vdwg.mxu0
    %v812 = vmul.f32 %v277, 0.35355338
    %v813 = vmul.f32 %v353, 0.35355338
    %v814 = vmul.f32 %v429, 0.35355338
    %v815 = vmul.f32 %v505, 0.35355338
    %v816 = vmul.f32 %v581, 0.35355338
    %v817 = vmul.f32 %v657, 0.35355338
    %v818 = vmul.f32 %v733, 0.35355338
    %v819 = vmul.f32 %v809, 0.35355338
    %v820 = vadd.f32 %v812, %v68
    %v821 = vadd.f32 %v813, %v72
    %v822 = vadd.f32 %v814, %v68
    %v823 = vadd.f32 %v815, %v72
    %v824 = vadd.f32 %v816, %v68
    %v825 = vadd.f32 %v817, %v72
    %v826 = vadd.f32 %v818, %v68
    %v827 = vadd.f32 %v819, %v72
    %v828 = vsel %vm205, %v820, -inf
    %829 = vmax.xlane.f32.xlu0 %v828
    %v830 = vpop.xlane.xlu0 %829
    %v831 = vsel %vm205, %v821, -inf
    %832 = vmax.xlane.f32.xlu0 %v831
    %v833 = vpop.xlane.xlu0 %832
    %v834 = vsel %vm205, %v822, -inf
    %835 = vmax.xlane.f32.xlu0 %v834
    %v836 = vpop.xlane.xlu0 %835
    %v837 = vsel %vm205, %v823, -inf
    %838 = vmax.xlane.f32.xlu0 %v837
    %v839 = vpop.xlane.xlu0 %838
    %v840 = vsel %vm205, %v824, -inf
    %841 = vmax.xlane.f32.xlu0 %v840
    %v842 = vpop.xlane.xlu0 %841
    %v843 = vsel %vm205, %v825, -inf
    %844 = vmax.xlane.f32.xlu0 %v843
    %v845 = vpop.xlane.xlu0 %844
    %v846 = vsel %vm205, %v826, -inf
    %847 = vmax.xlane.f32.xlu0 %v846
    %v848 = vpop.xlane.xlu0 %847
    %v849 = vsel %vm205, %v827, -inf
    %850 = vmax.xlane.f32.xlu0 %v849
    %v851 = vpop.xlane.xlu0 %850
    %v852 = vsub.f32 %v820, %v830
    %v853 = vsub.f32 %v821, %v833
    %v854 = vsub.f32 %v822, %v836
    %v855 = vsub.f32 %v823, %v839
    %v856 = vsub.f32 %v824, %v842
    %v857 = vsub.f32 %v825, %v845
    %v858 = vsub.f32 %v826, %v848
    %v859 = vsub.f32 %v827, %v851
    %v860 = vmul.f32 %v852, 1.442695
    %v861 = vpow.pop %v860
    %v862 = vmul.f32 %v853, 1.442695
    %v863 = vpow.pop %v862
    %v864 = vmul.f32 %v854, 1.442695
    %v865 = vpow.pop %v864
    %v866 = vmul.f32 %v855, 1.442695
    %v867 = vpow.pop %v866
    %v868 = vmul.f32 %v856, 1.442695
    %v869 = vpow.pop %v868
    %v870 = vmul.f32 %v857, 1.442695
    %v871 = vpow.pop %v870
    %v872 = vmul.f32 %v858, 1.442695
    %v873 = vpow.pop %v872
    %v874 = vmul.f32 %v859, 1.442695
    %v875 = vpow.pop %v874
    %v876 = vsel %vm205, %v861, 0.0
    %877 = vadd.xlane.f32.xlu0 %v876
    %v878 = vpop.xlane.xlu0 %877
    %v879 = vsel %vm205, %v863, 0.0
    %880 = vadd.xlane.f32.xlu0 %v879
    %v881 = vpop.xlane.xlu0 %880
    %v882 = vsel %vm205, %v865, 0.0
    %883 = vadd.xlane.f32.xlu0 %v882
    %v884 = vpop.xlane.xlu0 %883
    %v885 = vsel %vm205, %v867, 0.0
    %886 = vadd.xlane.f32.xlu0 %v885
    %v887 = vpop.xlane.xlu0 %886
    %v888 = vsel %vm205, %v869, 0.0
    %889 = vadd.xlane.f32.xlu0 %v888
    %v890 = vpop.xlane.xlu0 %889
    %v891 = vsel %vm205, %v871, 0.0
    %892 = vadd.xlane.f32.xlu0 %v891
    %v893 = vpop.xlane.xlu0 %892
    %v894 = vsel %vm205, %v873, 0.0
    %895 = vadd.xlane.f32.xlu0 %v894
    %v896 = vpop.xlane.xlu0 %895
    %v897 = vsel %vm205, %v875, 0.0
    %898 = vadd.xlane.f32.xlu0 %v897
    %v899 = vpop.xlane.xlu0 %898
    %900 = vrot.lane.b32.xlu0 %v181, 64
    %v901 = vpop.permute.xlu0 %900
    %v904 = vsel %vm205, %v861, 0
    %906 = vmatprep.subr.mxu0 0.0
    %907 = vmatpush1.msra.mxu0 %v901
    %908 = vmatprep.subr.mxu0 0.0
    %909 = vmatpush1.msra.mxu0 0.0
    %910 = vmatprep.subr.mxu0 0.0
    %911 = vmatpush1.msra.mxu0 0.0
    %912 = vmatprep.subr.mxu0 0.0
    %913 = vmatpush1.msra.mxu0 0.0
    %914 = vmatprep.subr.mxu0 0.0
    %915 = vmatpush1.msra.mxu0 0.0
    %916 = vmatprep.subr.mxu0 0.0
    %917 = vmatpush1.msra.mxu0 0.0
    %918 = vmatprep.subr.mxu0 0.0
    %919 = vmatpush1.msra.mxu0 0.0
    %920 = vmatprep.subr.mxu0 0.0
    %921 = vmatpush1.msra.mxu0 0.0
    %922 = vmatprep.subr.mxu0 0.0
    %923 = vmatpush1.msra.mxu0 0.0
    %924 = vmatprep.subr.mxu0 0.0
    %925 = vmatpush1.msra.mxu0 0.0
    %926 = vmatprep.subr.mxu0 0.0
    %927 = vmatpush1.msra.mxu0 0.0
    %928 = vmatprep.subr.mxu0 0.0
    %929 = vmatpush1.msra.mxu0 0.0
    %930 = vmatprep.subr.mxu0 0.0
    %931 = vmatpush1.msra.mxu0 0.0
    %932 = vmatprep.subr.mxu0 0.0
    %933 = vmatpush1.msra.mxu0 0.0
    %934 = vmatprep.subr.mxu0 0.0
    %935 = vmatpush1.msra.mxu0 0.0
    %936 = vmatprep.subr.mxu0 0.0
    %937 = vmatpush1.msra.mxu0 0.0
    %938 = vmatprep.subr.mxu0 0.0
    %939 = vmatpush1.msra.mxu0 0.0
    %940 = vmatprep.subr.mxu0 0.0
    %941 = vmatpush1.msra.mxu0 0.0
    %942 = vmatprep.subr.mxu0 0.0
    %943 = vmatpush1.msra.mxu0 0.0
    %944 = vmatprep.subr.mxu0 0.0
    %945 = vmatpush1.msra.mxu0 0.0
    %946 = vmatprep.subr.mxu0 0.0
    %947 = vmatpush1.msra.mxu0 0.0
    %948 = vmatprep.subr.mxu0 0.0
    %949 = vmatpush1.msra.mxu0 0.0
    %950 = vmatprep.subr.mxu0 0.0
    %951 = vmatpush1.msra.mxu0 0.0
    %952 = vmatprep.subr.mxu0 0.0
    %953 = vmatpush1.msra.mxu0 0.0
    %954 = vmatprep.subr.mxu0 0.0
    %955 = vmatpush1.msra.mxu0 0.0
    %956 = vmatprep.subr.mxu0 0.0
    %957 = vmatpush1.msra.mxu0 0.0
    %958 = vmatprep.subr.mxu0 0.0
    %959 = vmatpush1.msra.mxu0 0.0
    %960 = vmatprep.subr.mxu0 0.0
    %961 = vmatpush1.msra.mxu0 0.0
    %962 = vmatprep.subr.mxu0 0.0
    %963 = vmatpush1.msra.mxu0 0.0
    %964 = vmatprep.subr.mxu0 0.0
    %965 = vmatpush1.msra.mxu0 0.0
    %966 = vmatprep.subr.mxu0 0.0
    %967 = vmatpush1.msra.mxu0 0.0
    %968 = vmatprep.subr.mxu0 0.0
    %969 = vmatpush1.msra.mxu0 0.0
    %970 = vmatprep.mubr.f32.mxu0 0.0
    %971 = vmatmul.mubr.f32.gmra.mrb[0].mxu0 %v904
    %v972 = vpop.f32.mrb[0].mxu0
    %v973 = vadd.f32 0.0, %v972
    %v974 = vpop.f32.mrb[0].mxu0
    %975 = vdwg.mxu0
    %976 = vrot.lane.b32.xlu0 %v186, 64
    %v977 = vpop.permute.xlu0 %976
    %v980 = vsel %vm205, %v863, 0
    %982 = vmatprep.subr.mxu0 0.0
    %983 = vmatpush1.msra.mxu0 %v977
    %984 = vmatprep.subr.mxu0 0.0
    %985 = vmatpush1.msra.mxu0 0.0
    %986 = vmatprep.subr.mxu0 0.0
    %987 = vmatpush1.msra.mxu0 0.0
    %988 = vmatprep.subr.mxu0 0.0
    %989 = vmatpush1.msra.mxu0 0.0
    %990 = vmatprep.subr.mxu0 0.0
    %991 = vmatpush1.msra.mxu0 0.0
    %992 = vmatprep.subr.mxu0 0.0
    %993 = vmatpush1.msra.mxu0 0.0
    %994 = vmatprep.subr.mxu0 0.0
    %995 = vmatpush1.msra.mxu0 0.0
    %996 = vmatprep.subr.mxu0 0.0
    %997 = vmatpush1.msra.mxu0 0.0
    %998 = vmatprep.subr.mxu0 0.0
    %999 = vmatpush1.msra.mxu0 0.0
    %1000 = vmatprep.subr.mxu0 0.0
    %1001 = vmatpush1.msra.mxu0 0.0
    %1002 = vmatprep.subr.mxu0 0.0
    %1003 = vmatpush1.msra.mxu0 0.0
    %1004 = vmatprep.subr.mxu0 0.0
    %1005 = vmatpush1.msra.mxu0 0.0
    %1006 = vmatprep.subr.mxu0 0.0
    %1007 = vmatpush1.msra.mxu0 0.0
    %1008 = vmatprep.subr.mxu0 0.0
    %1009 = vmatpush1.msra.mxu0 0.0
    %1010 = vmatprep.subr.mxu0 0.0
    %1011 = vmatpush1.msra.mxu0 0.0
    %1012 = vmatprep.subr.mxu0 0.0
    %1013 = vmatpush1.msra.mxu0 0.0
    %1014 = vmatprep.subr.mxu0 0.0
    %1015 = vmatpush1.msra.mxu0 0.0
    %1016 = vmatprep.subr.mxu0 0.0
    %1017 = vmatpush1.msra.mxu0 0.0
    %1018 = vmatprep.subr.mxu0 0.0
    %1019 = vmatpush1.msra.mxu0 0.0
    %1020 = vmatprep.subr.mxu0 0.0
    %1021 = vmatpush1.msra.mxu0 0.0
    %1022 = vmatprep.subr.mxu0 0.0
    %1023 = vmatpush1.msra.mxu0 0.0
    %1024 = vmatprep.subr.mxu0 0.0
    %1025 = vmatpush1.msra.mxu0 0.0
    %1026 = vmatprep.subr.mxu0 0.0
    %1027 = vmatpush1.msra.mxu0 0.0
    %1028 = vmatprep.subr.mxu0 0.0
    %1029 = vmatpush1.msra.mxu0 0.0
    %1030 = vmatprep.subr.mxu0 0.0
    %1031 = vmatpush1.msra.mxu0 0.0
    %1032 = vmatprep.subr.mxu0 0.0
    %1033 = vmatpush1.msra.mxu0 0.0
    %1034 = vmatprep.subr.mxu0 0.0
    %1035 = vmatpush1.msra.mxu0 0.0
    %1036 = vmatprep.subr.mxu0 0.0
    %1037 = vmatpush1.msra.mxu0 0.0
    %1038 = vmatprep.subr.mxu0 0.0
    %1039 = vmatpush1.msra.mxu0 0.0
    %1040 = vmatprep.subr.mxu0 0.0
    %1041 = vmatpush1.msra.mxu0 0.0
    %1042 = vmatprep.subr.mxu0 0.0
    %1043 = vmatpush1.msra.mxu0 0.0
    %1044 = vmatprep.subr.mxu0 0.0
    %1045 = vmatpush1.msra.mxu0 0.0
    %1046 = vmatprep.mubr.f32.mxu0 0.0
    %1047 = vmatmul.mubr.f32.gmra.mrb[0].mxu0 %v980
    %v1048 = vpop.f32.mrb[0].mxu0
    %v1049 = vadd.f32 0.0, %v1048
    %v1050 = vpop.f32.mrb[0].mxu0
    %1051 = vdwg.mxu0
    %1052 = vrot.lane.b32.xlu0 %v192, 64
    %v1053 = vpop.permute.xlu0 %1052
    %v1056 = vsel %vm205, %v865, 0
    %1058 = vmatprep.subr.mxu0 0.0
    %1059 = vmatpush1.msra.mxu0 %v1053
    %1060 = vmatprep.subr.mxu0 0.0
    %1061 = vmatpush1.msra.mxu0 0.0
    %1062 = vmatprep.subr.mxu0 0.0
    %1063 = vmatpush1.msra.mxu0 0.0
    %1064 = vmatprep.subr.mxu0 0.0
    %1065 = vmatpush1.msra.mxu0 0.0
    %1066 = vmatprep.subr.mxu0 0.0
    %1067 = vmatpush1.msra.mxu0 0.0
    %1068 = vmatprep.subr.mxu0 0.0
    %1069 = vmatpush1.msra.mxu0 0.0
    %1070 = vmatprep.subr.mxu0 0.0
    %1071 = vmatpush1.msra.mxu0 0.0
    %1072 = vmatprep.subr.mxu0 0.0
    %1073 = vmatpush1.msra.mxu0 0.0
    %1074 = vmatprep.subr.mxu0 0.0
    %1075 = vmatpush1.msra.mxu0 0.0
    %1076 = vmatprep.subr.mxu0 0.0
    %1077 = vmatpush1.msra.mxu0 0.0
    %1078 = vmatprep.subr.mxu0 0.0
    %1079 = vmatpush1.msra.mxu0 0.0
    %1080 = vmatprep.subr.mxu0 0.0
    %1081 = vmatpush1.msra.mxu0 0.0
    %1082 = vmatprep.subr.mxu0 0.0
    %1083 = vmatpush1.msra.mxu0 0.0
    %1084 = vmatprep.subr.mxu0 0.0
    %1085 = vmatpush1.msra.mxu0 0.0
    %1086 = vmatprep.subr.mxu0 0.0
    %1087 = vmatpush1.msra.mxu0 0.0
    %1088 = vmatprep.subr.mxu0 0.0
    %1089 = vmatpush1.msra.mxu0 0.0
    %1090 = vmatprep.subr.mxu0 0.0
    %1091 = vmatpush1.msra.mxu0 0.0
    %1092 = vmatprep.subr.mxu0 0.0
    %1093 = vmatpush1.msra.mxu0 0.0
    %1094 = vmatprep.subr.mxu0 0.0
    %1095 = vmatpush1.msra.mxu0 0.0
    %1096 = vmatprep.subr.mxu0 0.0
    %1097 = vmatpush1.msra.mxu0 0.0
    %1098 = vmatprep.subr.mxu0 0.0
    %1099 = vmatpush1.msra.mxu0 0.0
    %1100 = vmatprep.subr.mxu0 0.0
    %1101 = vmatpush1.msra.mxu0 0.0
    %1102 = vmatprep.subr.mxu0 0.0
    %1103 = vmatpush1.msra.mxu0 0.0
    %1104 = vmatprep.subr.mxu0 0.0
    %1105 = vmatpush1.msra.mxu0 0.0
    %1106 = vmatprep.subr.mxu0 0.0
    %1107 = vmatpush1.msra.mxu0 0.0
    %1108 = vmatprep.subr.mxu0 0.0
    %1109 = vmatpush1.msra.mxu0 0.0
    %1110 = vmatprep.subr.mxu0 0.0
    %1111 = vmatpush1.msra.mxu0 0.0
    %1112 = vmatprep.subr.mxu0 0.0
    %1113 = vmatpush1.msra.mxu0 0.0
    %1114 = vmatprep.subr.mxu0 0.0
    %1115 = vmatpush1.msra.mxu0 0.0
    %1116 = vmatprep.subr.mxu0 0.0
    %1117 = vmatpush1.msra.mxu0 0.0
    %1118 = vmatprep.subr.mxu0 0.0
    %1119 = vmatpush1.msra.mxu0 0.0
    %1120 = vmatprep.subr.mxu0 0.0
    %1121 = vmatpush1.msra.mxu0 0.0
    %1122 = vmatprep.mubr.f32.mxu0 0.0
    %1123 = vmatmul.mubr.f32.gmra.mrb[0].mxu0 %v1056
    %v1124 = vpop.f32.mrb[0].mxu0
    %v1125 = vadd.f32 0.0, %v1124
    %v1126 = vpop.f32.mrb[0].mxu0
    %1127 = vdwg.mxu0
    %1128 = vrot.lane.b32.xlu0 %v194, 64
    %v1129 = vpop.permute.xlu0 %1128
    %v1132 = vsel %vm205, %v867, 0
    %1134 = vmatprep.subr.mxu0 0.0
    %1135 = vmatpush1.msra.mxu0 %v1129
    %1136 = vmatprep.subr.mxu0 0.0
    %1137 = vmatpush1.msra.mxu0 0.0
    %1138 = vmatprep.subr.mxu0 0.0
    %1139 = vmatpush1.msra.mxu0 0.0
    %1140 = vmatprep.subr.mxu0 0.0
    %1141 = vmatpush1.msra.mxu0 0.0
    %1142 = vmatprep.subr.mxu0 0.0
    %1143 = vmatpush1.msra.mxu0 0.0
    %1144 = vmatprep.subr.mxu0 0.0
    %1145 = vmatpush1.msra.mxu0 0.0
    %1146 = vmatprep.subr.mxu0 0.0
    %1147 = vmatpush1.msra.mxu0 0.0
    %1148 = vmatprep.subr.mxu0 0.0
    %1149 = vmatpush1.msra.mxu0 0.0
    %1150 = vmatprep.subr.mxu0 0.0
    %1151 = vmatpush1.msra.mxu0 0.0
    %1152 = vmatprep.subr.mxu0 0.0
    %1153 = vmatpush1.msra.mxu0 0.0
    %1154 = vmatprep.subr.mxu0 0.0
    %1155 = vmatpush1.msra.mxu0 0.0
    %1156 = vmatprep.subr.mxu0 0.0
    %1157 = vmatpush1.msra.mxu0 0.0
    %1158 = vmatprep.subr.mxu0 0.0
    %1159 = vmatpush1.msra.mxu0 0.0
    %1160 = vmatprep.subr.mxu0 0.0
    %1161 = vmatpush1.msra.mxu0 0.0
    %1162 = vmatprep.subr.mxu0 0.0
    %1163 = vmatpush1.msra.mxu0 0.0
    %1164 = vmatprep.subr.mxu0 0.0
    %1165 = vmatpush1.msra.mxu0 0.0
    %1166 = vmatprep.subr.mxu0 0.0
    %1167 = vmatpush1.msra.mxu0 0.0
    %1168 = vmatprep.subr.mxu0 0.0
    %1169 = vmatpush1.msra.mxu0 0.0
    %1170 = vmatprep.subr.mxu0 0.0
    %1171 = vmatpush1.msra.mxu0 0.0
    %1172 = vmatprep.subr.mxu0 0.0
    %1173 = vmatpush1.msra.mxu0 0.0
    %1174 = vmatprep.subr.mxu0 0.0
    %1175 = vmatpush1.msra.mxu0 0.0
    %1176 = vmatprep.subr.mxu0 0.0
    %1177 = vmatpush1.msra.mxu0 0.0
    %1178 = vmatprep.subr.mxu0 0.0
    %1179 = vmatpush1.msra.mxu0 0.0
    %1180 = vmatprep.subr.mxu0 0.0
    %1181 = vmatpush1.msra.mxu0 0.0
    %1182 = vmatprep.subr.mxu0 0.0
    %1183 = vmatpush1.msra.mxu0 0.0
    %1184 = vmatprep.subr.mxu0 0.0
    %1185 = vmatpush1.msra.mxu0 0.0
    %1186 = vmatprep.subr.mxu0 0.0
    %1187 = vmatpush1.msra.mxu0 0.0
    %1188 = vmatprep.subr.mxu0 0.0
    %1189 = vmatpush1.msra.mxu0 0.0
    %1190 = vmatprep.subr.mxu0 0.0
    %1191 = vmatpush1.msra.mxu0 0.0
    %1192 = vmatprep.subr.mxu0 0.0
    %1193 = vmatpush1.msra.mxu0 0.0
    %1194 = vmatprep.subr.mxu0 0.0
    %1195 = vmatpush1.msra.mxu0 0.0
    %1196 = vmatprep.subr.mxu0 0.0
    %1197 = vmatpush1.msra.mxu0 0.0
    %1198 = vmatprep.mubr.f32.mxu0 0.0
    %1199 = vmatmul.mubr.f32.gmra.mrb[0].mxu0 %v1132
    %v1200 = vpop.f32.mrb[0].mxu0
    %v1201 = vadd.f32 0.0, %v1200
    %v1202 = vpop.f32.mrb[0].mxu0
    %1203 = vdwg.mxu0
    %1204 = vrot.lane.b32.xlu0 %v196, 64
    %v1205 = vpop.permute.xlu0 %1204
    %v1208 = vsel %vm205, %v869, 0
    %1210 = vmatprep.subr.mxu0 0.0
    %1211 = vmatpush1.msra.mxu0 %v1205
    %1212 = vmatprep.subr.mxu0 0.0
    %1213 = vmatpush1.msra.mxu0 0.0
    %1214 = vmatprep.subr.mxu0 0.0
    %1215 = vmatpush1.msra.mxu0 0.0
    %1216 = vmatprep.subr.mxu0 0.0
    %1217 = vmatpush1.msra.mxu0 0.0
    %1218 = vmatprep.subr.mxu0 0.0
    %1219 = vmatpush1.msra.mxu0 0.0
    %1220 = vmatprep.subr.mxu0 0.0
    %1221 = vmatpush1.msra.mxu0 0.0
    %1222 = vmatprep.subr.mxu0 0.0
    %1223 = vmatpush1.msra.mxu0 0.0
    %1224 = vmatprep.subr.mxu0 0.0
    %1225 = vmatpush1.msra.mxu0 0.0
    %1226 = vmatprep.subr.mxu0 0.0
    %1227 = vmatpush1.msra.mxu0 0.0
    %1228 = vmatprep.subr.mxu0 0.0
    %1229 = vmatpush1.msra.mxu0 0.0
    %1230 = vmatprep.subr.mxu0 0.0
    %1231 = vmatpush1.msra.mxu0 0.0
    %1232 = vmatprep.subr.mxu0 0.0
    %1233 = vmatpush1.msra.mxu0 0.0
    %1234 = vmatprep.subr.mxu0 0.0
    %1235 = vmatpush1.msra.mxu0 0.0
    %1236 = vmatprep.subr.mxu0 0.0
    %1237 = vmatpush1.msra.mxu0 0.0
    %1238 = vmatprep.subr.mxu0 0.0
    %1239 = vmatpush1.msra.mxu0 0.0
    %1240 = vmatprep.subr.mxu0 0.0
    %1241 = vmatpush1.msra.mxu0 0.0
    %1242 = vmatprep.subr.mxu0 0.0
    %1243 = vmatpush1.msra.mxu0 0.0
    %1244 = vmatprep.subr.mxu0 0.0
    %1245 = vmatpush1.msra.mxu0 0.0
    %1246 = vmatprep.subr.mxu0 0.0
    %1247 = vmatpush1.msra.mxu0 0.0
    %1248 = vmatprep.subr.mxu0 0.0
    %1249 = vmatpush1.msra.mxu0 0.0
    %1250 = vmatprep.subr.mxu0 0.0
    %1251 = vmatpush1.msra.mxu0 0.0
    %1252 = vmatprep.subr.mxu0 0.0
    %1253 = vmatpush1.msra.mxu0 0.0
    %1254 = vmatprep.subr.mxu0 0.0
    %1255 = vmatpush1.msra.mxu0 0.0
    %1256 = vmatprep.subr.mxu0 0.0
    %1257 = vmatpush1.msra.mxu0 0.0
    %1258 = vmatprep.subr.mxu0 0.0
    %1259 = vmatpush1.msra.mxu0 0.0
    %1260 = vmatprep.subr.mxu0 0.0
    %1261 = vmatpush1.msra.mxu0 0.0
    %1262 = vmatprep.subr.mxu0 0.0
    %1263 = vmatpush1.msra.mxu0 0.0
    %1264 = vmatprep.subr.mxu0 0.0
    %1265 = vmatpush1.msra.mxu0 0.0
    %1266 = vmatprep.subr.mxu0 0.0
    %1267 = vmatpush1.msra.mxu0 0.0
    %1268 = vmatprep.subr.mxu0 0.0
    %1269 = vmatpush1.msra.mxu0 0.0
    %1270 = vmatprep.subr.mxu0 0.0
    %1271 = vmatpush1.msra.mxu0 0.0
    %1272 = vmatprep.subr.mxu0 0.0
    %1273 = vmatpush1.msra.mxu0 0.0
    %1274 = vmatprep.mubr.f32.mxu0 0.0
    %1275 = vmatmul.mubr.f32.gmra.mrb[0].mxu0 %v1208
    %v1276 = vpop.f32.mrb[0].mxu0
    %v1277 = vadd.f32 0.0, %v1276
    %v1278 = vpop.f32.mrb[0].mxu0
    %1279 = vdwg.mxu0
    %1280 = vrot.lane.b32.xlu0 %v198, 64
    %v1281 = vpop.permute.xlu0 %1280
    %v1284 = vsel %vm205, %v871, 0
    %1286 = vmatprep.subr.mxu0 0.0
    %1287 = vmatpush1.msra.mxu0 %v1281
    %1288 = vmatprep.subr.mxu0 0.0
    %1289 = vmatpush1.msra.mxu0 0.0
    %1290 = vmatprep.subr.mxu0 0.0
    %1291 = vmatpush1.msra.mxu0 0.0
    %1292 = vmatprep.subr.mxu0 0.0
    %1293 = vmatpush1.msra.mxu0 0.0
    %1294 = vmatprep.subr.mxu0 0.0
    %1295 = vmatpush1.msra.mxu0 0.0
    %1296 = vmatprep.subr.mxu0 0.0
    %1297 = vmatpush1.msra.mxu0 0.0
    %1298 = vmatprep.subr.mxu0 0.0
    %1299 = vmatpush1.msra.mxu0 0.0
    %1300 = vmatprep.subr.mxu0 0.0
    %1301 = vmatpush1.msra.mxu0 0.0
    %1302 = vmatprep.subr.mxu0 0.0
    %1303 = vmatpush1.msra.mxu0 0.0
    %1304 = vmatprep.subr.mxu0 0.0
    %1305 = vmatpush1.msra.mxu0 0.0
    %1306 = vmatprep.subr.mxu0 0.0
    %1307 = vmatpush1.msra.mxu0 0.0
    %1308 = vmatprep.subr.mxu0 0.0
    %1309 = vmatpush1.msra.mxu0 0.0
    %1310 = vmatprep.subr.mxu0 0.0
    %1311 = vmatpush1.msra.mxu0 0.0
    %1312 = vmatprep.subr.mxu0 0.0
    %1313 = vmatpush1.msra.mxu0 0.0
    %1314 = vmatprep.subr.mxu0 0.0
    %1315 = vmatpush1.msra.mxu0 0.0
    %1316 = vmatprep.subr.mxu0 0.0
    %1317 = vmatpush1.msra.mxu0 0.0
    %1318 = vmatprep.subr.mxu0 0.0
    %1319 = vmatpush1.msra.mxu0 0.0
    %1320 = vmatprep.subr.mxu0 0.0
    %1321 = vmatpush1.msra.mxu0 0.0
    %1322 = vmatprep.subr.mxu0 0.0
    %1323 = vmatpush1.msra.mxu0 0.0
    %1324 = vmatprep.subr.mxu0 0.0
    %1325 = vmatpush1.msra.mxu0 0.0
    %1326 = vmatprep.subr.mxu0 0.0
    %1327 = vmatpush1.msra.mxu0 0.0
    %1328 = vmatprep.subr.mxu0 0.0
    %1329 = vmatpush1.msra.mxu0 0.0
    %1330 = vmatprep.subr.mxu0 0.0
    %1331 = vmatpush1.msra.mxu0 0.0
    %1332 = vmatprep.subr.mxu0 0.0
    %1333 = vmatpush1.msra.mxu0 0.0
    %1334 = vmatprep.subr.mxu0 0.0
    %1335 = vmatpush1.msra.mxu0 0.0
    %1336 = vmatprep.subr.mxu0 0.0
    %1337 = vmatpush1.msra.mxu0 0.0
    %1338 = vmatprep.subr.mxu0 0.0
    %1339 = vmatpush1.msra.mxu0 0.0
    %1340 = vmatprep.subr.mxu0 0.0
    %1341 = vmatpush1.msra.mxu0 0.0
    %1342 = vmatprep.subr.mxu0 0.0
    %1343 = vmatpush1.msra.mxu0 0.0
    %1344 = vmatprep.subr.mxu0 0.0
    %1345 = vmatpush1.msra.mxu0 0.0
    %1346 = vmatprep.subr.mxu0 0.0
    %1347 = vmatpush1.msra.mxu0 0.0
    %1348 = vmatprep.subr.mxu0 0.0
    %1349 = vmatpush1.msra.mxu0 0.0
    %1350 = vmatprep.mubr.f32.mxu0 0.0
    %1351 = vmatmul.mubr.f32.gmra.mrb[0].mxu0 %v1284
    %v1352 = vpop.f32.mrb[0].mxu0
    %v1353 = vadd.f32 0.0, %v1352
    %v1354 = vpop.f32.mrb[0].mxu0
    %1355 = vdwg.mxu0
    %1356 = vrot.lane.b32.xlu0 %v200, 64
    %v1357 = vpop.permute.xlu0 %1356
    %v1360 = vsel %vm205, %v873, 0
    %1362 = vmatprep.subr.mxu0 0.0
    %1363 = vmatpush1.msra.mxu0 %v1357
    %1364 = vmatprep.subr.mxu0 0.0
    %1365 = vmatpush1.msra.mxu0 0.0
    %1366 = vmatprep.subr.mxu0 0.0
    %1367 = vmatpush1.msra.mxu0 0.0
    %1368 = vmatprep.subr.mxu0 0.0
    %1369 = vmatpush1.msra.mxu0 0.0
    %1370 = vmatprep.subr.mxu0 0.0
    %1371 = vmatpush1.msra.mxu0 0.0
    %1372 = vmatprep.subr.mxu0 0.0
    %1373 = vmatpush1.msra.mxu0 0.0
    %1374 = vmatprep.subr.mxu0 0.0
    %1375 = vmatpush1.msra.mxu0 0.0
    %1376 = vmatprep.subr.mxu0 0.0
    %1377 = vmatpush1.msra.mxu0 0.0
    %1378 = vmatprep.subr.mxu0 0.0
    %1379 = vmatpush1.msra.mxu0 0.0
    %1380 = vmatprep.subr.mxu0 0.0
    %1381 = vmatpush1.msra.mxu0 0.0
    %1382 = vmatprep.subr.mxu0 0.0
    %1383 = vmatpush1.msra.mxu0 0.0
    %1384 = vmatprep.subr.mxu0 0.0
    %1385 = vmatpush1.msra.mxu0 0.0
    %1386 = vmatprep.subr.mxu0 0.0
    %1387 = vmatpush1.msra.mxu0 0.0
    %1388 = vmatprep.subr.mxu0 0.0
    %1389 = vmatpush1.msra.mxu0 0.0
    %1390 = vmatprep.subr.mxu0 0.0
    %1391 = vmatpush1.msra.mxu0 0.0
    %1392 = vmatprep.subr.mxu0 0.0
    %1393 = vmatpush1.msra.mxu0 0.0
    %1394 = vmatprep.subr.mxu0 0.0
    %1395 = vmatpush1.msra.mxu0 0.0
    %1396 = vmatprep.subr.mxu0 0.0
    %1397 = vmatpush1.msra.mxu0 0.0
    %1398 = vmatprep.subr.mxu0 0.0
    %1399 = vmatpush1.msra.mxu0 0.0
    %1400 = vmatprep.subr.mxu0 0.0
    %1401 = vmatpush1.msra.mxu0 0.0
    %1402 = vmatprep.subr.mxu0 0.0
    %1403 = vmatpush1.msra.mxu0 0.0
    %1404 = vmatprep.subr.mxu0 0.0
    %1405 = vmatpush1.msra.mxu0 0.0
    %1406 = vmatprep.subr.mxu0 0.0
    %1407 = vmatpush1.msra.mxu0 0.0
    %1408 = vmatprep.subr.mxu0 0.0
    %1409 = vmatpush1.msra.mxu0 0.0
    %1410 = vmatprep.subr.mxu0 0.0
    %1411 = vmatpush1.msra.mxu0 0.0
    %1412 = vmatprep.subr.mxu0 0.0
    %1413 = vmatpush1.msra.mxu0 0.0
    %1414 = vmatprep.subr.mxu0 0.0
    %1415 = vmatpush1.msra.mxu0 0.0
    %1416 = vmatprep.subr.mxu0 0.0
    %1417 = vmatpush1.msra.mxu0 0.0
    %1418 = vmatprep.subr.mxu0 0.0
    %1419 = vmatpush1.msra.mxu0 0.0
    %1420 = vmatprep.subr.mxu0 0.0
    %1421 = vmatpush1.msra.mxu0 0.0
    %1422 = vmatprep.subr.mxu0 0.0
    %1423 = vmatpush1.msra.mxu0 0.0
    %1424 = vmatprep.subr.mxu0 0.0
    %1425 = vmatpush1.msra.mxu0 0.0
    %1426 = vmatprep.mubr.f32.mxu0 0.0
    %1427 = vmatmul.mubr.f32.gmra.mrb[0].mxu0 %v1360
    %v1428 = vpop.f32.mrb[0].mxu0
    %v1429 = vadd.f32 0.0, %v1428
    %v1430 = vpop.f32.mrb[0].mxu0
    %1431 = vdwg.mxu0
    %1432 = vrot.lane.b32.xlu0 %v202, 64
    %v1433 = vpop.permute.xlu0 %1432
    %v1436 = vsel %vm205, %v875, 0
    %1438 = vmatprep.subr.mxu0 0.0
    %1439 = vmatpush1.msra.mxu0 %v1433
    %1440 = vmatprep.subr.mxu0 0.0
    %1441 = vmatpush1.msra.mxu0 0.0
    %1442 = vmatprep.subr.mxu0 0.0
    %1443 = vmatpush1.msra.mxu0 0.0
    %1444 = vmatprep.subr.mxu0 0.0
    %1445 = vmatpush1.msra.mxu0 0.0
    %1446 = vmatprep.subr.mxu0 0.0
    %1447 = vmatpush1.msra.mxu0 0.0
    %1448 = vmatprep.subr.mxu0 0.0
    %1449 = vmatpush1.msra.mxu0 0.0
    %1450 = vmatprep.subr.mxu0 0.0
    %1451 = vmatpush1.msra.mxu0 0.0
    %1452 = vmatprep.subr.mxu0 0.0
    %1453 = vmatpush1.msra.mxu0 0.0
    %1454 = vmatprep.subr.mxu0 0.0
    %1455 = vmatpush1.msra.mxu0 0.0
    %1456 = vmatprep.subr.mxu0 0.0
    %1457 = vmatpush1.msra.mxu0 0.0
    %1458 = vmatprep.subr.mxu0 0.0
    %1459 = vmatpush1.msra.mxu0 0.0
    %1460 = vmatprep.subr.mxu0 0.0
    %1461 = vmatpush1.msra.mxu0 0.0
    %1462 = vmatprep.subr.mxu0 0.0
    %1463 = vmatpush1.msra.mxu0 0.0
    %1464 = vmatprep.subr.mxu0 0.0
    %1465 = vmatpush1.msra.mxu0 0.0
    %1466 = vmatprep.subr.mxu0 0.0
    %1467 = vmatpush1.msra.mxu0 0.0
    %1468 = vmatprep.subr.mxu0 0.0
    %1469 = vmatpush1.msra.mxu0 0.0
    %1470 = vmatprep.subr.mxu0 0.0
    %1471 = vmatpush1.msra.mxu0 0.0
    %1472 = vmatprep.subr.mxu0 0.0
    %1473 = vmatpush1.msra.mxu0 0.0
    %1474 = vmatprep.subr.mxu0 0.0
    %1475 = vmatpush1.msra.mxu0 0.0
    %1476 = vmatprep.subr.mxu0 0.0
    %1477 = vmatpush1.msra.mxu0 0.0
    %1478 = vmatprep.subr.mxu0 0.0
    %1479 = vmatpush1.msra.mxu0 0.0
    %1480 = vmatprep.subr.mxu0 0.0
    %1481 = vmatpush1.msra.mxu0 0.0
    %1482 = vmatprep.subr.mxu0 0.0
    %1483 = vmatpush1.msra.mxu0 0.0
    %1484 = vmatprep.subr.mxu0 0.0
    %1485 = vmatpush1.msra.mxu0 0.0
    %1486 = vmatprep.subr.mxu0 0.0
    %1487 = vmatpush1.msra.mxu0 0.0
    %1488 = vmatprep.subr.mxu0 0.0
    %1489 = vmatpush1.msra.mxu0 0.0
    %1490 = vmatprep.subr.mxu0 0.0
    %1491 = vmatpush1.msra.mxu0 0.0
    %1492 = vmatprep.subr.mxu0 0.0
    %1493 = vmatpush1.msra.mxu0 0.0
    %1494 = vmatprep.subr.mxu0 0.0
    %1495 = vmatpush1.msra.mxu0 0.0
    %1496 = vmatprep.subr.mxu0 0.0
    %1497 = vmatpush1.msra.mxu0 0.0
    %1498 = vmatprep.subr.mxu0 0.0
    %1499 = vmatpush1.msra.mxu0 0.0
    %1500 = vmatprep.subr.mxu0 0.0
    %1501 = vmatpush1.msra.mxu0 0.0
    %1502 = vmatprep.mubr.f32.mxu0 0.0
    %1503 = vmatmul.mubr.f32.gmra.mrb[0].mxu0 %v1436
    %v1504 = vpop.f32.mrb[0].mxu0
    %v1505 = vadd.f32 0.0, %v1504
    %v1506 = vpop.f32.mrb[0].mxu0
    %1507 = vdwg.mxu0
    %v1508 = vrcp.pop %v878
    %v1509 = vmul.f32 %v973, %v1508
    %v1510 = vrcp.pop %v881
    %v1511 = vmul.f32 %v1049, %v1510
    %v1512 = vrcp.pop %v884
    %v1513 = vmul.f32 %v1125, %v1512
    %v1514 = vrcp.pop %v887
    %v1515 = vmul.f32 %v1201, %v1514
    %v1516 = vrcp.pop %v890
    %v1517 = vmul.f32 %v1277, %v1516
    %v1518 = vrcp.pop %v893
    %v1519 = vmul.f32 %v1353, %v1518
    %v1520 = vrcp.pop %v896
    %v1521 = vmul.f32 %v1429, %v1520
    %v1522 = vrcp.pop %v899
    %v1523 = vmul.f32 %v1505, %v1522
    %1526 = vrot.lane.b32.xlu0 %v1513, 8
    %v1527 = vpop.permute.xlu0 %1526
    %1528 = vrot.lane.b32.xlu0 %v1515, 8
    %v1529 = vpop.permute.xlu0 %1528
    %1534 = vrot.lane.b32.xlu0 %v1517, 16
    %v1535 = vpop.permute.xlu0 %1534
    %1536 = vrot.lane.b32.xlu0 %v1519, 16
    %v1537 = vpop.permute.xlu0 %1536
    %1542 = vrot.lane.b32.xlu0 %v1521, 24
    %v1543 = vpop.permute.xlu0 %1542
    %1544 = vrot.lane.b32.xlu0 %v1523, 24
    %v1545 = vpop.permute.xlu0 %1544
    %v1548 = vsel %vm205, %v1509, %v1527
    %v1549 = vsel %vm205, %v1511, %v1529
    %vm1550 = vcmask 130048
    %v1551 = vsel %vm1550, %v1548, %v1535
    %v1552 = vsel %vm1550, %v1549, %v1537
    %vm1553 = vcmask 195584
    %v1554 = vsel %vm1553, %v1551, %v1543
    %v1555 = vsel %vm1553, %v1552, %v1545
    %v1556 = vlaneseq
    %v1557 = vshrl.u32 %v1556, 7
    %v1558 = vsub.s32 0, %v1557
    %v1559 = vrot.slane %v96, %v1558
    %v1561 = vsel %vm107, %v1554, 0
    %v1564 = vsel %vm107, %v1555, 0
    %1566 = vmatprep.subr.mxu0 0.0
    %1567 = vmatpush1.msra.mxu0 %v79
    %1568 = vmatprep.subr.mxu0 0.0
    %1569 = vmatpush1.msra.mxu0 %v80
    %1570 = vmatprep.subr.mxu0 0.0
    %1571 = vmatpush1.msra.mxu0 %v81
    %1572 = vmatprep.subr.mxu0 0.0
    %1573 = vmatpush1.msra.mxu0 %v82
    %1574 = vmatprep.subr.mxu0 0.0
    %1575 = vmatpush1.msra.mxu0 0.0
    %1576 = vmatprep.subr.mxu0 0.0
    %1577 = vmatpush1.msra.mxu0 0.0
    %1578 = vmatprep.subr.mxu0 0.0
    %1579 = vmatpush1.msra.mxu0 0.0
    %1580 = vmatprep.subr.mxu0 0.0
    %1581 = vmatpush1.msra.mxu0 0.0
    %1582 = vmatprep.subr.mxu0 0.0
    %1583 = vmatpush1.msra.mxu0 0.0
    %1584 = vmatprep.subr.mxu0 0.0
    %1585 = vmatpush1.msra.mxu0 0.0
    %1586 = vmatprep.subr.mxu0 0.0
    %1587 = vmatpush1.msra.mxu0 0.0
    %1588 = vmatprep.subr.mxu0 0.0
    %1589 = vmatpush1.msra.mxu0 0.0
    %1590 = vmatprep.subr.mxu0 0.0
    %1591 = vmatpush1.msra.mxu0 0.0
    %1592 = vmatprep.subr.mxu0 0.0
    %1593 = vmatpush1.msra.mxu0 0.0
    %1594 = vmatprep.subr.mxu0 0.0
    %1595 = vmatpush1.msra.mxu0 0.0
    %1596 = vmatprep.subr.mxu0 0.0
    %1597 = vmatpush1.msra.mxu0 0.0
    %1598 = vmatprep.subr.mxu0 0.0
    %1599 = vmatpush1.msra.mxu0 0.0
    %1600 = vmatprep.subr.mxu0 0.0
    %1601 = vmatpush1.msra.mxu0 0.0
    %1602 = vmatprep.subr.mxu0 0.0
    %1603 = vmatpush1.msra.mxu0 0.0
    %1604 = vmatprep.subr.mxu0 0.0
    %1605 = vmatpush1.msra.mxu0 0.0
    %1606 = vmatprep.subr.mxu0 0.0
    %1607 = vmatpush1.msra.mxu0 0.0
    %1608 = vmatprep.subr.mxu0 0.0
    %1609 = vmatpush1.msra.mxu0 0.0
    %1610 = vmatprep.subr.mxu0 0.0
    %1611 = vmatpush1.msra.mxu0 0.0
    %1612 = vmatprep.subr.mxu0 0.0
    %1613 = vmatpush1.msra.mxu0 0.0
    %1614 = vmatprep.subr.mxu0 0.0
    %1615 = vmatpush1.msra.mxu0 0.0
    %1616 = vmatprep.subr.mxu0 0.0
    %1617 = vmatpush1.msra.mxu0 0.0
    %1618 = vmatprep.subr.mxu0 0.0
    %1619 = vmatpush1.msra.mxu0 0.0
    %1620 = vmatprep.subr.mxu0 0.0
    %1621 = vmatpush1.msra.mxu0 0.0
    %1622 = vmatprep.subr.mxu0 0.0
    %1623 = vmatpush1.msra.mxu0 0.0
    %1624 = vmatprep.subr.mxu0 0.0
    %1625 = vmatpush1.msra.mxu0 0.0
    %1626 = vmatprep.subr.mxu0 0.0
    %1627 = vmatpush1.msra.mxu0 0.0
    %1628 = vmatprep.subr.mxu0 0.0
    %1629 = vmatpush1.msra.mxu0 0.0
    %1630 = vmatprep.mubr.f32.mxu0 0.0
    %1631 = vmatmul.mubr.f32.gmra.mrb[0].mxu0 %v1561
    %v1632 = vpop.f32.mrb[0].mxu0
    %v1633 = vadd.f32 %v1559, %v1632
    %v1634 = vpop.f32.mrb[0].mxu0
    %1635 = vmatprep.mubr.f32.mxu0 0.0
    %1636 = vmatmul.mubr.f32.gmra.mrb[0].mxu0 %v1564
    %v1637 = vpop.f32.mrb[0].mxu0
    %v1638 = vadd.f32 %v1559, %v1637
    %v1639 = vpop.f32.mrb[0].mxu0
    %1640 = vdwg.mxu0
    %v1641 = vadd.f32 %v1633, %v59
    %v1642 = vadd.f32 %v1638, %v60
    %v1643 = vsel %vm107, %v1641, 0.0
    %1644 = vadd.xlane.f32.xlu0 %v1643
    %v1645 = vpop.xlane.xlu0 %1644
    %v1646 = vsel %vm107, %v1642, 0.0
    %1647 = vadd.xlane.f32.xlu0 %v1646
    %v1648 = vpop.xlane.xlu0 %1647
    %v1649 = vrcp.pop 32.0
    %v1650 = vmul.f32 %v1645, %v1649
    %v1651 = vmul.f32 %v1648, %v1649
    %v1652 = vsub.f32 %v1641, %v1650
    %v1653 = vsub.f32 %v1642, %v1651
    %v1654 = vmul.f32 %v1652, %v1652
    %v1655 = vmul.f32 %v1653, %v1653
    %v1656 = vsel %vm107, %v1654, 0.0
    %1657 = vadd.xlane.f32.xlu0 %v1656
    %v1658 = vpop.xlane.xlu0 %1657
    %v1659 = vsel %vm107, %v1655, 0.0
    %1660 = vadd.xlane.f32.xlu0 %v1659
    %v1661 = vpop.xlane.xlu0 %1660
    %v1662 = vmul.f32 %v1658, %v1649
    %v1663 = vmul.f32 %v1661, %v1649
    %v1664 = vadd.f32 %v1662, 1e-12
    %v1665 = vadd.f32 %v1663, 1e-12
    %v1666 = vrsqrt.pop %v1664
    %v1667 = vrsqrt.pop %v1665
    %v1668 = vmul.f32 %v1652, %v1666
    %v1669 = vmul.f32 %v1653, %v1667
    %v1670 = vlaneseq
    %v1671 = vshrl.u32 %v1670, 7
    %v1672 = vsub.s32 0, %v1671
    %v1673 = vrot.slane %v97, %v1672
    %v1674 = vmul.f32 %v1668, %v1673
    %v1675 = vmul.f32 %v1669, %v1673
    %v1676 = vlaneseq
    %v1677 = vshrl.u32 %v1676, 7
    %v1678 = vsub.s32 0, %v1677
    %v1679 = vrot.slane %v98, %v1678
    %v1680 = vadd.f32 %v1674, %v1679
    %v1681 = vadd.f32 %v1675, %v1679
    %v1682 = vlaneseq
    %v1683 = vshrl.u32 %v1682, 7
    %v1684 = vsub.s32 0, %v1683
    %v1685 = vrot.slane %v99, %v1684
    %v1687 = vsel %vm107, %v1680, 0
    %v1690 = vsel %vm107, %v1681, 0
    %1692 = vmatprep.subr.mxu0 0.0
    %1693 = vmatpush1.msra.mxu0 %v83
    %1694 = vmatprep.subr.mxu0 0.0
    %1695 = vmatpush1.msra.mxu0 %v84
    %1696 = vmatprep.subr.mxu0 0.0
    %1697 = vmatpush1.msra.mxu0 %v85
    %1698 = vmatprep.subr.mxu0 0.0
    %1699 = vmatpush1.msra.mxu0 %v86
    %1700 = vmatprep.subr.mxu0 0.0
    %1701 = vmatpush1.msra.mxu0 0.0
    %1702 = vmatprep.subr.mxu0 0.0
    %1703 = vmatpush1.msra.mxu0 0.0
    %1704 = vmatprep.subr.mxu0 0.0
    %1705 = vmatpush1.msra.mxu0 0.0
    %1706 = vmatprep.subr.mxu0 0.0
    %1707 = vmatpush1.msra.mxu0 0.0
    %1708 = vmatprep.subr.mxu0 0.0
    %1709 = vmatpush1.msra.mxu0 0.0
    %1710 = vmatprep.subr.mxu0 0.0
    %1711 = vmatpush1.msra.mxu0 0.0
    %1712 = vmatprep.subr.mxu0 0.0
    %1713 = vmatpush1.msra.mxu0 0.0
    %1714 = vmatprep.subr.mxu0 0.0
    %1715 = vmatpush1.msra.mxu0 0.0
    %1716 = vmatprep.subr.mxu0 0.0
    %1717 = vmatpush1.msra.mxu0 0.0
    %1718 = vmatprep.subr.mxu0 0.0
    %1719 = vmatpush1.msra.mxu0 0.0
    %1720 = vmatprep.subr.mxu0 0.0
    %1721 = vmatpush1.msra.mxu0 0.0
    %1722 = vmatprep.subr.mxu0 0.0
    %1723 = vmatpush1.msra.mxu0 0.0
    %1724 = vmatprep.subr.mxu0 0.0
    %1725 = vmatpush1.msra.mxu0 0.0
    %1726 = vmatprep.subr.mxu0 0.0
    %1727 = vmatpush1.msra.mxu0 0.0
    %1728 = vmatprep.subr.mxu0 0.0
    %1729 = vmatpush1.msra.mxu0 0.0
    %1730 = vmatprep.subr.mxu0 0.0
    %1731 = vmatpush1.msra.mxu0 0.0
    %1732 = vmatprep.subr.mxu0 0.0
    %1733 = vmatpush1.msra.mxu0 0.0
    %1734 = vmatprep.subr.mxu0 0.0
    %1735 = vmatpush1.msra.mxu0 0.0
    %1736 = vmatprep.subr.mxu0 0.0
    %1737 = vmatpush1.msra.mxu0 0.0
    %1738 = vmatprep.subr.mxu0 0.0
    %1739 = vmatpush1.msra.mxu0 0.0
    %1740 = vmatprep.subr.mxu0 0.0
    %1741 = vmatpush1.msra.mxu0 0.0
    %1742 = vmatprep.subr.mxu0 0.0
    %1743 = vmatpush1.msra.mxu0 0.0
    %1744 = vmatprep.subr.mxu0 0.0
    %1745 = vmatpush1.msra.mxu0 0.0
    %1746 = vmatprep.subr.mxu0 0.0
    %1747 = vmatpush1.msra.mxu0 0.0
    %1748 = vmatprep.subr.mxu0 0.0
    %1749 = vmatpush1.msra.mxu0 0.0
    %1750 = vmatprep.subr.mxu0 0.0
    %1751 = vmatpush1.msra.mxu0 0.0
    %1752 = vmatprep.subr.mxu0 0.0
    %1753 = vmatpush1.msra.mxu0 0.0
    %1754 = vmatprep.subr.mxu0 0.0
    %1755 = vmatpush1.msra.mxu0 0.0
    %1756 = vmatprep.mubr.f32.mxu0 0.0
    %1757 = vmatmul.mubr.f32.gmra.mrb[0].mxu0 %v1687
    %v1758 = vpop.f32.mrb[0].mxu0
    %v1759 = vadd.f32 %v1685, %v1758
    %v1760 = vpop.f32.mrb[0].mxu0
    %1761 = vmatprep.mubr.f32.mxu0 0.0
    %1762 = vmatmul.mubr.f32.gmra.mrb[0].mxu0 %v1690
    %v1763 = vpop.f32.mrb[0].mxu0
    %v1764 = vadd.f32 %v1685, %v1763
    %v1765 = vpop.f32.mrb[0].mxu0
    %1766 = vdwg.mxu0
    %v1767 = vmul.f32 %v1759, 0.5
    %v1768 = vmul.f32 %v1764, 0.5
    %v1769 = vmul.f32 %v1759, 0.044715
    %v1770 = vmul.f32 %v1764, 0.044715
    %v1771 = vmul.f32 %v1769, %v1759
    %v1772 = vmul.f32 %v1770, %v1764
    %v1773 = vmul.f32 %v1771, %v1759
    %v1774 = vmul.f32 %v1772, %v1764
    %v1775 = vadd.f32 %v1759, %v1773
    %v1776 = vadd.f32 %v1764, %v1774
    %v1777 = vmul.f32 %v1775, 0.7978846
    %v1778 = vmul.f32 %v1776, 0.7978846
    %v1779 = vtanh.pop %v1777
    %v1780 = vtanh.pop %v1778
    %v1781 = vadd.f32 %v1779, 1.0
    %v1782 = vadd.f32 %v1780, 1.0
    %v1783 = vmul.f32 %v1767, %v1781
    %v1784 = vmul.f32 %v1768, %v1782
    %v1785 = vlaneseq
    %v1786 = vshrl.u32 %v1785, 7
    %v1787 = vsub.s32 0, %v1786
    %v1788 = vrot.slane %v100, %v1787
    %vm1789 = vcmask 523264
    %v1791 = vsel %vm1789, %v1783, 0
    %v1794 = vsel %vm1789, %v1784, 0
    %1796 = vmatprep.subr.mxu0 0.0
    %1797 = vmatpush1.msra.mxu0 %v87
    %1798 = vmatprep.subr.mxu0 0.0
    %1799 = vmatpush1.msra.mxu0 %v88
    %1800 = vmatprep.subr.mxu0 0.0
    %1801 = vmatpush1.msra.mxu0 %v89
    %1802 = vmatprep.subr.mxu0 0.0
    %1803 = vmatpush1.msra.mxu0 %v90
    %1804 = vmatprep.subr.mxu0 0.0
    %1805 = vmatpush1.msra.mxu0 %v91
    %1806 = vmatprep.subr.mxu0 0.0
    %1807 = vmatpush1.msra.mxu0 %v92
    %1808 = vmatprep.subr.mxu0 0.0
    %1809 = vmatpush1.msra.mxu0 %v93
    %1810 = vmatprep.subr.mxu0 0.0
    %1811 = vmatpush1.msra.mxu0 %v94
    %1812 = vmatprep.subr.mxu0 0.0
    %1813 = vmatpush1.msra.mxu0 0.0
    %1814 = vmatprep.subr.mxu0 0.0
    %1815 = vmatpush1.msra.mxu0 0.0
    %1816 = vmatprep.subr.mxu0 0.0
    %1817 = vmatpush1.msra.mxu0 0.0
    %1818 = vmatprep.subr.mxu0 0.0
    %1819 = vmatpush1.msra.mxu0 0.0
    %1820 = vmatprep.subr.mxu0 0.0
    %1821 = vmatpush1.msra.mxu0 0.0
    %1822 = vmatprep.subr.mxu0 0.0
    %1823 = vmatpush1.msra.mxu0 0.0
    %1824 = vmatprep.subr.mxu0 0.0
    %1825 = vmatpush1.msra.mxu0 0.0
    %1826 = vmatprep.subr.mxu0 0.0
    %1827 = vmatpush1.msra.mxu0 0.0
    %1828 = vmatprep.subr.mxu0 0.0
    %1829 = vmatpush1.msra.mxu0 0.0
    %1830 = vmatprep.subr.mxu0 0.0
    %1831 = vmatpush1.msra.mxu0 0.0
    %1832 = vmatprep.subr.mxu0 0.0
    %1833 = vmatpush1.msra.mxu0 0.0
    %1834 = vmatprep.subr.mxu0 0.0
    %1835 = vmatpush1.msra.mxu0 0.0
    %1836 = vmatprep.subr.mxu0 0.0
    %1837 = vmatpush1.msra.mxu0 0.0
    %1838 = vmatprep.subr.mxu0 0.0
    %1839 = vmatpush1.msra.mxu0 0.0
    %1840 = vmatprep.subr.mxu0 0.0
    %1841 = vmatpush1.msra.mxu0 0.0
    %1842 = vmatprep.subr.mxu0 0.0
    %1843 = vmatpush1.msra.mxu0 0.0
    %1844 = vmatprep.subr.mxu0 0.0
    %1845 = vmatpush1.msra.mxu0 0.0
    %1846 = vmatprep.subr.mxu0 0.0
    %1847 = vmatpush1.msra.mxu0 0.0
    %1848 = vmatprep.subr.mxu0 0.0
    %1849 = vmatpush1.msra.mxu0 0.0
    %1850 = vmatprep.subr.mxu0 0.0
    %1851 = vmatpush1.msra.mxu0 0.0
    %1852 = vmatprep.subr.mxu0 0.0
    %1853 = vmatpush1.msra.mxu0 0.0
    %1854 = vmatprep.subr.mxu0 0.0
    %1855 = vmatpush1.msra.mxu0 0.0
    %1856 = vmatprep.subr.mxu0 0.0
    %1857 = vmatpush1.msra.mxu0 0.0
    %1858 = vmatprep.subr.mxu0 0.0
    %1859 = vmatpush1.msra.mxu0 0.0
    %1860 = vmatprep.mubr.f32.mxu0 0.0
    %1861 = vmatmul.mubr.f32.gmra.mrb[0].mxu0 %v1791
    %v1862 = vpop.f32.mrb[0].mxu0
    %v1863 = vadd.f32 %v1788, %v1862
    %v1864 = vpop.f32.mrb[0].mxu0
    %1865 = vmatprep.mubr.f32.mxu0 0.0
    %1866 = vmatmul.mubr.f32.gmra.mrb[0].mxu0 %v1794
    %v1867 = vpop.f32.mrb[0].mxu0
    %v1868 = vadd.f32 %v1788, %v1867
    %v1869 = vpop.f32.mrb[0].mxu0
    %1870 = vdwg.mxu0
    %v1871 = vadd.f32 %v1863, %v1680
    %v1872 = vadd.f32 %v1868, %v1681
    %v1873 = vsel %vm107, %v1871, 0.0
    %1874 = vadd.xlane.f32.xlu0 %v1873
    %v1875 = vpop.xlane.xlu0 %1874
    %v1876 = vsel %vm107, %v1872, 0.0
    %1877 = vadd.xlane.f32.xlu0 %v1876
    %v1878 = vpop.xlane.xlu0 %1877
    %v1879 = vmul.f32 %v1875, %v1649
    %v1880 = vmul.f32 %v1878, %v1649
    %v1881 = vsub.f32 %v1871, %v1879
    %v1882 = vsub.f32 %v1872, %v1880
    %v1883 = vmul.f32 %v1881, %v1881
    %v1884 = vmul.f32 %v1882, %v1882
    %v1885 = vsel %vm107, %v1883, 0.0
    %1886 = vadd.xlane.f32.xlu0 %v1885
    %v1887 = vpop.xlane.xlu0 %1886
    %v1888 = vsel %vm107, %v1884, 0.0
    %1889 = vadd.xlane.f32.xlu0 %v1888
    %v1890 = vpop.xlane.xlu0 %1889
    %v1891 = vmul.f32 %v1887, %v1649
    %v1892 = vmul.f32 %v1890, %v1649
    %v1893 = vadd.f32 %v1891, 1e-12
    %v1894 = vadd.f32 %v1892, 1e-12
    %v1895 = vrsqrt.pop %v1893
    %v1896 = vrsqrt.pop %v1894
    %v1897 = vmul.f32 %v1881, %v1895
    %v1898 = vmul.f32 %v1882, %v1896
    %v1899 = vlaneseq
    %v1900 = vshrl.u32 %v1899, 7
    %v1901 = vsub.s32 0, %v1900
    %v1902 = vrot.slane %v101, %v1901
    %v1903 = vmul.f32 %v1897, %v1902
    %v1904 = vmul.f32 %v1898, %v1902
    %v1905 = vlaneseq
    %v1906 = vshrl.u32 %v1905, 7
    %v1907 = vsub.s32 0, %v1906
    %v1908 = vrot.slane %v102, %v1907
    %v1909 = vadd.f32 %v1903, %v1908
    %v1910 = vadd.f32 %v1904, %v1908
    %v1911 = vld [vmem:[#allocation5 + $0xa0] sm:$0xff]
    %v1912 = vld [vmem:[#allocation5 + $0xa8] sm:$0xff]
    %v1913 = vld [vmem:[#allocation5 + $0xb0] sm:$0xff]
    %v1914 = vld [vmem:[#allocation5 + $0xb8] sm:$0xff]
    %v1915 = vld [vmem:[#allocation5 + $0xc0] sm:$0xff]
    %v1916 = vld [vmem:[#allocation5 + $0xc8] sm:$0xff]
    %v1917 = vld [vmem:[#allocation5 + $0xd0] sm:$0xff]
    %v1918 = vld [vmem:[#allocation5 + $0xd8] sm:$0xff]
    %v1919 = vld [vmem:[#allocation5 + $0xe0] sm:$0xff]
    %v1920 = vld [vmem:[#allocation5 + $0xe8] sm:$0xff]
    %v1921 = vld [vmem:[#allocation5 + $0xf0] sm:$0xff]
    %v1922 = vld [vmem:[#allocation5 + $0xf8] sm:$0xff]
    %v1923 = vld [vmem:[#allocation5 + $0x100] sm:$0xff]
    %v1924 = vld [vmem:[#allocation5 + $0x108] sm:$0xff]
    %v1925 = vld [vmem:[#allocation5 + $0x110] sm:$0xff]
    %v1926 = vld [vmem:[#allocation5 + $0x118] sm:$0xff]
    %v1927 = vld [vmem:[#allocation7 + $0x8] sm:$0x1]
    %v1928 = vld [vmem:[#allocation7 + $0x9] sm:$0x1]
    %v1929 = vld [vmem:[#allocation7 + $0xa] sm:$0x1]
    %v1930 = vld [vmem:[#allocation7 + $0xb] sm:$0x1]
    %v1931 = vld [vmem:[#allocation7 + $0xc] sm:$0x1]
    %v1932 = vld [vmem:[#allocation7 + $0xd] sm:$0x1]
    %v1933 = vld [vmem:[#allocation7 + $0xe] sm:$0x1]
    %v1934 = vld [vmem:[#allocation7 + $0xf] sm:$0x1]
    %v1935 = vlaneseq
    %v1936 = vshrl.u32 %v1935, 7
    %v1937 = vsub.s32 0, %v1936
    %v1938 = vrot.slane %v1927, %v1937
    %v1940 = vsel %vm107, %v1909, 0
    %v1943 = vsel %vm107, %v1910, 0
    %1945 = vmatprep.subr.mxu0 0.0
    %1946 = vmatpush1.msra.mxu0 %v1911
    %1947 = vmatprep.subr.mxu0 0.0
    %1948 = vmatpush1.msra.mxu0 %v1912
    %1949 = vmatprep.subr.mxu0 0.0
    %1950 = vmatpush1.msra.mxu0 %v1913
    %1951 = vmatprep.subr.mxu0 0.0
    %1952 = vmatpush1.msra.mxu0 %v1914
    %1953 = vmatprep.subr.mxu0 0.0
    %1954 = vmatpush1.msra.mxu0 0.0
    %1955 = vmatprep.subr.mxu0 0.0
    %1956 = vmatpush1.msra.mxu0 0.0
    %1957 = vmatprep.subr.mxu0 0.0
    %1958 = vmatpush1.msra.mxu0 0.0
    %1959 = vmatprep.subr.mxu0 0.0
    %1960 = vmatpush1.msra.mxu0 0.0
    %1961 = vmatprep.subr.mxu0 0.0
    %1962 = vmatpush1.msra.mxu0 0.0
    %1963 = vmatprep.subr.mxu0 0.0
    %1964 = vmatpush1.msra.mxu0 0.0
    %1965 = vmatprep.subr.mxu0 0.0
    %1966 = vmatpush1.msra.mxu0 0.0
    %1967 = vmatprep.subr.mxu0 0.0
    %1968 = vmatpush1.msra.mxu0 0.0
    %1969 = vmatprep.subr.mxu0 0.0
    %1970 = vmatpush1.msra.mxu0 0.0
    %1971 = vmatprep.subr.mxu0 0.0
    %1972 = vmatpush1.msra.mxu0 0.0
    %1973 = vmatprep.subr.mxu0 0.0
    %1974 = vmatpush1.msra.mxu0 0.0
    %1975 = vmatprep.subr.mxu0 0.0
    %1976 = vmatpush1.msra.mxu0 0.0
    %1977 = vmatprep.subr.mxu0 0.0
    %1978 = vmatpush1.msra.mxu0 0.0
    %1979 = vmatprep.subr.mxu0 0.0
    %1980 = vmatpush1.msra.mxu0 0.0
    %1981 = vmatprep.subr.mxu0 0.0
    %1982 = vmatpush1.msra.mxu0 0.0
    %1983 = vmatprep.subr.mxu0 0.0
    %1984 = vmatpush1.msra.mxu0 0.0
    %1985 = vmatprep.subr.mxu0 0.0
    %1986 = vmatpush1.msra.mxu0 0.0
    %1987 = vmatprep.subr.mxu0 0.0
    %1988 = vmatpush1.msra.mxu0 0.0
    %1989 = vmatprep.subr.mxu0 0.0
    %1990 = vmatpush1.msra.mxu0 0.0
    %1991 = vmatprep.subr.mxu0 0.0
    %1992 = vmatpush1.msra.mxu0 0.0
    %1993 = vmatprep.subr.mxu0 0.0
    %1994 = vmatpush1.msra.mxu0 0.0
    %1995 = vmatprep.subr.mxu0 0.0
    %1996 = vmatpush1.msra.mxu0 0.0
    %1997 = vmatprep.subr.mxu0 0.0
    %1998 = vmatpush1.msra.mxu0 0.0
    %1999 = vmatprep.subr.mxu0 0.0
    %2000 = vmatpush1.msra.mxu0 0.0
    %2001 = vmatprep.subr.mxu0 0.0
    %2002 = vmatpush1.msra.mxu0 0.0
    %2003 = vmatprep.subr.mxu0 0.0
    %2004 = vmatpush1.msra.mxu0 0.0
    %2005 = vmatprep.subr.mxu0 0.0
    %2006 = vmatpush1.msra.mxu0 0.0
    %2007 = vmatprep.subr.mxu0 0.0
    %2008 = vmatpush1.msra.mxu0 0.0
    %2009 = vmatprep.mubr.f32.mxu0 0.0
    %2010 = vmatmul.mubr.f32.gmra.mrb[0].mxu0 %v1940
    %v2011 = vpop.f32.mrb[0].mxu0
    %v2012 = vadd.f32 %v1938, %v2011
    %v2013 = vpop.f32.mrb[0].mxu0
    %2014 = vmatprep.mubr.f32.mxu0 0.0
    %2015 = vmatmul.mubr.f32.gmra.mrb[0].mxu0 %v1943
    %v2016 = vpop.f32.mrb[0].mxu0
    %v2017 = vadd.f32 %v1938, %v2016
    %v2018 = vpop.f32.mrb[0].mxu0
    %2019 = vdwg.mxu0
    %2022 = vrot.lane.b32.xlu0 %v2012, 124
    %v2023 = vpop.permute.xlu0 %2022
    %2024 = vrot.lane.b32.xlu0 %v2017, 124
    %v2025 = vpop.permute.xlu0 %2024
    %2026 = vrot.lane.b32.xlu0 %v2012, 120
    %v2027 = vpop.permute.xlu0 %2026
    %2028 = vrot.lane.b32.xlu0 %v2017, 120
    %v2029 = vpop.permute.xlu0 %2028
    %2030 = vrot.lane.b32.xlu0 %v2012, 116
    %v2031 = vpop.permute.xlu0 %2030
    %2032 = vrot.lane.b32.xlu0 %v2017, 116
    %v2033 = vpop.permute.xlu0 %2032
    %2034 = vrot.lane.b32.xlu0 %v2012, 112
    %v2035 = vpop.permute.xlu0 %2034
    %2036 = vrot.lane.b32.xlu0 %v2017, 112
    %v2037 = vpop.permute.xlu0 %2036
    %2038 = vrot.lane.b32.xlu0 %v2012, 104
    %v2039 = vpop.permute.xlu0 %2038
    %2040 = vrot.lane.b32.xlu0 %v2017, 104
    %v2041 = vpop.permute.xlu0 %2040
    %vm2042 = vcmask 31744
    %v2043 = vsel %vm2042, %v2012, 0
    %v2045 = vsel %vm2042, %v2035, 0
    %2047 = vmatprep.subr.mxu0 0.0
    %2048 = vmatpush1.xpose.msra.mxu0 %v2045
    %2049 = vmatprep.subr.mxu0 0.0
    %2050 = vmatpush1.xpose.msra.mxu0 0.0
    %2051 = vmatprep.subr.mxu0 0.0
    %2052 = vmatpush1.xpose.msra.mxu0 0.0
    %2053 = vmatprep.subr.mxu0 0.0
    %2054 = vmatpush1.xpose.msra.mxu0 0.0
    %2055 = vmatprep.subr.mxu0 0.0
    %2056 = vmatpush1.xpose.msra.mxu0 0.0
    %2057 = vmatprep.subr.mxu0 0.0
    %2058 = vmatpush1.xpose.msra.mxu0 0.0
    %2059 = vmatprep.subr.mxu0 0.0
    %2060 = vmatpush1.xpose.msra.mxu0 0.0
    %2061 = vmatprep.subr.mxu0 0.0
    %2062 = vmatpush1.xpose.msra.mxu0 0.0
    %2063 = vmatprep.subr.mxu0 0.0
    %2064 = vmatpush1.xpose.msra.mxu0 0.0
    %2065 = vmatprep.subr.mxu0 0.0
    %2066 = vmatpush1.xpose.msra.mxu0 0.0
    %2067 = vmatprep.subr.mxu0 0.0
    %2068 = vmatpush1.xpose.msra.mxu0 0.0
    %2069 = vmatprep.subr.mxu0 0.0
    %2070 = vmatpush1.xpose.msra.mxu0 0.0
    %2071 = vmatprep.subr.mxu0 0.0
    %2072 = vmatpush1.xpose.msra.mxu0 0.0
    %2073 = vmatprep.subr.mxu0 0.0
    %2074 = vmatpush1.xpose.msra.mxu0 0.0
    %2075 = vmatprep.subr.mxu0 0.0
    %2076 = vmatpush1.xpose.msra.mxu0 0.0
    %2077 = vmatprep.subr.mxu0 0.0
    %2078 = vmatpush1.xpose.msra.mxu0 0.0
    %2079 = vmatprep.subr.mxu0 0.0
    %2080 = vmatpush1.xpose.msra.mxu0 0.0
    %2081 = vmatprep.subr.mxu0 0.0
    %2082 = vmatpush1.xpose.msra.mxu0 0.0
    %2083 = vmatprep.subr.mxu0 0.0
    %2084 = vmatpush1.xpose.msra.mxu0 0.0
    %2085 = vmatprep.subr.mxu0 0.0
    %2086 = vmatpush1.xpose.msra.mxu0 0.0
    %2087 = vmatprep.subr.mxu0 0.0
    %2088 = vmatpush1.xpose.msra.mxu0 0.0
    %2089 = vmatprep.subr.mxu0 0.0
    %2090 = vmatpush1.xpose.msra.mxu0 0.0
    %2091 = vmatprep.subr.mxu0 0.0
    %2092 = vmatpush1.xpose.msra.mxu0 0.0
    %2093 = vmatprep.subr.mxu0 0.0
    %2094 = vmatpush1.xpose.msra.mxu0 0.0
    %2095 = vmatprep.subr.mxu0 0.0
    %2096 = vmatpush1.xpose.msra.mxu0 0.0
    %2097 = vmatprep.subr.mxu0 0.0
    %2098 = vmatpush1.xpose.msra.mxu0 0.0
    %2099 = vmatprep.subr.mxu0 0.0
    %2100 = vmatpush1.xpose.msra.mxu0 0.0
    %2101 = vmatprep.subr.mxu0 0.0
    %2102 = vmatpush1.xpose.msra.mxu0 0.0
    %2103 = vmatprep.subr.mxu0 0.0
    %2104 = vmatpush1.xpose.msra.mxu0 0.0
    %2105 = vmatprep.subr.mxu0 0.0
    %2106 = vmatpush1.xpose.msra.mxu0 0.0
    %2107 = vmatprep.subr.mxu0 0.0
    %2108 = vmatpush1.xpose.msra.mxu0 0.0
    %2109 = vmatprep.subr.mxu0 0.0
    %2110 = vmatpush1.xpose.msra.mxu0 0.0
    %2111 = vmatprep.mubr.f32.mxu0 0.0
    %2112 = vmatmul.mubr.f32.gmra.mrb[0].mxu0 %v2043
    %v2113 = vpop.f32.mrb[0].mxu0
    %v2114 = vadd.f32 0.0, %v2113
    %v2115 = vpop.f32.mrb[0].mxu0
    %2116 = vdwg.mxu0
    %v2117 = vsel %vm2042, %v2017, 0
    %v2119 = vsel %vm2042, %v2037, 0
    %2121 = vmatprep.subr.mxu0 0.0
    %2122 = vmatpush1.xpose.msra.mxu0 %v2119
    %2123 = vmatprep.subr.mxu0 0.0
    %2124 = vmatpush1.xpose.msra.mxu0 0.0
    %2125 = vmatprep.subr.mxu0 0.0
    %2126 = vmatpush1.xpose.msra.mxu0 0.0
    %2127 = vmatprep.subr.mxu0 0.0
    %2128 = vmatpush1.xpose.msra.mxu0 0.0
    %2129 = vmatprep.subr.mxu0 0.0
    %2130 = vmatpush1.xpose.msra.mxu0 0.0
    %2131 = vmatprep.subr.mxu0 0.0
    %2132 = vmatpush1.xpose.msra.mxu0 0.0
    %2133 = vmatprep.subr.mxu0 0.0
    %2134 = vmatpush1.xpose.msra.mxu0 0.0
    %2135 = vmatprep.subr.mxu0 0.0
    %2136 = vmatpush1.xpose.msra.mxu0 0.0
    %2137 = vmatprep.subr.mxu0 0.0
    %2138 = vmatpush1.xpose.msra.mxu0 0.0
    %2139 = vmatprep.subr.mxu0 0.0
    %2140 = vmatpush1.xpose.msra.mxu0 0.0
    %2141 = vmatprep.subr.mxu0 0.0
    %2142 = vmatpush1.xpose.msra.mxu0 0.0
    %2143 = vmatprep.subr.mxu0 0.0
    %2144 = vmatpush1.xpose.msra.mxu0 0.0
    %2145 = vmatprep.subr.mxu0 0.0
    %2146 = vmatpush1.xpose.msra.mxu0 0.0
    %2147 = vmatprep.subr.mxu0 0.0
    %2148 = vmatpush1.xpose.msra.mxu0 0.0
    %2149 = vmatprep.subr.mxu0 0.0
    %2150 = vmatpush1.xpose.msra.mxu0 0.0
    %2151 = vmatprep.subr.mxu0 0.0
    %2152 = vmatpush1.xpose.msra.mxu0 0.0
    %2153 = vmatprep.subr.mxu0 0.0
    %2154 = vmatpush1.xpose.msra.mxu0 0.0
    %2155 = vmatprep.subr.mxu0 0.0
    %2156 = vmatpush1.xpose.msra.mxu0 0.0
    %2157 = vmatprep.subr.mxu0 0.0
    %2158 = vmatpush1.xpose.msra.mxu0 0.0
    %2159 = vmatprep.subr.mxu0 0.0
    %2160 = vmatpush1.xpose.msra.mxu0 0.0
    %2161 = vmatprep.subr.mxu0 0.0
    %2162 = vmatpush1.xpose.msra.mxu0 0.0
    %2163 = vmatprep.subr.mxu0 0.0
    %2164 = vmatpush1.xpose.msra.mxu0 0.0
    %2165 = vmatprep.subr.mxu0 0.0
    %2166 = vmatpush1.xpose.msra.mxu0 0.0
    %2167 = vmatprep.subr.mxu0 0.0
    %2168 = vmatpush1.xpose.msra.mxu0 0.0
    %2169 = vmatprep.subr.mxu0 0.0
    %2170 = vmatpush1.xpose.msra.mxu0 0.0
    %2171 = vmatprep.subr.mxu0 0.0
    %2172 = vmatpush1.xpose.msra.mxu0 0.0
    %2173 = vmatprep.subr.mxu0 0.0
    %2174 = vmatpush1.xpose.msra.mxu0 0.0
    %2175 = vmatprep.subr.mxu0 0.0
    %2176 = vmatpush1.xpose.msra.mxu0 0.0
    %2177 = vmatprep.subr.mxu0 0.0
    %2178 = vmatpush1.xpose.msra.mxu0 0.0
    %2179 = vmatprep.subr.mxu0 0.0
    %2180 = vmatpush1.xpose.msra.mxu0 0.0
    %2181 = vmatprep.subr.mxu0 0.0
    %2182 = vmatpush1.xpose.msra.mxu0 0.0
    %2183 = vmatprep.subr.mxu0 0.0
    %2184 = vmatpush1.xpose.msra.mxu0 0.0
    %2185 = vmatprep.mubr.f32.mxu0 0.0
    %2186 = vmatmul.mubr.f32.gmra.mrb[0].mxu0 %v2117
    %v2187 = vpop.f32.mrb[0].mxu0
    %v2188 = vadd.f32 0.0, %v2187
    %v2189 = vpop.f32.mrb[0].mxu0
    %2190 = vdwg.mxu0
    %2191 = vrot.lane.b32.xlu0 %v2023, 112
    %v2192 = vpop.permute.xlu0 %2191
    %v2193 = vsel %vm2042, %v2023, 0
    %v2195 = vsel %vm2042, %v2192, 0
    %2197 = vmatprep.subr.mxu0 0.0
    %2198 = vmatpush1.xpose.msra.mxu0 %v2195
    %2199 = vmatprep.subr.mxu0 0.0
    %2200 = vmatpush1.xpose.msra.mxu0 0.0
    %2201 = vmatprep.subr.mxu0 0.0
    %2202 = vmatpush1.xpose.msra.mxu0 0.0
    %2203 = vmatprep.subr.mxu0 0.0
    %2204 = vmatpush1.xpose.msra.mxu0 0.0
    %2205 = vmatprep.subr.mxu0 0.0
    %2206 = vmatpush1.xpose.msra.mxu0 0.0
    %2207 = vmatprep.subr.mxu0 0.0
    %2208 = vmatpush1.xpose.msra.mxu0 0.0
    %2209 = vmatprep.subr.mxu0 0.0
    %2210 = vmatpush1.xpose.msra.mxu0 0.0
    %2211 = vmatprep.subr.mxu0 0.0
    %2212 = vmatpush1.xpose.msra.mxu0 0.0
    %2213 = vmatprep.subr.mxu0 0.0
    %2214 = vmatpush1.xpose.msra.mxu0 0.0
    %2215 = vmatprep.subr.mxu0 0.0
    %2216 = vmatpush1.xpose.msra.mxu0 0.0
    %2217 = vmatprep.subr.mxu0 0.0
    %2218 = vmatpush1.xpose.msra.mxu0 0.0
    %2219 = vmatprep.subr.mxu0 0.0
    %2220 = vmatpush1.xpose.msra.mxu0 0.0
    %2221 = vmatprep.subr.mxu0 0.0
    %2222 = vmatpush1.xpose.msra.mxu0 0.0
    %2223 = vmatprep.subr.mxu0 0.0
    %2224 = vmatpush1.xpose.msra.mxu0 0.0
    %2225 = vmatprep.subr.mxu0 0.0
    %2226 = vmatpush1.xpose.msra.mxu0 0.0
    %2227 = vmatprep.subr.mxu0 0.0
    %2228 = vmatpush1.xpose.msra.mxu0 0.0
    %2229 = vmatprep.subr.mxu0 0.0
    %2230 = vmatpush1.xpose.msra.mxu0 0.0
    %2231 = vmatprep.subr.mxu0 0.0
    %2232 = vmatpush1.xpose.msra.mxu0 0.0
    %2233 = vmatprep.subr.mxu0 0.0
    %2234 = vmatpush1.xpose.msra.mxu0 0.0
    %2235 = vmatprep.subr.mxu0 0.0
    %2236 = vmatpush1.xpose.msra.mxu0 0.0
    %2237 = vmatprep.subr.mxu0 0.0
    %2238 = vmatpush1.xpose.msra.mxu0 0.0
    %2239 = vmatprep.subr.mxu0 0.0
    %2240 = vmatpush1.xpose.msra.mxu0 0.0
    %2241 = vmatprep.subr.mxu0 0.0
    %2242 = vmatpush1.xpose.msra.mxu0 0.0
    %2243 = vmatprep.subr.mxu0 0.0
    %2244 = vmatpush1.xpose.msra.mxu0 0.0
    %2245 = vmatprep.subr.mxu0 0.0
    %2246 = vmatpush1.xpose.msra.mxu0 0.0
    %2247 = vmatprep.subr.mxu0 0.0
    %2248 = vmatpush1.xpose.msra.mxu0 0.0
    %2249 = vmatprep.subr.mxu0 0.0
    %2250 = vmatpush1.xpose.msra.mxu0 0.0
    %2251 = vmatprep.subr.mxu0 0.0
    %2252 = vmatpush1.xpose.msra.mxu0 0.0
    %2253 = vmatprep.subr.mxu0 0.0
    %2254 = vmatpush1.xpose.msra.mxu0 0.0
    %2255 = vmatprep.subr.mxu0 0.0
    %2256 = vmatpush1.xpose.msra.mxu0 0.0
    %2257 = vmatprep.subr.mxu0 0.0
    %2258 = vmatpush1.xpose.msra.mxu0 0.0
    %2259 = vmatprep.subr.mxu0 0.0
    %2260 = vmatpush1.xpose.msra.mxu0 0.0
    %2261 = vmatprep.mubr.f32.mxu0 0.0
    %2262 = vmatmul.mubr.f32.gmra.mrb[0].mxu0 %v2193
    %v2263 = vpop.f32.mrb[0].mxu0
    %v2264 = vadd.f32 0.0, %v2263
    %v2265 = vpop.f32.mrb[0].mxu0
    %2266 = vdwg.mxu0
    %2267 = vrot.lane.b32.xlu0 %v2025, 112
    %v2268 = vpop.permute.xlu0 %2267
    %v2269 = vsel %vm2042, %v2025, 0
    %v2271 = vsel %vm2042, %v2268, 0
    %2273 = vmatprep.subr.mxu0 0.0
    %2274 = vmatpush1.xpose.msra.mxu0 %v2271
    %2275 = vmatprep.subr.mxu0 0.0
    %2276 = vmatpush1.xpose.msra.mxu0 0.0
    %2277 = vmatprep.subr.mxu0 0.0
    %2278 = vmatpush1.xpose.msra.mxu0 0.0
    %2279 = vmatprep.subr.mxu0 0.0
    %2280 = vmatpush1.xpose.msra.mxu0 0.0
    %2281 = vmatprep.subr.mxu0 0.0
    %2282 = vmatpush1.xpose.msra.mxu0 0.0
    %2283 = vmatprep.subr.mxu0 0.0
    %2284 = vmatpush1.xpose.msra.mxu0 0.0
    %2285 = vmatprep.subr.mxu0 0.0
    %2286 = vmatpush1.xpose.msra.mxu0 0.0
    %2287 = vmatprep.subr.mxu0 0.0
    %2288 = vmatpush1.xpose.msra.mxu0 0.0
    %2289 = vmatprep.subr.mxu0 0.0
    %2290 = vmatpush1.xpose.msra.mxu0 0.0
    %2291 = vmatprep.subr.mxu0 0.0
    %2292 = vmatpush1.xpose.msra.mxu0 0.0
    %2293 = vmatprep.subr.mxu0 0.0
    %2294 = vmatpush1.xpose.msra.mxu0 0.0
    %2295 = vmatprep.subr.mxu0 0.0
    %2296 = vmatpush1.xpose.msra.mxu0 0.0
    %2297 = vmatprep.subr.mxu0 0.0
    %2298 = vmatpush1.xpose.msra.mxu0 0.0
    %2299 = vmatprep.subr.mxu0 0.0
    %2300 = vmatpush1.xpose.msra.mxu0 0.0
    %2301 = vmatprep.subr.mxu0 0.0
    %2302 = vmatpush1.xpose.msra.mxu0 0.0
    %2303 = vmatprep.subr.mxu0 0.0
    %2304 = vmatpush1.xpose.msra.mxu0 0.0
    %2305 = vmatprep.subr.mxu0 0.0
    %2306 = vmatpush1.xpose.msra.mxu0 0.0
    %2307 = vmatprep.subr.mxu0 0.0
    %2308 = vmatpush1.xpose.msra.mxu0 0.0
    %2309 = vmatprep.subr.mxu0 0.0
    %2310 = vmatpush1.xpose.msra.mxu0 0.0
    %2311 = vmatprep.subr.mxu0 0.0
    %2312 = vmatpush1.xpose.msra.mxu0 0.0
    %2313 = vmatprep.subr.mxu0 0.0
    %2314 = vmatpush1.xpose.msra.mxu0 0.0
    %2315 = vmatprep.subr.mxu0 0.0
    %2316 = vmatpush1.xpose.msra.mxu0 0.0
    %2317 = vmatprep.subr.mxu0 0.0
    %2318 = vmatpush1.xpose.msra.mxu0 0.0
    %2319 = vmatprep.subr.mxu0 0.0
    %2320 = vmatpush1.xpose.msra.mxu0 0.0
    %2321 = vmatprep.subr.mxu0 0.0
    %2322 = vmatpush1.xpose.msra.mxu0 0.0
    %2323 = vmatprep.subr.mxu0 0.0
    %2324 = vmatpush1.xpose.msra.mxu0 0.0
    %2325 = vmatprep.subr.mxu0 0.0
    %2326 = vmatpush1.xpose.msra.mxu0 0.0
    %2327 = vmatprep.subr.mxu0 0.0
    %2328 = vmatpush1.xpose.msra.mxu0 0.0
    %2329 = vmatprep.subr.mxu0 0.0
    %2330 = vmatpush1.xpose.msra.mxu0 0.0
    %2331 = vmatprep.subr.mxu0 0.0
    %2332 = vmatpush1.xpose.msra.mxu0 0.0
    %2333 = vmatprep.subr.mxu0 0.0
    %2334 = vmatpush1.xpose.msra.mxu0 0.0
    %2335 = vmatprep.subr.mxu0 0.0
    %2336 = vmatpush1.xpose.msra.mxu0 0.0
    %2337 = vmatprep.mubr.f32.mxu0 0.0
    %2338 = vmatmul.mubr.f32.gmra.mrb[0].mxu0 %v2269
    %v2339 = vpop.f32.mrb[0].mxu0
    %v2340 = vadd.f32 0.0, %v2339
    %v2341 = vpop.f32.mrb[0].mxu0
    %2342 = vdwg.mxu0
    %2343 = vrot.lane.b32.xlu0 %v2027, 112
    %v2344 = vpop.permute.xlu0 %2343
    %v2345 = vsel %vm2042, %v2027, 0
    %v2347 = vsel %vm2042, %v2344, 0
    %2349 = vmatprep.subr.mxu0 0.0
    %2350 = vmatpush1.xpose.msra.mxu0 %v2347
    %2351 = vmatprep.subr.mxu0 0.0
    %2352 = vmatpush1.xpose.msra.mxu0 0.0
    %2353 = vmatprep.subr.mxu0 0.0
    %2354 = vmatpush1.xpose.msra.mxu0 0.0
    %2355 = vmatprep.subr.mxu0 0.0
    %2356 = vmatpush1.xpose.msra.mxu0 0.0
    %2357 = vmatprep.subr.mxu0 0.0
    %2358 = vmatpush1.xpose.msra.mxu0 0.0
    %2359 = vmatprep.subr.mxu0 0.0
    %2360 = vmatpush1.xpose.msra.mxu0 0.0
    %2361 = vmatprep.subr.mxu0 0.0
    %2362 = vmatpush1.xpose.msra.mxu0 0.0
    %2363 = vmatprep.subr.mxu0 0.0
    %2364 = vmatpush1.xpose.msra.mxu0 0.0
    %2365 = vmatprep.subr.mxu0 0.0
    %2366 = vmatpush1.xpose.msra.mxu0 0.0
    %2367 = vmatprep.subr.mxu0 0.0
    %2368 = vmatpush1.xpose.msra.mxu0 0.0
    %2369 = vmatprep.subr.mxu0 0.0
    %2370 = vmatpush1.xpose.msra.mxu0 0.0
    %2371 = vmatprep.subr.mxu0 0.0
    %2372 = vmatpush1.xpose.msra.mxu0 0.0
    %2373 = vmatprep.subr.mxu0 0.0
    %2374 = vmatpush1.xpose.msra.mxu0 0.0
    %2375 = vmatprep.subr.mxu0 0.0
    %2376 = vmatpush1.xpose.msra.mxu0 0.0
    %2377 = vmatprep.subr.mxu0 0.0
    %2378 = vmatpush1.xpose.msra.mxu0 0.0
    %2379 = vmatprep.subr.mxu0 0.0
    %2380 = vmatpush1.xpose.msra.mxu0 0.0
    %2381 = vmatprep.subr.mxu0 0.0
    %2382 = vmatpush1.xpose.msra.mxu0 0.0
    %2383 = vmatprep.subr.mxu0 0.0
    %2384 = vmatpush1.xpose.msra.mxu0 0.0
    %2385 = vmatprep.subr.mxu0 0.0
    %2386 = vmatpush1.xpose.msra.mxu0 0.0
    %2387 = vmatprep.subr.mxu0 0.0
    %2388 = vmatpush1.xpose.msra.mxu0 0.0
    %2389 = vmatprep.subr.mxu0 0.0
    %2390 = vmatpush1.xpose.msra.mxu0 0.0
    %2391 = vmatprep.subr.mxu0 0.0
    %2392 = vmatpush1.xpose.msra.mxu0 0.0
    %2393 = vmatprep.subr.mxu0 0.0
    %2394 = vmatpush1.xpose.msra.mxu0 0.0
    %2395 = vmatprep.subr.mxu0 0.0
    %2396 = vmatpush1.xpose.msra.mxu0 0.0
    %2397 = vmatprep.subr.mxu0 0.0
    %2398 = vmatpush1.xpose.msra.mxu0 0.0
    %2399 = vmatprep.subr.mxu0 0.0
    %2400 = vmatpush1.xpose.msra.mxu0 0.0
    %2401 = vmatprep.subr.mxu0 0.0
    %2402 = vmatpush1.xpose.msra.mxu0 0.0
    %2403 = vmatprep.subr.mxu0 0.0
    %2404 = vmatpush1.xpose.msra.mxu0 0.0
    %2405 = vmatprep.subr.mxu0 0.0
    %2406 = vmatpush1.xpose.msra.mxu0 0.0
    %2407 = vmatprep.subr.mxu0 0.0
    %2408 = vmatpush1.xpose.msra.mxu0 0.0
    %2409 = vmatprep.subr.mxu0 0.0
    %2410 = vmatpush1.xpose.msra.mxu0 0.0
    %2411 = vmatprep.subr.mxu0 0.0
    %2412 = vmatpush1.xpose.msra.mxu0 0.0
    %2413 = vmatprep.mubr.f32.mxu0 0.0
    %2414 = vmatmul.mubr.f32.gmra.mrb[0].mxu0 %v2345
    %v2415 = vpop.f32.mrb[0].mxu0
    %v2416 = vadd.f32 0.0, %v2415
    %v2417 = vpop.f32.mrb[0].mxu0
    %2418 = vdwg.mxu0
    %2419 = vrot.lane.b32.xlu0 %v2029, 112
    %v2420 = vpop.permute.xlu0 %2419
    %v2421 = vsel %vm2042, %v2029, 0
    %v2423 = vsel %vm2042, %v2420, 0
    %2425 = vmatprep.subr.mxu0 0.0
    %2426 = vmatpush1.xpose.msra.mxu0 %v2423
    %2427 = vmatprep.subr.mxu0 0.0
    %2428 = vmatpush1.xpose.msra.mxu0 0.0
    %2429 = vmatprep.subr.mxu0 0.0
    %2430 = vmatpush1.xpose.msra.mxu0 0.0
    %2431 = vmatprep.subr.mxu0 0.0
    %2432 = vmatpush1.xpose.msra.mxu0 0.0
    %2433 = vmatprep.subr.mxu0 0.0
    %2434 = vmatpush1.xpose.msra.mxu0 0.0
    %2435 = vmatprep.subr.mxu0 0.0
    %2436 = vmatpush1.xpose.msra.mxu0 0.0
    %2437 = vmatprep.subr.mxu0 0.0
    %2438 = vmatpush1.xpose.msra.mxu0 0.0
    %2439 = vmatprep.subr.mxu0 0.0
    %2440 = vmatpush1.xpose.msra.mxu0 0.0
    %2441 = vmatprep.subr.mxu0 0.0
    %2442 = vmatpush1.xpose.msra.mxu0 0.0
    %2443 = vmatprep.subr.mxu0 0.0
    %2444 = vmatpush1.xpose.msra.mxu0 0.0
    %2445 = vmatprep.subr.mxu0 0.0
    %2446 = vmatpush1.xpose.msra.mxu0 0.0
    %2447 = vmatprep.subr.mxu0 0.0
    %2448 = vmatpush1.xpose.msra.mxu0 0.0
    %2449 = vmatprep.subr.mxu0 0.0
    %2450 = vmatpush1.xpose.msra.mxu0 0.0
    %2451 = vmatprep.subr.mxu0 0.0
    %2452 = vmatpush1.xpose.msra.mxu0 0.0
    %2453 = vmatprep.subr.mxu0 0.0
    %2454 = vmatpush1.xpose.msra.mxu0 0.0
    %2455 = vmatprep.subr.mxu0 0.0
    %2456 = vmatpush1.xpose.msra.mxu0 0.0
    %2457 = vmatprep.subr.mxu0 0.0
    %2458 = vmatpush1.xpose.msra.mxu0 0.0
    %2459 = vmatprep.subr.mxu0 0.0
    %2460 = vmatpush1.xpose.msra.mxu0 0.0
    %2461 = vmatprep.subr.mxu0 0.0
    %2462 = vmatpush1.xpose.msra.mxu0 0.0
    %2463 = vmatprep.subr.mxu0 0.0
    %2464 = vmatpush1.xpose.msra.mxu0 0.0
    %2465 = vmatprep.subr.mxu0 0.0
    %2466 = vmatpush1.xpose.msra.mxu0 0.0
    %2467 = vmatprep.subr.mxu0 0.0
    %2468 = vmatpush1.xpose.msra.mxu0 0.0
    %2469 = vmatprep.subr.mxu0 0.0
    %2470 = vmatpush1.xpose.msra.mxu0 0.0
    %2471 = vmatprep.subr.mxu0 0.0
    %2472 = vmatpush1.xpose.msra.mxu0 0.0
    %2473 = vmatprep.subr.mxu0 0.0
    %2474 = vmatpush1.xpose.msra.mxu0 0.0
    %2475 = vmatprep.subr.mxu0 0.0
    %2476 = vmatpush1.xpose.msra.mxu0 0.0
    %2477 = vmatprep.subr.mxu0 0.0
    %2478 = vmatpush1.xpose.msra.mxu0 0.0
    %2479 = vmatprep.subr.mxu0 0.0
    %2480 = vmatpush1.xpose.msra.mxu0 0.0
    %2481 = vmatprep.subr.mxu0 0.0
    %2482 = vmatpush1.xpose.msra.mxu0 0.0
    %2483 = vmatprep.subr.mxu0 0.0
    %2484 = vmatpush1.xpose.msra.mxu0 0.0
    %2485 = vmatprep.subr.mxu0 0.0
    %2486 = vmatpush1.xpose.msra.mxu0 0.0
    %2487 = vmatprep.subr.mxu0 0.0
    %2488 = vmatpush1.xpose.msra.mxu0 0.0
    %2489 = vmatprep.mubr.f32.mxu0 0.0
    %2490 = vmatmul.mubr.f32.gmra.mrb[0].mxu0 %v2421
    %v2491 = vpop.f32.mrb[0].mxu0
    %v2492 = vadd.f32 0.0, %v2491
    %v2493 = vpop.f32.mrb[0].mxu0
    %2494 = vdwg.mxu0
    %2495 = vrot.lane.b32.xlu0 %v2031, 112
    %v2496 = vpop.permute.xlu0 %2495
    %v2497 = vsel %vm2042, %v2031, 0
    %v2499 = vsel %vm2042, %v2496, 0
    %2501 = vmatprep.subr.mxu0 0.0
    %2502 = vmatpush1.xpose.msra.mxu0 %v2499
    %2503 = vmatprep.subr.mxu0 0.0
    %2504 = vmatpush1.xpose.msra.mxu0 0.0
    %2505 = vmatprep.subr.mxu0 0.0
    %2506 = vmatpush1.xpose.msra.mxu0 0.0
    %2507 = vmatprep.subr.mxu0 0.0
    %2508 = vmatpush1.xpose.msra.mxu0 0.0
    %2509 = vmatprep.subr.mxu0 0.0
    %2510 = vmatpush1.xpose.msra.mxu0 0.0
    %2511 = vmatprep.subr.mxu0 0.0
    %2512 = vmatpush1.xpose.msra.mxu0 0.0
    %2513 = vmatprep.subr.mxu0 0.0
    %2514 = vmatpush1.xpose.msra.mxu0 0.0
    %2515 = vmatprep.subr.mxu0 0.0
    %2516 = vmatpush1.xpose.msra.mxu0 0.0
    %2517 = vmatprep.subr.mxu0 0.0
    %2518 = vmatpush1.xpose.msra.mxu0 0.0
    %2519 = vmatprep.subr.mxu0 0.0
    %2520 = vmatpush1.xpose.msra.mxu0 0.0
    %2521 = vmatprep.subr.mxu0 0.0
    %2522 = vmatpush1.xpose.msra.mxu0 0.0
    %2523 = vmatprep.subr.mxu0 0.0
    %2524 = vmatpush1.xpose.msra.mxu0 0.0
    %2525 = vmatprep.subr.mxu0 0.0
    %2526 = vmatpush1.xpose.msra.mxu0 0.0
    %2527 = vmatprep.subr.mxu0 0.0
    %2528 = vmatpush1.xpose.msra.mxu0 0.0
    %2529 = vmatprep.subr.mxu0 0.0
    %2530 = vmatpush1.xpose.msra.mxu0 0.0
    %2531 = vmatprep.subr.mxu0 0.0
    %2532 = vmatpush1.xpose.msra.mxu0 0.0
    %2533 = vmatprep.subr.mxu0 0.0
    %2534 = vmatpush1.xpose.msra.mxu0 0.0
    %2535 = vmatprep.subr.mxu0 0.0
    %2536 = vmatpush1.xpose.msra.mxu0 0.0
    %2537 = vmatprep.subr.mxu0 0.0
    %2538 = vmatpush1.xpose.msra.mxu0 0.0
    %2539 = vmatprep.subr.mxu0 0.0
    %2540 = vmatpush1.xpose.msra.mxu0 0.0
    %2541 = vmatprep.subr.mxu0 0.0
    %2542 = vmatpush1.xpose.msra.mxu0 0.0
    %2543 = vmatprep.subr.mxu0 0.0
    %2544 = vmatpush1.xpose.msra.mxu0 0.0
    %2545 = vmatprep.subr.mxu0 0.0
    %2546 = vmatpush1.xpose.msra.mxu0 0.0
    %2547 = vmatprep.subr.mxu0 0.0
    %2548 = vmatpush1.xpose.msra.mxu0 0.0
    %2549 = vmatprep.subr.mxu0 0.0
    %2550 = vmatpush1.xpose.msra.mxu0 0.0
    %2551 = vmatprep.subr.mxu0 0.0
    %2552 = vmatpush1.xpose.msra.mxu0 0.0
    %2553 = vmatprep.subr.mxu0 0.0
    %2554 = vmatpush1.xpose.msra.mxu0 0.0
    %2555 = vmatprep.subr.mxu0 0.0
    %2556 = vmatpush1.xpose.msra.mxu0 0.0
    %2557 = vmatprep.subr.mxu0 0.0
    %2558 = vmatpush1.xpose.msra.mxu0 0.0
    %2559 = vmatprep.subr.mxu0 0.0
    %2560 = vmatpush1.xpose.msra.mxu0 0.0
    %2561 = vmatprep.subr.mxu0 0.0
    %2562 = vmatpush1.xpose.msra.mxu0 0.0
    %2563 = vmatprep.subr.mxu0 0.0
    %2564 = vmatpush1.xpose.msra.mxu0 0.0
    %2565 = vmatprep.mubr.f32.mxu0 0.0
    %2566 = vmatmul.mubr.f32.gmra.mrb[0].mxu0 %v2497
    %v2567 = vpop.f32.mrb[0].mxu0
    %v2568 = vadd.f32 0.0, %v2567
    %v2569 = vpop.f32.mrb[0].mxu0
    %2570 = vdwg.mxu0
    %2571 = vrot.lane.b32.xlu0 %v2033, 112
    %v2572 = vpop.permute.xlu0 %2571
    %v2573 = vsel %vm2042, %v2033, 0
    %v2575 = vsel %vm2042, %v2572, 0
    %2577 = vmatprep.subr.mxu0 0.0
    %2578 = vmatpush1.xpose.msra.mxu0 %v2575
    %2579 = vmatprep.subr.mxu0 0.0
    %2580 = vmatpush1.xpose.msra.mxu0 0.0
    %2581 = vmatprep.subr.mxu0 0.0
    %2582 = vmatpush1.xpose.msra.mxu0 0.0
    %2583 = vmatprep.subr.mxu0 0.0
    %2584 = vmatpush1.xpose.msra.mxu0 0.0
    %2585 = vmatprep.subr.mxu0 0.0
    %2586 = vmatpush1.xpose.msra.mxu0 0.0
    %2587 = vmatprep.subr.mxu0 0.0
    %2588 = vmatpush1.xpose.msra.mxu0 0.0
    %2589 = vmatprep.subr.mxu0 0.0
    %2590 = vmatpush1.xpose.msra.mxu0 0.0
    %2591 = vmatprep.subr.mxu0 0.0
    %2592 = vmatpush1.xpose.msra.mxu0 0.0
    %2593 = vmatprep.subr.mxu0 0.0
    %2594 = vmatpush1.xpose.msra.mxu0 0.0
    %2595 = vmatprep.subr.mxu0 0.0
    %2596 = vmatpush1.xpose.msra.mxu0 0.0
    %2597 = vmatprep.subr.mxu0 0.0
    %2598 = vmatpush1.xpose.msra.mxu0 0.0
    %2599 = vmatprep.subr.mxu0 0.0
    %2600 = vmatpush1.xpose.msra.mxu0 0.0
    %2601 = vmatprep.subr.mxu0 0.0
    %2602 = vmatpush1.xpose.msra.mxu0 0.0
    %2603 = vmatprep.subr.mxu0 0.0
    %2604 = vmatpush1.xpose.msra.mxu0 0.0
    %2605 = vmatprep.subr.mxu0 0.0
    %2606 = vmatpush1.xpose.msra.mxu0 0.0
    %2607 = vmatprep.subr.mxu0 0.0
    %2608 = vmatpush1.xpose.msra.mxu0 0.0
    %2609 = vmatprep.subr.mxu0 0.0
    %2610 = vmatpush1.xpose.msra.mxu0 0.0
    %2611 = vmatprep.subr.mxu0 0.0
    %2612 = vmatpush1.xpose.msra.mxu0 0.0
    %2613 = vmatprep.subr.mxu0 0.0
    %2614 = vmatpush1.xpose.msra.mxu0 0.0
    %2615 = vmatprep.subr.mxu0 0.0
    %2616 = vmatpush1.xpose.msra.mxu0 0.0
    %2617 = vmatprep.subr.mxu0 0.0
    %2618 = vmatpush1.xpose.msra.mxu0 0.0
    %2619 = vmatprep.subr.mxu0 0.0
    %2620 = vmatpush1.xpose.msra.mxu0 0.0
    %2621 = vmatprep.subr.mxu0 0.0
    %2622 = vmatpush1.xpose.msra.mxu0 0.0
    %2623 = vmatprep.subr.mxu0 0.0
    %2624 = vmatpush1.xpose.msra.mxu0 0.0
    %2625 = vmatprep.subr.mxu0 0.0
    %2626 = vmatpush1.xpose.msra.mxu0 0.0
    %2627 = vmatprep.subr.mxu0 0.0
    %2628 = vmatpush1.xpose.msra.mxu0 0.0
    %2629 = vmatprep.subr.mxu0 0.0
    %2630 = vmatpush1.xpose.msra.mxu0 0.0
    %2631 = vmatprep.subr.mxu0 0.0
    %2632 = vmatpush1.xpose.msra.mxu0 0.0
    %2633 = vmatprep.subr.mxu0 0.0
    %2634 = vmatpush1.xpose.msra.mxu0 0.0
    %2635 = vmatprep.subr.mxu0 0.0
    %2636 = vmatpush1.xpose.msra.mxu0 0.0
    %2637 = vmatprep.subr.mxu0 0.0
    %2638 = vmatpush1.xpose.msra.mxu0 0.0
    %2639 = vmatprep.subr.mxu0 0.0
    %2640 = vmatpush1.xpose.msra.mxu0 0.0
    %2641 = vmatprep.mubr.f32.mxu0 0.0
    %2642 = vmatmul.mubr.f32.gmra.mrb[0].mxu0 %v2573
    %v2643 = vpop.f32.mrb[0].mxu0
    %v2644 = vadd.f32 0.0, %v2643
    %v2645 = vpop.f32.mrb[0].mxu0
    %2646 = vdwg.mxu0
    %v2647 = vmul.f32 %v2114, 0.5
    %v2648 = vmul.f32 %v2188, 0.5
    %v2649 = vmul.f32 %v2264, 0.5
    %v2650 = vmul.f32 %v2340, 0.5
    %v2651 = vmul.f32 %v2416, 0.5
    %v2652 = vmul.f32 %v2492, 0.5
    %v2653 = vmul.f32 %v2568, 0.5
    %v2654 = vmul.f32 %v2644, 0.5
    %v2655 = vadd.f32 %v2647, %v68
    %v2656 = vadd.f32 %v2648, %v72
    %v2657 = vadd.f32 %v2649, %v68
    %v2658 = vadd.f32 %v2650, %v72
    %v2659 = vadd.f32 %v2651, %v68
    %v2660 = vadd.f32 %v2652, %v72
    %v2661 = vadd.f32 %v2653, %v68
    %v2662 = vadd.f32 %v2654, %v72
    %v2663 = vsel %vm205, %v2655, -inf
    %2664 = vmax.xlane.f32.xlu0 %v2663
    %v2665 = vpop.xlane.xlu0 %2664
    %v2666 = vsel %vm205, %v2656, -inf
    %2667 = vmax.xlane.f32.xlu0 %v2666
    %v2668 = vpop.xlane.xlu0 %2667
    %v2669 = vsel %vm205, %v2657, -inf
    %2670 = vmax.xlane.f32.xlu0 %v2669
    %v2671 = vpop.xlane.xlu0 %2670
    %v2672 = vsel %vm205, %v2658, -inf
    %2673 = vmax.xlane.f32.xlu0 %v2672
    %v2674 = vpop.xlane.xlu0 %2673
    %v2675 = vsel %vm205, %v2659, -inf
    %2676 = vmax.xlane.f32.xlu0 %v2675
    %v2677 = vpop.xlane.xlu0 %2676
    %v2678 = vsel %vm205, %v2660, -inf
    %2679 = vmax.xlane.f32.xlu0 %v2678
    %v2680 = vpop.xlane.xlu0 %2679
    %v2681 = vsel %vm205, %v2661, -inf
    %2682 = vmax.xlane.f32.xlu0 %v2681
    %v2683 = vpop.xlane.xlu0 %2682
    %v2684 = vsel %vm205, %v2662, -inf
    %2685 = vmax.xlane.f32.xlu0 %v2684
    %v2686 = vpop.xlane.xlu0 %2685
    %v2687 = vsub.f32 %v2655, %v2665
    %v2688 = vsub.f32 %v2656, %v2668
    %v2689 = vsub.f32 %v2657, %v2671
    %v2690 = vsub.f32 %v2658, %v2674
    %v2691 = vsub.f32 %v2659, %v2677
    %v2692 = vsub.f32 %v2660, %v2680
    %v2693 = vsub.f32 %v2661, %v2683
    %v2694 = vsub.f32 %v2662, %v2686
    %v2695 = vmul.f32 %v2687, 1.442695
    %v2696 = vpow.pop %v2695
    %v2697 = vmul.f32 %v2688, 1.442695
    %v2698 = vpow.pop %v2697
    %v2699 = vmul.f32 %v2689, 1.442695
    %v2700 = vpow.pop %v2699
    %v2701 = vmul.f32 %v2690, 1.442695
    %v2702 = vpow.pop %v2701
    %v2703 = vmul.f32 %v2691, 1.442695
    %v2704 = vpow.pop %v2703
    %v2705 = vmul.f32 %v2692, 1.442695
    %v2706 = vpow.pop %v2705
    %v2707 = vmul.f32 %v2693, 1.442695
    %v2708 = vpow.pop %v2707
    %v2709 = vmul.f32 %v2694, 1.442695
    %v2710 = vpow.pop %v2709
    %v2711 = vsel %vm205, %v2696, 0.0
    %2712 = vadd.xlane.f32.xlu0 %v2711
    %v2713 = vpop.xlane.xlu0 %2712
    %v2714 = vsel %vm205, %v2698, 0.0
    %2715 = vadd.xlane.f32.xlu0 %v2714
    %v2716 = vpop.xlane.xlu0 %2715
    %v2717 = vsel %vm205, %v2700, 0.0
    %2718 = vadd.xlane.f32.xlu0 %v2717
    %v2719 = vpop.xlane.xlu0 %2718
    %v2720 = vsel %vm205, %v2702, 0.0
    %2721 = vadd.xlane.f32.xlu0 %v2720
    %v2722 = vpop.xlane.xlu0 %2721
    %v2723 = vsel %vm205, %v2704, 0.0
    %2724 = vadd.xlane.f32.xlu0 %v2723
    %v2725 = vpop.xlane.xlu0 %2724
    %v2726 = vsel %vm205, %v2706, 0.0
    %2727 = vadd.xlane.f32.xlu0 %v2726
    %v2728 = vpop.xlane.xlu0 %2727
    %v2729 = vsel %vm205, %v2708, 0.0
    %2730 = vadd.xlane.f32.xlu0 %v2729
    %v2731 = vpop.xlane.xlu0 %2730
    %v2732 = vsel %vm205, %v2710, 0.0
    %2733 = vadd.xlane.f32.xlu0 %v2732
    %v2734 = vpop.xlane.xlu0 %2733
    %2735 = vrot.lane.b32.xlu0 %v2012, 96
    %v2736 = vpop.permute.xlu0 %2735
    %v2739 = vsel %vm205, %v2696, 0
    %2741 = vmatprep.subr.mxu0 0.0
    %2742 = vmatpush1.msra.mxu0 %v2736
    %2743 = vmatprep.subr.mxu0 0.0
    %2744 = vmatpush1.msra.mxu0 0.0
    %2745 = vmatprep.subr.mxu0 0.0
    %2746 = vmatpush1.msra.mxu0 0.0
    %2747 = vmatprep.subr.mxu0 0.0
    %2748 = vmatpush1.msra.mxu0 0.0
    %2749 = vmatprep.subr.mxu0 0.0
    %2750 = vmatpush1.msra.mxu0 0.0
    %2751 = vmatprep.subr.mxu0 0.0
    %2752 = vmatpush1.msra.mxu0 0.0
    %2753 = vmatprep.subr.mxu0 0.0
    %2754 = vmatpush1.msra.mxu0 0.0
    %2755 = vmatprep.subr.mxu0 0.0
    %2756 = vmatpush1.msra.mxu0 0.0
    %2757 = vmatprep.subr.mxu0 0.0
    %2758 = vmatpush1.msra.mxu0 0.0
    %2759 = vmatprep.subr.mxu0 0.0
    %2760 = vmatpush1.msra.mxu0 0.0
    %2761 = vmatprep.subr.mxu0 0.0
    %2762 = vmatpush1.msra.mxu0 0.0
    %2763 = vmatprep.subr.mxu0 0.0
    %2764 = vmatpush1.msra.mxu0 0.0
    %2765 = vmatprep.subr.mxu0 0.0
    %2766 = vmatpush1.msra.mxu0 0.0
    %2767 = vmatprep.subr.mxu0 0.0
    %2768 = vmatpush1.msra.mxu0 0.0
    %2769 = vmatprep.subr.mxu0 0.0
    %2770 = vmatpush1.msra.mxu0 0.0
    %2771 = vmatprep.subr.mxu0 0.0
    %2772 = vmatpush1.msra.mxu0 0.0
    %2773 = vmatprep.subr.mxu0 0.0
    %2774 = vmatpush1.msra.mxu0 0.0
    %2775 = vmatprep.subr.mxu0 0.0
    %2776 = vmatpush1.msra.mxu0 0.0
    %2777 = vmatprep.subr.mxu0 0.0
    %2778 = vmatpush1.msra.mxu0 0.0
    %2779 = vmatprep.subr.mxu0 0.0
    %2780 = vmatpush1.msra.mxu0 0.0
    %2781 = vmatprep.subr.mxu0 0.0
    %2782 = vmatpush1.msra.mxu0 0.0
    %2783 = vmatprep.subr.mxu0 0.0
    %2784 = vmatpush1.msra.mxu0 0.0
    %2785 = vmatprep.subr.mxu0 0.0
    %2786 = vmatpush1.msra.mxu0 0.0
    %2787 = vmatprep.subr.mxu0 0.0
    %2788 = vmatpush1.msra.mxu0 0.0
    %2789 = vmatprep.subr.mxu0 0.0
    %2790 = vmatpush1.msra.mxu0 0.0
    %2791 = vmatprep.subr.mxu0 0.0
    %2792 = vmatpush1.msra.mxu0 0.0
    %2793 = vmatprep.subr.mxu0 0.0
    %2794 = vmatpush1.msra.mxu0 0.0
    %2795 = vmatprep.subr.mxu0 0.0
    %2796 = vmatpush1.msra.mxu0 0.0
    %2797 = vmatprep.subr.mxu0 0.0
    %2798 = vmatpush1.msra.mxu0 0.0
    %2799 = vmatprep.subr.mxu0 0.0
    %2800 = vmatpush1.msra.mxu0 0.0
    %2801 = vmatprep.subr.mxu0 0.0
    %2802 = vmatpush1.msra.mxu0 0.0
    %2803 = vmatprep.subr.mxu0 0.0
    %2804 = vmatpush1.msra.mxu0 0.0
    %2805 = vmatprep.mubr.f32.mxu0 0.0
    %2806 = vmatmul.mubr.f32.gmra.mrb[0].mxu0 %v2739
    %v2807 = vpop.f32.mrb[0].mxu0
    %v2808 = vadd.f32 0.0, %v2807
    %v2809 = vpop.f32.mrb[0].mxu0
    %2810 = vdwg.mxu0
    %2811 = vrot.lane.b32.xlu0 %v2017, 96
    %v2812 = vpop.permute.xlu0 %2811
    %v2815 = vsel %vm205, %v2698, 0
    %2817 = vmatprep.subr.mxu0 0.0
    %2818 = vmatpush1.msra.mxu0 %v2812
    %2819 = vmatprep.subr.mxu0 0.0
    %2820 = vmatpush1.msra.mxu0 0.0
    %2821 = vmatprep.subr.mxu0 0.0
    %2822 = vmatpush1.msra.mxu0 0.0
    %2823 = vmatprep.subr.mxu0 0.0
    %2824 = vmatpush1.msra.mxu0 0.0
    %2825 = vmatprep.subr.mxu0 0.0
    %2826 = vmatpush1.msra.mxu0 0.0
    %2827 = vmatprep.subr.mxu0 0.0
    %2828 = vmatpush1.msra.mxu0 0.0
    %2829 = vmatprep.subr.mxu0 0.0
    %2830 = vmatpush1.msra.mxu0 0.0
    %2831 = vmatprep.subr.mxu0 0.0
    %2832 = vmatpush1.msra.mxu0 0.0
    %2833 = vmatprep.subr.mxu0 0.0
    %2834 = vmatpush1.msra.mxu0 0.0
    %2835 = vmatprep.subr.mxu0 0.0
    %2836 = vmatpush1.msra.mxu0 0.0
    %2837 = vmatprep.subr.mxu0 0.0
    %2838 = vmatpush1.msra.mxu0 0.0
    %2839 = vmatprep.subr.mxu0 0.0
    %2840 = vmatpush1.msra.mxu0 0.0
    %2841 = vmatprep.subr.mxu0 0.0
    %2842 = vmatpush1.msra.mxu0 0.0
    %2843 = vmatprep.subr.mxu0 0.0
    %2844 = vmatpush1.msra.mxu0 0.0
    %2845 = vmatprep.subr.mxu0 0.0
    %2846 = vmatpush1.msra.mxu0 0.0
    %2847 = vmatprep.subr.mxu0 0.0
    %2848 = vmatpush1.msra.mxu0 0.0
    %2849 = vmatprep.subr.mxu0 0.0
    %2850 = vmatpush1.msra.mxu0 0.0
    %2851 = vmatprep.subr.mxu0 0.0
    %2852 = vmatpush1.msra.mxu0 0.0
    %2853 = vmatprep.subr.mxu0 0.0
    %2854 = vmatpush1.msra.mxu0 0.0
    %2855 = vmatprep.subr.mxu0 0.0
    %2856 = vmatpush1.msra.mxu0 0.0
    %2857 = vmatprep.subr.mxu0 0.0
    %2858 = vmatpush1.msra.mxu0 0.0
    %2859 = vmatprep.subr.mxu0 0.0
    %2860 = vmatpush1.msra.mxu0 0.0
    %2861 = vmatprep.subr.mxu0 0.0
    %2862 = vmatpush1.msra.mxu0 0.0
    %2863 = vmatprep.subr.mxu0 0.0
    %2864 = vmatpush1.msra.mxu0 0.0
    %2865 = vmatprep.subr.mxu0 0.0
    %2866 = vmatpush1.msra.mxu0 0.0
    %2867 = vmatprep.subr.mxu0 0.0
    %2868 = vmatpush1.msra.mxu0 0.0
    %2869 = vmatprep.subr.mxu0 0.0
    %2870 = vmatpush1.msra.mxu0 0.0
    %2871 = vmatprep.subr.mxu0 0.0
    %2872 = vmatpush1.msra.mxu0 0.0
    %2873 = vmatprep.subr.mxu0 0.0
    %2874 = vmatpush1.msra.mxu0 0.0
    %2875 = vmatprep.subr.mxu0 0.0
    %2876 = vmatpush1.msra.mxu0 0.0
    %2877 = vmatprep.subr.mxu0 0.0
    %2878 = vmatpush1.msra.mxu0 0.0
    %2879 = vmatprep.subr.mxu0 0.0
    %2880 = vmatpush1.msra.mxu0 0.0
    %2881 = vmatprep.mubr.f32.mxu0 0.0
    %2882 = vmatmul.mubr.f32.gmra.mrb[0].mxu0 %v2815
    %v2883 = vpop.f32.mrb[0].mxu0
    %v2884 = vadd.f32 0.0, %v2883
    %v2885 = vpop.f32.mrb[0].mxu0
    %2886 = vdwg.mxu0
    %2887 = vrot.lane.b32.xlu0 %v2027, 96
    %v2888 = vpop.permute.xlu0 %2887
    %v2891 = vsel %vm205, %v2700, 0
    %2893 = vmatprep.subr.mxu0 0.0
    %2894 = vmatpush1.msra.mxu0 %v2888
    %2895 = vmatprep.subr.mxu0 0.0
    %2896 = vmatpush1.msra.mxu0 0.0
    %2897 = vmatprep.subr.mxu0 0.0
    %2898 = vmatpush1.msra.mxu0 0.0
    %2899 = vmatprep.subr.mxu0 0.0
    %2900 = vmatpush1.msra.mxu0 0.0
    %2901 = vmatprep.subr.mxu0 0.0
    %2902 = vmatpush1.msra.mxu0 0.0
    %2903 = vmatprep.subr.mxu0 0.0
    %2904 = vmatpush1.msra.mxu0 0.0
    %2905 = vmatprep.subr.mxu0 0.0
    %2906 = vmatpush1.msra.mxu0 0.0
    %2907 = vmatprep.subr.mxu0 0.0
    %2908 = vmatpush1.msra.mxu0 0.0
    %2909 = vmatprep.subr.mxu0 0.0
    %2910 = vmatpush1.msra.mxu0 0.0
    %2911 = vmatprep.subr.mxu0 0.0
    %2912 = vmatpush1.msra.mxu0 0.0
    %2913 = vmatprep.subr.mxu0 0.0
    %2914 = vmatpush1.msra.mxu0 0.0
    %2915 = vmatprep.subr.mxu0 0.0
    %2916 = vmatpush1.msra.mxu0 0.0
    %2917 = vmatprep.subr.mxu0 0.0
    %2918 = vmatpush1.msra.mxu0 0.0
    %2919 = vmatprep.subr.mxu0 0.0
    %2920 = vmatpush1.msra.mxu0 0.0
    %2921 = vmatprep.subr.mxu0 0.0
    %2922 = vmatpush1.msra.mxu0 0.0
    %2923 = vmatprep.subr.mxu0 0.0
    %2924 = vmatpush1.msra.mxu0 0.0
    %2925 = vmatprep.subr.mxu0 0.0
    %2926 = vmatpush1.msra.mxu0 0.0
    %2927 = vmatprep.subr.mxu0 0.0
    %2928 = vmatpush1.msra.mxu0 0.0
    %2929 = vmatprep.subr.mxu0 0.0
    %2930 = vmatpush1.msra.mxu0 0.0
    %2931 = vmatprep.subr.mxu0 0.0
    %2932 = vmatpush1.msra.mxu0 0.0
    %2933 = vmatprep.subr.mxu0 0.0
    %2934 = vmatpush1.msra.mxu0 0.0
    %2935 = vmatprep.subr.mxu0 0.0
    %2936 = vmatpush1.msra.mxu0 0.0
    %2937 = vmatprep.subr.mxu0 0.0
    %2938 = vmatpush1.msra.mxu0 0.0
    %2939 = vmatprep.subr.mxu0 0.0
    %2940 = vmatpush1.msra.mxu0 0.0
    %2941 = vmatprep.subr.mxu0 0.0
    %2942 = vmatpush1.msra.mxu0 0.0
    %2943 = vmatprep.subr.mxu0 0.0
    %2944 = vmatpush1.msra.mxu0 0.0
    %2945 = vmatprep.subr.mxu0 0.0
    %2946 = vmatpush1.msra.mxu0 0.0
    %2947 = vmatprep.subr.mxu0 0.0
    %2948 = vmatpush1.msra.mxu0 0.0
    %2949 = vmatprep.subr.mxu0 0.0
    %2950 = vmatpush1.msra.mxu0 0.0
    %2951 = vmatprep.subr.mxu0 0.0
    %2952 = vmatpush1.msra.mxu0 0.0
    %2953 = vmatprep.subr.mxu0 0.0
    %2954 = vmatpush1.msra.mxu0 0.0
    %2955 = vmatprep.subr.mxu0 0.0
    %2956 = vmatpush1.msra.mxu0 0.0
    %2957 = vmatprep.mubr.f32.mxu0 0.0
    %2958 = vmatmul.mubr.f32.gmra.mrb[0].mxu0 %v2891
    %v2959 = vpop.f32.mrb[0].mxu0
    %v2960 = vadd.f32 0.0, %v2959
    %v2961 = vpop.f32.mrb[0].mxu0
    %2962 = vdwg.mxu0
    %2963 = vrot.lane.b32.xlu0 %v2029, 96
    %v2964 = vpop.permute.xlu0 %2963
    %v2967 = vsel %vm205, %v2702, 0
    %2969 = vmatprep.subr.mxu0 0.0
    %2970 = vmatpush1.msra.mxu0 %v2964
    %2971 = vmatprep.subr.mxu0 0.0
    %2972 = vmatpush1.msra.mxu0 0.0
    %2973 = vmatprep.subr.mxu0 0.0
    %2974 = vmatpush1.msra.mxu0 0.0
    %2975 = vmatprep.subr.mxu0 0.0
    %2976 = vmatpush1.msra.mxu0 0.0
    %2977 = vmatprep.subr.mxu0 0.0
    %2978 = vmatpush1.msra.mxu0 0.0
    %2979 = vmatprep.subr.mxu0 0.0
    %2980 = vmatpush1.msra.mxu0 0.0
    %2981 = vmatprep.subr.mxu0 0.0
    %2982 = vmatpush1.msra.mxu0 0.0
    %2983 = vmatprep.subr.mxu0 0.0
    %2984 = vmatpush1.msra.mxu0 0.0
    %2985 = vmatprep.subr.mxu0 0.0
    %2986 = vmatpush1.msra.mxu0 0.0
    %2987 = vmatprep.subr.mxu0 0.0
    %2988 = vmatpush1.msra.mxu0 0.0
    %2989 = vmatprep.subr.mxu0 0.0
    %2990 = vmatpush1.msra.mxu0 0.0
    %2991 = vmatprep.subr.mxu0 0.0
    %2992 = vmatpush1.msra.mxu0 0.0
    %2993 = vmatprep.subr.mxu0 0.0
    %2994 = vmatpush1.msra.mxu0 0.0
    %2995 = vmatprep.subr.mxu0 0.0
    %2996 = vmatpush1.msra.mxu0 0.0
    %2997 = vmatprep.subr.mxu0 0.0
    %2998 = vmatpush1.msra.mxu0 0.0
    %2999 = vmatprep.subr.mxu0 0.0
    %3000 = vmatpush1.msra.mxu0 0.0
    %3001 = vmatprep.subr.mxu0 0.0
    %3002 = vmatpush1.msra.mxu0 0.0
    %3003 = vmatprep.subr.mxu0 0.0
    %3004 = vmatpush1.msra.mxu0 0.0
    %3005 = vmatprep.subr.mxu0 0.0
    %3006 = vmatpush1.msra.mxu0 0.0
    %3007 = vmatprep.subr.mxu0 0.0
    %3008 = vmatpush1.msra.mxu0 0.0
    %3009 = vmatprep.subr.mxu0 0.0
    %3010 = vmatpush1.msra.mxu0 0.0
    %3011 = vmatprep.subr.mxu0 0.0
    %3012 = vmatpush1.msra.mxu0 0.0
    %3013 = vmatprep.subr.mxu0 0.0
    %3014 = vmatpush1.msra.mxu0 0.0
    %3015 = vmatprep.subr.mxu0 0.0
    %3016 = vmatpush1.msra.mxu0 0.0
    %3017 = vmatprep.subr.mxu0 0.0
    %3018 = vmatpush1.msra.mxu0 0.0
    %3019 = vmatprep.subr.mxu0 0.0
    %3020 = vmatpush1.msra.mxu0 0.0
    %3021 = vmatprep.subr.mxu0 0.0
    %3022 = vmatpush1.msra.mxu0 0.0
    %3023 = vmatprep.subr.mxu0 0.0
    %3024 = vmatpush1.msra.mxu0 0.0
    %3025 = vmatprep.subr.mxu0 0.0
    %3026 = vmatpush1.msra.mxu0 0.0
    %3027 = vmatprep.subr.mxu0 0.0
    %3028 = vmatpush1.msra.mxu0 0.0
    %3029 = vmatprep.subr.mxu0 0.0
    %3030 = vmatpush1.msra.mxu0 0.0
    %3031 = vmatprep.subr.mxu0 0.0
    %3032 = vmatpush1.msra.mxu0 0.0
    %3033 = vmatprep.mubr.f32.mxu0 0.0
    %3034 = vmatmul.mubr.f32.gmra.mrb[0].mxu0 %v2967
    %v3035 = vpop.f32.mrb[0].mxu0
    %v3036 = vadd.f32 0.0, %v3035
    %v3037 = vpop.f32.mrb[0].mxu0
    %3038 = vdwg.mxu0
    %3039 = vrot.lane.b32.xlu0 %v2035, 96
    %v3040 = vpop.permute.xlu0 %3039
    %v3043 = vsel %vm205, %v2704, 0
    %3045 = vmatprep.subr.mxu0 0.0
    %3046 = vmatpush1.msra.mxu0 %v3040
    %3047 = vmatprep.subr.mxu0 0.0
    %3048 = vmatpush1.msra.mxu0 0.0
    %3049 = vmatprep.subr.mxu0 0.0
    %3050 = vmatpush1.msra.mxu0 0.0
    %3051 = vmatprep.subr.mxu0 0.0
    %3052 = vmatpush1.msra.mxu0 0.0
    %3053 = vmatprep.subr.mxu0 0.0
    %3054 = vmatpush1.msra.mxu0 0.0
    %3055 = vmatprep.subr.mxu0 0.0
    %3056 = vmatpush1.msra.mxu0 0.0
    %3057 = vmatprep.subr.mxu0 0.0
    %3058 = vmatpush1.msra.mxu0 0.0
    %3059 = vmatprep.subr.mxu0 0.0
    %3060 = vmatpush1.msra.mxu0 0.0
    %3061 = vmatprep.subr.mxu0 0.0
    %3062 = vmatpush1.msra.mxu0 0.0
    %3063 = vmatprep.subr.mxu0 0.0
    %3064 = vmatpush1.msra.mxu0 0.0
    %3065 = vmatprep.subr.mxu0 0.0
    %3066 = vmatpush1.msra.mxu0 0.0
    %3067 = vmatprep.subr.mxu0 0.0
    %3068 = vmatpush1.msra.mxu0 0.0
    %3069 = vmatprep.subr.mxu0 0.0
    %3070 = vmatpush1.msra.mxu0 0.0
    %3071 = vmatprep.subr.mxu0 0.0
    %3072 = vmatpush1.msra.mxu0 0.0
    %3073 = vmatprep.subr.mxu0 0.0
    %3074 = vmatpush1.msra.mxu0 0.0
    %3075 = vmatprep.subr.mxu0 0.0
    %3076 = vmatpush1.msra.mxu0 0.0
    %3077 = vmatprep.subr.mxu0 0.0
    %3078 = vmatpush1.msra.mxu0 0.0
    %3079 = vmatprep.subr.mxu0 0.0
    %3080 = vmatpush1.msra.mxu0 0.0
    %3081 = vmatprep.subr.mxu0 0.0
    %3082 = vmatpush1.msra.mxu0 0.0
    %3083 = vmatprep.subr.mxu0 0.0
    %3084 = vmatpush1.msra.mxu0 0.0
    %3085 = vmatprep.subr.mxu0 0.0
    %3086 = vmatpush1.msra.mxu0 0.0
    %3087 = vmatprep.subr.mxu0 0.0
    %3088 = vmatpush1.msra.mxu0 0.0
    %3089 = vmatprep.subr.mxu0 0.0
    %3090 = vmatpush1.msra.mxu0 0.0
    %3091 = vmatprep.subr.mxu0 0.0
    %3092 = vmatpush1.msra.mxu0 0.0
    %3093 = vmatprep.subr.mxu0 0.0
    %3094 = vmatpush1.msra.mxu0 0.0
    %3095 = vmatprep.subr.mxu0 0.0
    %3096 = vmatpush1.msra.mxu0 0.0
    %3097 = vmatprep.subr.mxu0 0.0
    %3098 = vmatpush1.msra.mxu0 0.0
    %3099 = vmatprep.subr.mxu0 0.0
    %3100 = vmatpush1.msra.mxu0 0.0
    %3101 = vmatprep.subr.mxu0 0.0
    %3102 = vmatpush1.msra.mxu0 0.0
    %3103 = vmatprep.subr.mxu0 0.0
    %3104 = vmatpush1.msra.mxu0 0.0
    %3105 = vmatprep.subr.mxu0 0.0
    %3106 = vmatpush1.msra.mxu0 0.0
    %3107 = vmatprep.subr.mxu0 0.0
    %3108 = vmatpush1.msra.mxu0 0.0
    %3109 = vmatprep.mubr.f32.mxu0 0.0
    %3110 = vmatmul.mubr.f32.gmra.mrb[0].mxu0 %v3043
    %v3111 = vpop.f32.mrb[0].mxu0
    %v3112 = vadd.f32 0.0, %v3111
    %v3113 = vpop.f32.mrb[0].mxu0
    %3114 = vdwg.mxu0
    %3115 = vrot.lane.b32.xlu0 %v2037, 96
    %v3116 = vpop.permute.xlu0 %3115
    %v3119 = vsel %vm205, %v2706, 0
    %3121 = vmatprep.subr.mxu0 0.0
    %3122 = vmatpush1.msra.mxu0 %v3116
    %3123 = vmatprep.subr.mxu0 0.0
    %3124 = vmatpush1.msra.mxu0 0.0
    %3125 = vmatprep.subr.mxu0 0.0
    %3126 = vmatpush1.msra.mxu0 0.0
    %3127 = vmatprep.subr.mxu0 0.0
    %3128 = vmatpush1.msra.mxu0 0.0
    %3129 = vmatprep.subr.mxu0 0.0
    %3130 = vmatpush1.msra.mxu0 0.0
    %3131 = vmatprep.subr.mxu0 0.0
    %3132 = vmatpush1.msra.mxu0 0.0
    %3133 = vmatprep.subr.mxu0 0.0
    %3134 = vmatpush1.msra.mxu0 0.0
    %3135 = vmatprep.subr.mxu0 0.0
    %3136 = vmatpush1.msra.mxu0 0.0
    %3137 = vmatprep.subr.mxu0 0.0
    %3138 = vmatpush1.msra.mxu0 0.0
    %3139 = vmatprep.subr.mxu0 0.0
    %3140 = vmatpush1.msra.mxu0 0.0
    %3141 = vmatprep.subr.mxu0 0.0
    %3142 = vmatpush1.msra.mxu0 0.0
    %3143 = vmatprep.subr.mxu0 0.0
    %3144 = vmatpush1.msra.mxu0 0.0
    %3145 = vmatprep.subr.mxu0 0.0
    %3146 = vmatpush1.msra.mxu0 0.0
    %3147 = vmatprep.subr.mxu0 0.0
    %3148 = vmatpush1.msra.mxu0 0.0
    %3149 = vmatprep.subr.mxu0 0.0
    %3150 = vmatpush1.msra.mxu0 0.0
    %3151 = vmatprep.subr.mxu0 0.0
    %3152 = vmatpush1.msra.mxu0 0.0
    %3153 = vmatprep.subr.mxu0 0.0
    %3154 = vmatpush1.msra.mxu0 0.0
    %3155 = vmatprep.subr.mxu0 0.0
    %3156 = vmatpush1.msra.mxu0 0.0
    %3157 = vmatprep.subr.mxu0 0.0
    %3158 = vmatpush1.msra.mxu0 0.0
    %3159 = vmatprep.subr.mxu0 0.0
    %3160 = vmatpush1.msra.mxu0 0.0
    %3161 = vmatprep.subr.mxu0 0.0
    %3162 = vmatpush1.msra.mxu0 0.0
    %3163 = vmatprep.subr.mxu0 0.0
    %3164 = vmatpush1.msra.mxu0 0.0
    %3165 = vmatprep.subr.mxu0 0.0
    %3166 = vmatpush1.msra.mxu0 0.0
    %3167 = vmatprep.subr.mxu0 0.0
    %3168 = vmatpush1.msra.mxu0 0.0
    %3169 = vmatprep.subr.mxu0 0.0
    %3170 = vmatpush1.msra.mxu0 0.0
    %3171 = vmatprep.subr.mxu0 0.0
    %3172 = vmatpush1.msra.mxu0 0.0
    %3173 = vmatprep.subr.mxu0 0.0
    %3174 = vmatpush1.msra.mxu0 0.0
    %3175 = vmatprep.subr.mxu0 0.0
    %3176 = vmatpush1.msra.mxu0 0.0
    %3177 = vmatprep.subr.mxu0 0.0
    %3178 = vmatpush1.msra.mxu0 0.0
    %3179 = vmatprep.subr.mxu0 0.0
    %3180 = vmatpush1.msra.mxu0 0.0
    %3181 = vmatprep.subr.mxu0 0.0
    %3182 = vmatpush1.msra.mxu0 0.0
    %3183 = vmatprep.subr.mxu0 0.0
    %3184 = vmatpush1.msra.mxu0 0.0
    %3185 = vmatprep.mubr.f32.mxu0 0.0
    %3186 = vmatmul.mubr.f32.gmra.mrb[0].mxu0 %v3119
    %v3187 = vpop.f32.mrb[0].mxu0
    %v3188 = vadd.f32 0.0, %v3187
    %v3189 = vpop.f32.mrb[0].mxu0
    %3190 = vdwg.mxu0
    %3191 = vrot.lane.b32.xlu0 %v2039, 96
    %v3192 = vpop.permute.xlu0 %3191
    %v3195 = vsel %vm205, %v2708, 0
    %3197 = vmatprep.subr.mxu0 0.0
    %3198 = vmatpush1.msra.mxu0 %v3192
    %3199 = vmatprep.subr.mxu0 0.0
    %3200 = vmatpush1.msra.mxu0 0.0
    %3201 = vmatprep.subr.mxu0 0.0
    %3202 = vmatpush1.msra.mxu0 0.0
    %3203 = vmatprep.subr.mxu0 0.0
    %3204 = vmatpush1.msra.mxu0 0.0
    %3205 = vmatprep.subr.mxu0 0.0
    %3206 = vmatpush1.msra.mxu0 0.0
    %3207 = vmatprep.subr.mxu0 0.0
    %3208 = vmatpush1.msra.mxu0 0.0
    %3209 = vmatprep.subr.mxu0 0.0
    %3210 = vmatpush1.msra.mxu0 0.0
    %3211 = vmatprep.subr.mxu0 0.0
    %3212 = vmatpush1.msra.mxu0 0.0
    %3213 = vmatprep.subr.mxu0 0.0
    %3214 = vmatpush1.msra.mxu0 0.0
    %3215 = vmatprep.subr.mxu0 0.0
    %3216 = vmatpush1.msra.mxu0 0.0
    %3217 = vmatprep.subr.mxu0 0.0
    %3218 = vmatpush1.msra.mxu0 0.0
    %3219 = vmatprep.subr.mxu0 0.0
    %3220 = vmatpush1.msra.mxu0 0.0
    %3221 = vmatprep.subr.mxu0 0.0
    %3222 = vmatpush1.msra.mxu0 0.0
    %3223 = vmatprep.subr.mxu0 0.0
    %3224 = vmatpush1.msra.mxu0 0.0
    %3225 = vmatprep.subr.mxu0 0.0
    %3226 = vmatpush1.msra.mxu0 0.0
    %3227 = vmatprep.subr.mxu0 0.0
    %3228 = vmatpush1.msra.mxu0 0.0
    %3229 = vmatprep.subr.mxu0 0.0
    %3230 = vmatpush1.msra.mxu0 0.0
    %3231 = vmatprep.subr.mxu0 0.0
    %3232 = vmatpush1.msra.mxu0 0.0
    %3233 = vmatprep.subr.mxu0 0.0
    %3234 = vmatpush1.msra.mxu0 0.0
    %3235 = vmatprep.subr.mxu0 0.0
    %3236 = vmatpush1.msra.mxu0 0.0
    %3237 = vmatprep.subr.mxu0 0.0
    %3238 = vmatpush1.msra.mxu0 0.0
    %3239 = vmatprep.subr.mxu0 0.0
    %3240 = vmatpush1.msra.mxu0 0.0
    %3241 = vmatprep.subr.mxu0 0.0
    %3242 = vmatpush1.msra.mxu0 0.0
    %3243 = vmatprep.subr.mxu0 0.0
    %3244 = vmatpush1.msra.mxu0 0.0
    %3245 = vmatprep.subr.mxu0 0.0
    %3246 = vmatpush1.msra.mxu0 0.0
    %3247 = vmatprep.subr.mxu0 0.0
    %3248 = vmatpush1.msra.mxu0 0.0
    %3249 = vmatprep.subr.mxu0 0.0
    %3250 = vmatpush1.msra.mxu0 0.0
    %3251 = vmatprep.subr.mxu0 0.0
    %3252 = vmatpush1.msra.mxu0 0.0
    %3253 = vmatprep.subr.mxu0 0.0
    %3254 = vmatpush1.msra.mxu0 0.0
    %3255 = vmatprep.subr.mxu0 0.0
    %3256 = vmatpush1.msra.mxu0 0.0
    %3257 = vmatprep.subr.mxu0 0.0
    %3258 = vmatpush1.msra.mxu0 0.0
    %3259 = vmatprep.subr.mxu0 0.0
    %3260 = vmatpush1.msra.mxu0 0.0
    %3261 = vmatprep.mubr.f32.mxu0 0.0
    %3262 = vmatmul.mubr.f32.gmra.mrb[0].mxu0 %v3195
    %v3263 = vpop.f32.mrb[0].mxu0
    %v3264 = vadd.f32 0.0, %v3263
    %v3265 = vpop.f32.mrb[0].mxu0
    %3266 = vdwg.mxu0
    %3267 = vrot.lane.b32.xlu0 %v2041, 96
    %v3268 = vpop.permute.xlu0 %3267
    %v3271 = vsel %vm205, %v2710, 0
    %3273 = vmatprep.subr.mxu0 0.0
    %3274 = vmatpush1.msra.mxu0 %v3268
    %3275 = vmatprep.subr.mxu0 0.0
    %3276 = vmatpush1.msra.mxu0 0.0
    %3277 = vmatprep.subr.mxu0 0.0
    %3278 = vmatpush1.msra.mxu0 0.0
    %3279 = vmatprep.subr.mxu0 0.0
    %3280 = vmatpush1.msra.mxu0 0.0
    %3281 = vmatprep.subr.mxu0 0.0
    %3282 = vmatpush1.msra.mxu0 0.0
    %3283 = vmatprep.subr.mxu0 0.0
    %3284 = vmatpush1.msra.mxu0 0.0
    %3285 = vmatprep.subr.mxu0 0.0
    %3286 = vmatpush1.msra.mxu0 0.0
    %3287 = vmatprep.subr.mxu0 0.0
    %3288 = vmatpush1.msra.mxu0 0.0
    %3289 = vmatprep.subr.mxu0 0.0
    %3290 = vmatpush1.msra.mxu0 0.0
    %3291 = vmatprep.subr.mxu0 0.0
    %3292 = vmatpush1.msra.mxu0 0.0
    %3293 = vmatprep.subr.mxu0 0.0
    %3294 = vmatpush1.msra.mxu0 0.0
    %3295 = vmatprep.subr.mxu0 0.0
    %3296 = vmatpush1.msra.mxu0 0.0
    %3297 = vmatprep.subr.mxu0 0.0
    %3298 = vmatpush1.msra.mxu0 0.0
    %3299 = vmatprep.subr.mxu0 0.0
    %3300 = vmatpush1.msra.mxu0 0.0
    %3301 = vmatprep.subr.mxu0 0.0
    %3302 = vmatpush1.msra.mxu0 0.0
    %3303 = vmatprep.subr.mxu0 0.0
    %3304 = vmatpush1.msra.mxu0 0.0
    %3305 = vmatprep.subr.mxu0 0.0
    %3306 = vmatpush1.msra.mxu0 0.0
    %3307 = vmatprep.subr.mxu0 0.0
    %3308 = vmatpush1.msra.mxu0 0.0
    %3309 = vmatprep.subr.mxu0 0.0
    %3310 = vmatpush1.msra.mxu0 0.0
    %3311 = vmatprep.subr.mxu0 0.0
    %3312 = vmatpush1.msra.mxu0 0.0
    %3313 = vmatprep.subr.mxu0 0.0
    %3314 = vmatpush1.msra.mxu0 0.0
    %3315 = vmatprep.subr.mxu0 0.0
    %3316 = vmatpush1.msra.mxu0 0.0
    %3317 = vmatprep.subr.mxu0 0.0
    %3318 = vmatpush1.msra.mxu0 0.0
    %3319 = vmatprep.subr.mxu0 0.0
    %3320 = vmatpush1.msra.mxu0 0.0
    %3321 = vmatprep.subr.mxu0 0.0
    %3322 = vmatpush1.msra.mxu0 0.0
    %3323 = vmatprep.subr.mxu0 0.0
    %3324 = vmatpush1.msra.mxu0 0.0
    %3325 = vmatprep.subr.mxu0 0.0
    %3326 = vmatpush1.msra.mxu0 0.0
    %3327 = vmatprep.subr.mxu0 0.0
    %3328 = vmatpush1.msra.mxu0 0.0
    %3329 = vmatprep.subr.mxu0 0.0
    %3330 = vmatpush1.msra.mxu0 0.0
    %3331 = vmatprep.subr.mxu0 0.0
    %3332 = vmatpush1.msra.mxu0 0.0
    %3333 = vmatprep.subr.mxu0 0.0
    %3334 = vmatpush1.msra.mxu0 0.0
    %3335 = vmatprep.subr.mxu0 0.0
    %3336 = vmatpush1.msra.mxu0 0.0
    %3337 = vmatprep.mubr.f32.mxu0 0.0
    %3338 = vmatmul.mubr.f32.gmra.mrb[0].mxu0 %v3271
    %v3339 = vpop.f32.mrb[0].mxu0
    %v3340 = vadd.f32 0.0, %v3339
    %v3341 = vpop.f32.mrb[0].mxu0
    %3342 = vdwg.mxu0
    %v3343 = vrcp.pop %v2713
    %v3344 = vmul.f32 %v2808, %v3343
    %v3345 = vrcp.pop %v2716
    %v3346 = vmul.f32 %v2884, %v3345
    %v3347 = vrcp.pop %v2719
    %v3348 = vmul.f32 %v2960, %v3347
    %v3349 = vrcp.pop %v2722
    %v3350 = vmul.f32 %v3036, %v3349
    %v3351 = vrcp.pop %v2725
    %v3352 = vmul.f32 %v3112, %v3351
    %v3353 = vrcp.pop %v2728
    %v3354 = vmul.f32 %v3188, %v3353
    %v3355 = vrcp.pop %v2731
    %v3356 = vmul.f32 %v3264, %v3355
    %v3357 = vrcp.pop %v2734
    %v3358 = vmul.f32 %v3340, %v3357
    %3361 = vrot.lane.b32.xlu0 %v3348, 8
    %v3362 = vpop.permute.xlu0 %3361
    %3363 = vrot.lane.b32.xlu0 %v3350, 8
    %v3364 = vpop.permute.xlu0 %3363
    %3369 = vrot.lane.b32.xlu0 %v3352, 16
    %v3370 = vpop.permute.xlu0 %3369
    %3371 = vrot.lane.b32.xlu0 %v3354, 16
    %v3372 = vpop.permute.xlu0 %3371
    %3377 = vrot.lane.b32.xlu0 %v3356, 24
    %v3378 = vpop.permute.xlu0 %3377
    %3379 = vrot.lane.b32.xlu0 %v3358, 24
    %v3380 = vpop.permute.xlu0 %3379
    %v3383 = vsel %vm205, %v3344, %v3362
    %v3384 = vsel %vm205, %v3346, %v3364
    %v3385 = vsel %vm1550, %v3383, %v3370
    %v3386 = vsel %vm1550, %v3384, %v3372
    %v3387 = vsel %vm1553, %v3385, %v3378
    %v3388 = vsel %vm1553, %v3386, %v3380
    %v3389 = vlaneseq
    %v3390 = vshrl.u32 %v3389, 7
    %v3391 = vsub.s32 0, %v3390
    %v3392 = vrot.slane %v1928, %v3391
    %v3394 = vsel %vm107, %v3387, 0
    %v3397 = vsel %vm107, %v3388, 0
    %3399 = vmatprep.subr.mxu0 0.0
    %3400 = vmatpush1.msra.mxu0 %v1915
    %3401 = vmatprep.subr.mxu0 0.0
    %3402 = vmatpush1.msra.mxu0 %v1916
    %3403 = vmatprep.subr.mxu0 0.0
    %3404 = vmatpush1.msra.mxu0 %v1917
    %3405 = vmatprep.subr.mxu0 0.0
    %3406 = vmatpush1.msra.mxu0 %v1918
    %3407 = vmatprep.subr.mxu0 0.0
    %3408 = vmatpush1.msra.mxu0 0.0
    %3409 = vmatprep.subr.mxu0 0.0
    %3410 = vmatpush1.msra.mxu0 0.0
    %3411 = vmatprep.subr.mxu0 0.0
    %3412 = vmatpush1.msra.mxu0 0.0
    %3413 = vmatprep.subr.mxu0 0.0
    %3414 = vmatpush1.msra.mxu0 0.0
    %3415 = vmatprep.subr.mxu0 0.0
    %3416 = vmatpush1.msra.mxu0 0.0
    %3417 = vmatprep.subr.mxu0 0.0
    %3418 = vmatpush1.msra.mxu0 0.0
    %3419 = vmatprep.subr.mxu0 0.0
    %3420 = vmatpush1.msra.mxu0 0.0
    %3421 = vmatprep.subr.mxu0 0.0
    %3422 = vmatpush1.msra.mxu0 0.0
    %3423 = vmatprep.subr.mxu0 0.0
    %3424 = vmatpush1.msra.mxu0 0.0
    %3425 = vmatprep.subr.mxu0 0.0
    %3426 = vmatpush1.msra.mxu0 0.0
    %3427 = vmatprep.subr.mxu0 0.0
    %3428 = vmatpush1.msra.mxu0 0.0
    %3429 = vmatprep.subr.mxu0 0.0
    %3430 = vmatpush1.msra.mxu0 0.0
    %3431 = vmatprep.subr.mxu0 0.0
    %3432 = vmatpush1.msra.mxu0 0.0
    %3433 = vmatprep.subr.mxu0 0.0
    %3434 = vmatpush1.msra.mxu0 0.0
    %3435 = vmatprep.subr.mxu0 0.0
    %3436 = vmatpush1.msra.mxu0 0.0
    %3437 = vmatprep.subr.mxu0 0.0
    %3438 = vmatpush1.msra.mxu0 0.0
    %3439 = vmatprep.subr.mxu0 0.0
    %3440 = vmatpush1.msra.mxu0 0.0
    %3441 = vmatprep.subr.mxu0 0.0
    %3442 = vmatpush1.msra.mxu0 0.0
    %3443 = vmatprep.subr.mxu0 0.0
    %3444 = vmatpush1.msra.mxu0 0.0
    %3445 = vmatprep.subr.mxu0 0.0
    %3446 = vmatpush1.msra.mxu0 0.0
    %3447 = vmatprep.subr.mxu0 0.0
    %3448 = vmatpush1.msra.mxu0 0.0
    %3449 = vmatprep.subr.mxu0 0.0
    %3450 = vmatpush1.msra.mxu0 0.0
    %3451 = vmatprep.subr.mxu0 0.0
    %3452 = vmatpush1.msra.mxu0 0.0
    %3453 = vmatprep.subr.mxu0 0.0
    %3454 = vmatpush1.msra.mxu0 0.0
    %3455 = vmatprep.subr.mxu0 0.0
    %3456 = vmatpush1.msra.mxu0 0.0
    %3457 = vmatprep.subr.mxu0 0.0
    %3458 = vmatpush1.msra.mxu0 0.0
    %3459 = vmatprep.subr.mxu0 0.0
    %3460 = vmatpush1.msra.mxu0 0.0
    %3461 = vmatprep.subr.mxu0 0.0
    %3462 = vmatpush1.msra.mxu0 0.0
    %3463 = vmatprep.mubr.f32.mxu0 0.0
    %3464 = vmatmul.mubr.f32.gmra.mrb[0].mxu0 %v3394
    %v3465 = vpop.f32.mrb[0].mxu0
    %v3466 = vadd.f32 %v3392, %v3465
    %v3467 = vpop.f32.mrb[0].mxu0
    %3468 = vmatprep.mubr.f32.mxu0 0.0
    %3469 = vmatmul.mubr.f32.gmra.mrb[0].mxu0 %v3397
    %v3470 = vpop.f32.mrb[0].mxu0
    %v3471 = vadd.f32 %v3392, %v3470
    %v3472 = vpop.f32.mrb[0].mxu0
    %3473 = vdwg.mxu0
    %v3474 = vadd.f32 %v3466, %v1909
    %v3475 = vadd.f32 %v3471, %v1910
    %v3476 = vsel %vm107, %v3474, 0.0
    %3477 = vadd.xlane.f32.xlu0 %v3476
    %v3478 = vpop.xlane.xlu0 %3477
    %v3479 = vsel %vm107, %v3475, 0.0
    %3480 = vadd.xlane.f32.xlu0 %v3479
    %v3481 = vpop.xlane.xlu0 %3480
    %v3482 = vmul.f32 %v3478, %v1649
    %v3483 = vmul.f32 %v3481, %v1649
    %v3484 = vsub.f32 %v3474, %v3482
    %v3485 = vsub.f32 %v3475, %v3483
    %v3486 = vmul.f32 %v3484, %v3484
    %v3487 = vmul.f32 %v3485, %v3485
    %v3488 = vsel %vm107, %v3486, 0.0
    %3489 = vadd.xlane.f32.xlu0 %v3488
    %v3490 = vpop.xlane.xlu0 %3489
    %v3491 = vsel %vm107, %v3487, 0.0
    %3492 = vadd.xlane.f32.xlu0 %v3491
    %v3493 = vpop.xlane.xlu0 %3492
    %v3494 = vmul.f32 %v3490, %v1649
    %v3495 = vmul.f32 %v3493, %v1649
    %v3496 = vadd.f32 %v3494, 1e-12
    %v3497 = vadd.f32 %v3495, 1e-12
    %v3498 = vrsqrt.pop %v3496
    %v3499 = vrsqrt.pop %v3497
    %v3500 = vmul.f32 %v3484, %v3498
    %v3501 = vmul.f32 %v3485, %v3499
    %v3502 = vlaneseq
    %v3503 = vshrl.u32 %v3502, 7
    %v3504 = vsub.s32 0, %v3503
    %v3505 = vrot.slane %v1929, %v3504
    %v3506 = vmul.f32 %v3500, %v3505
    %v3507 = vmul.f32 %v3501, %v3505
    %v3508 = vlaneseq
    %v3509 = vshrl.u32 %v3508, 7
    %v3510 = vsub.s32 0, %v3509
    %v3511 = vrot.slane %v1930, %v3510
    %v3512 = vadd.f32 %v3506, %v3511
    %v3513 = vadd.f32 %v3507, %v3511
    %v3514 = vlaneseq
    %v3515 = vshrl.u32 %v3514, 7
    %v3516 = vsub.s32 0, %v3515
    %v3517 = vrot.slane %v1931, %v3516
    %v3519 = vsel %vm107, %v3512, 0
    %v3522 = vsel %vm107, %v3513, 0
    %3524 = vmatprep.subr.mxu0 0.0
    %3525 = vmatpush1.msra.mxu0 %v1919
    %3526 = vmatprep.subr.mxu0 0.0
    %3527 = vmatpush1.msra.mxu0 %v1920
    %3528 = vmatprep.subr.mxu0 0.0
    %3529 = vmatpush1.msra.mxu0 %v1921
    %3530 = vmatprep.subr.mxu0 0.0
    %3531 = vmatpush1.msra.mxu0 %v1922
    %3532 = vmatprep.subr.mxu0 0.0
    %3533 = vmatpush1.msra.mxu0 0.0
    %3534 = vmatprep.subr.mxu0 0.0
    %3535 = vmatpush1.msra.mxu0 0.0
    %3536 = vmatprep.subr.mxu0 0.0
    %3537 = vmatpush1.msra.mxu0 0.0
    %3538 = vmatprep.subr.mxu0 0.0
    %3539 = vmatpush1.msra.mxu0 0.0
    %3540 = vmatprep.subr.mxu0 0.0
    %3541 = vmatpush1.msra.mxu0 0.0
    %3542 = vmatprep.subr.mxu0 0.0
    %3543 = vmatpush1.msra.mxu0 0.0
    %3544 = vmatprep.subr.mxu0 0.0
    %3545 = vmatpush1.msra.mxu0 0.0
    %3546 = vmatprep.subr.mxu0 0.0
    %3547 = vmatpush1.msra.mxu0 0.0
    %3548 = vmatprep.subr.mxu0 0.0
    %3549 = vmatpush1.msra.mxu0 0.0
    %3550 = vmatprep.subr.mxu0 0.0
    %3551 = vmatpush1.msra.mxu0 0.0
    %3552 = vmatprep.subr.mxu0 0.0
    %3553 = vmatpush1.msra.mxu0 0.0
    %3554 = vmatprep.subr.mxu0 0.0
    %3555 = vmatpush1.msra.mxu0 0.0
    %3556 = vmatprep.subr.mxu0 0.0
    %3557 = vmatpush1.msra.mxu0 0.0
    %3558 = vmatprep.subr.mxu0 0.0
    %3559 = vmatpush1.msra.mxu0 0.0
    %3560 = vmatprep.subr.mxu0 0.0
    %3561 = vmatpush1.msra.mxu0 0.0
    %3562 = vmatprep.subr.mxu0 0.0
    %3563 = vmatpush1.msra.mxu0 0.0
    %3564 = vmatprep.subr.mxu0 0.0
    %3565 = vmatpush1.msra.mxu0 0.0
    %3566 = vmatprep.subr.mxu0 0.0
    %3567 = vmatpush1.msra.mxu0 0.0
    %3568 = vmatprep.subr.mxu0 0.0
    %3569 = vmatpush1.msra.mxu0 0.0
    %3570 = vmatprep.subr.mxu0 0.0
    %3571 = vmatpush1.msra.mxu0 0.0
    %3572 = vmatprep.subr.mxu0 0.0
    %3573 = vmatpush1.msra.mxu0 0.0
    %3574 = vmatprep.subr.mxu0 0.0
    %3575 = vmatpush1.msra.mxu0 0.0
    %3576 = vmatprep.subr.mxu0 0.0
    %3577 = vmatpush1.msra.mxu0 0.0
    %3578 = vmatprep.subr.mxu0 0.0
    %3579 = vmatpush1.msra.mxu0 0.0
    %3580 = vmatprep.subr.mxu0 0.0
    %3581 = vmatpush1.msra.mxu0 0.0
    %3582 = vmatprep.subr.mxu0 0.0
    %3583 = vmatpush1.msra.mxu0 0.0
    %3584 = vmatprep.subr.mxu0 0.0
    %3585 = vmatpush1.msra.mxu0 0.0
    %3586 = vmatprep.subr.mxu0 0.0
    %3587 = vmatpush1.msra.mxu0 0.0
    %3588 = vmatprep.mubr.f32.mxu0 0.0
    %3589 = vmatmul.mubr.f32.gmra.mrb[0].mxu0 %v3519
    %v3590 = vpop.f32.mrb[0].mxu0
    %v3591 = vadd.f32 %v3517, %v3590
    %v3592 = vpop.f32.mrb[0].mxu0
    %3593 = vmatprep.mubr.f32.mxu0 0.0
    %3594 = vmatmul.mubr.f32.gmra.mrb[0].mxu0 %v3522
    %v3595 = vpop.f32.mrb[0].mxu0
    %v3596 = vadd.f32 %v3517, %v3595
    %v3597 = vpop.f32.mrb[0].mxu0
    %3598 = vdwg.mxu0
    %v3599 = vmul.f32 %v3591, 0.5
    %v3600 = vmul.f32 %v3596, 0.5
    %v3601 = vmul.f32 %v3591, 0.044715
    %v3602 = vmul.f32 %v3596, 0.044715
    %v3603 = vmul.f32 %v3601, %v3591
    %v3604 = vmul.f32 %v3602, %v3596
    %v3605 = vmul.f32 %v3603, %v3591
    %v3606 = vmul.f32 %v3604, %v3596
    %v3607 = vadd.f32 %v3591, %v3605
    %v3608 = vadd.f32 %v3596, %v3606
    %v3609 = vmul.f32 %v3607, 0.7978846
    %v3610 = vmul.f32 %v3608, 0.7978846
    %v3611 = vtanh.pop %v3609
    %v3612 = vtanh.pop %v3610
    %v3613 = vadd.f32 %v3611, 1.0
    %v3614 = vadd.f32 %v3612, 1.0
    %v3615 = vmul.f32 %v3599, %v3613
    %v3616 = vmul.f32 %v3600, %v3614
    %v3617 = vlaneseq
    %v3618 = vshrl.u32 %v3617, 7
    %v3619 = vsub.s32 0, %v3618
    %v3620 = vrot.slane %v1932, %v3619
    %v3622 = vsel %vm107, %v3615, 0
    %v3625 = vsel %vm107, %v3616, 0
    %3627 = vmatprep.subr.mxu0 0.0
    %3628 = vmatpush1.msra.mxu0 %v1923
    %3629 = vmatprep.subr.mxu0 0.0
    %3630 = vmatpush1.msra.mxu0 %v1924
    %3631 = vmatprep.subr.mxu0 0.0
    %3632 = vmatpush1.msra.mxu0 %v1925
    %3633 = vmatprep.subr.mxu0 0.0
    %3634 = vmatpush1.msra.mxu0 %v1926
    %3635 = vmatprep.subr.mxu0 0.0
    %3636 = vmatpush1.msra.mxu0 0.0
    %3637 = vmatprep.subr.mxu0 0.0
    %3638 = vmatpush1.msra.mxu0 0.0
    %3639 = vmatprep.subr.mxu0 0.0
    %3640 = vmatpush1.msra.mxu0 0.0
    %3641 = vmatprep.subr.mxu0 0.0
    %3642 = vmatpush1.msra.mxu0 0.0
    %3643 = vmatprep.subr.mxu0 0.0
    %3644 = vmatpush1.msra.mxu0 0.0
    %3645 = vmatprep.subr.mxu0 0.0
    %3646 = vmatpush1.msra.mxu0 0.0
    %3647 = vmatprep.subr.mxu0 0.0
    %3648 = vmatpush1.msra.mxu0 0.0
    %3649 = vmatprep.subr.mxu0 0.0
    %3650 = vmatpush1.msra.mxu0 0.0
    %3651 = vmatprep.subr.mxu0 0.0
    %3652 = vmatpush1.msra.mxu0 0.0
    %3653 = vmatprep.subr.mxu0 0.0
    %3654 = vmatpush1.msra.mxu0 0.0
    %3655 = vmatprep.subr.mxu0 0.0
    %3656 = vmatpush1.msra.mxu0 0.0
    %3657 = vmatprep.subr.mxu0 0.0
    %3658 = vmatpush1.msra.mxu0 0.0
    %3659 = vmatprep.subr.mxu0 0.0
    %3660 = vmatpush1.msra.mxu0 0.0
    %3661 = vmatprep.subr.mxu0 0.0
    %3662 = vmatpush1.msra.mxu0 0.0
    %3663 = vmatprep.subr.mxu0 0.0
    %3664 = vmatpush1.msra.mxu0 0.0
    %3665 = vmatprep.subr.mxu0 0.0
    %3666 = vmatpush1.msra.mxu0 0.0
    %3667 = vmatprep.subr.mxu0 0.0
    %3668 = vmatpush1.msra.mxu0 0.0
    %3669 = vmatprep.subr.mxu0 0.0
    %3670 = vmatpush1.msra.mxu0 0.0
    %3671 = vmatprep.subr.mxu0 0.0
    %3672 = vmatpush1.msra.mxu0 0.0
    %3673 = vmatprep.subr.mxu0 0.0
    %3674 = vmatpush1.msra.mxu0 0.0
    %3675 = vmatprep.subr.mxu0 0.0
    %3676 = vmatpush1.msra.mxu0 0.0
    %3677 = vmatprep.subr.mxu0 0.0
    %3678 = vmatpush1.msra.mxu0 0.0
    %3679 = vmatprep.subr.mxu0 0.0
    %3680 = vmatpush1.msra.mxu0 0.0
    %3681 = vmatprep.subr.mxu0 0.0
    %3682 = vmatpush1.msra.mxu0 0.0
    %3683 = vmatprep.subr.mxu0 0.0
    %3684 = vmatpush1.msra.mxu0 0.0
    %3685 = vmatprep.subr.mxu0 0.0
    %3686 = vmatpush1.msra.mxu0 0.0
    %3687 = vmatprep.subr.mxu0 0.0
    %3688 = vmatpush1.msra.mxu0 0.0
    %3689 = vmatprep.subr.mxu0 0.0
    %3690 = vmatpush1.msra.mxu0 0.0
    %3691 = vmatprep.mubr.f32.mxu0 0.0
    %3692 = vmatmul.mubr.f32.gmra.mrb[0].mxu0 %v3622
    %v3693 = vpop.f32.mrb[0].mxu0
    %v3694 = vadd.f32 %v3620, %v3693
    %v3695 = vpop.f32.mrb[0].mxu0
    %3696 = vmatprep.mubr.f32.mxu0 0.0
    %3697 = vmatmul.mubr.f32.gmra.mrb[0].mxu0 %v3625
    %v3698 = vpop.f32.mrb[0].mxu0
    %v3699 = vadd.f32 %v3620, %v3698
    %v3700 = vpop.f32.mrb[0].mxu0
    %3701 = vdwg.mxu0
    %v3702 = vadd.f32 %v3694, %v3512
    %v3703 = vadd.f32 %v3699, %v3513
    %v3704 = vsel %vm107, %v3702, 0.0
    %3705 = vadd.xlane.f32.xlu0 %v3704
    %v3706 = vpop.xlane.xlu0 %3705
    %v3707 = vsel %vm107, %v3703, 0.0
    %3708 = vadd.xlane.f32.xlu0 %v3707
    %v3709 = vpop.xlane.xlu0 %3708
    %v3710 = vmul.f32 %v3706, %v1649
    %v3711 = vmul.f32 %v3709, %v1649
    %v3712 = vsub.f32 %v3702, %v3710
    %v3713 = vsub.f32 %v3703, %v3711
    %v3714 = vmul.f32 %v3712, %v3712
    %v3715 = vmul.f32 %v3713, %v3713
    %v3716 = vsel %vm107, %v3714, 0.0
    %3717 = vadd.xlane.f32.xlu0 %v3716
    %v3718 = vpop.xlane.xlu0 %3717
    %v3719 = vsel %vm107, %v3715, 0.0
    %3720 = vadd.xlane.f32.xlu0 %v3719
    %v3721 = vpop.xlane.xlu0 %3720
    %v3722 = vmul.f32 %v3718, %v1649
    %v3723 = vmul.f32 %v3721, %v1649
    %v3724 = vadd.f32 %v3722, 1e-12
    %v3725 = vadd.f32 %v3723, 1e-12
    %v3726 = vrsqrt.pop %v3724
    %v3727 = vrsqrt.pop %v3725
    %v3728 = vmul.f32 %v3712, %v3726
    %v3729 = vmul.f32 %v3713, %v3727
    %v3730 = vlaneseq
    %v3731 = vshrl.u32 %v3730, 7
    %v3732 = vsub.s32 0, %v3731
    %v3733 = vrot.slane %v1933, %v3732
    %v3734 = vmul.f32 %v3728, %v3733
    %v3735 = vmul.f32 %v3729, %v3733
    %v3736 = vlaneseq
    %v3737 = vshrl.u32 %v3736, 7
    %v3738 = vsub.s32 0, %v3737
    %v3739 = vrot.slane %v1934, %v3738
    %v3740 = vadd.f32 %v3734, %v3739
    %v3741 = vadd.f32 %v3735, %v3739
    %v3744 = vcombine.high %v3740, %v3740
    %v3745 = vcombine.high %v3741, %v3741
    %v3746 = vlaneseq
    %v3747 = vshrl.u32 %v3746, 7
    %v3748 = vsub.s32 0, %v3747
    %v3749 = vrot.slane %v3740, %v3748
    %v3750 = vlaneseq
    %v3751 = vshrl.u32 %v3750, 7
    %v3752 = vsub.s32 0, %v3751
    %v3753 = vrot.slane %v3744, %v3752
    %v3754 = vlaneseq
    %v3755 = vshrl.u32 %v3754, 7
    %v3756 = vsub.s32 0, %v3755
    %v3757 = vrot.slane %v3741, %v3756
    %v3758 = vlaneseq
    %v3759 = vshrl.u32 %v3758, 7
    %v3760 = vsub.s32 0, %v3759
    %v3761 = vrot.slane %v3745, %v3760
    %vm3762 = vcmask 1041409
    %v3763 = vsel %vm3762, %v3753, %v3749
    %vm3764 = vcmask 1042434
    %v3765 = vsel %vm3764, %v3757, %v3763
    %vm3766 = vcmask 1043459
    %v3767 = vsel %vm3766, %v3761, %v3765
    %v3769 = vlaneseq
    %v3770 = vshrl.u32 %v3769, 7
    %v3771 = vsub.s32 1, %v3770
    %v3772 = vrot.slane %v3740, %v3771
    %v3773 = vlaneseq
    %v3774 = vshrl.u32 %v3773, 7
    %v3775 = vsub.s32 1, %v3774
    %v3776 = vrot.slane %v3744, %v3775
    %v3777 = vlaneseq
    %v3778 = vshrl.u32 %v3777, 7
    %v3779 = vsub.s32 1, %v3778
    %v3780 = vrot.slane %v3741, %v3779
    %v3781 = vlaneseq
    %v3782 = vshrl.u32 %v3781, 7
    %v3783 = vsub.s32 1, %v3782
    %v3784 = vrot.slane %v3745, %v3783
    %v3785 = vsel %vm3762, %v3776, %v3772
    %v3786 = vsel %vm3764, %v3780, %v3785
    %v3787 = vsel %vm3766, %v3784, %v3786
    %3788 = vrot.lane.b32.xlu0 %v3787, 32
    %v3789 = vpop.permute.xlu0 %3788
    %v3791 = vlaneseq
    %v3792 = vshrl.u32 %v3791, 7
    %v3793 = vsub.s32 2, %v3792
    %v3794 = vrot.slane %v3740, %v3793
    %v3795 = vlaneseq
    %v3796 = vshrl.u32 %v3795, 7
    %v3797 = vsub.s32 2, %v3796
    %v3798 = vrot.slane %v3744, %v3797
    %v3799 = vlaneseq
    %v3800 = vshrl.u32 %v3799, 7
    %v3801 = vsub.s32 2, %v3800
    %v3802 = vrot.slane %v3741, %v3801
    %v3803 = vlaneseq
    %v3804 = vshrl.u32 %v3803, 7
    %v3805 = vsub.s32 2, %v3804
    %v3806 = vrot.slane %v3745, %v3805
    %v3807 = vsel %vm3762, %v3798, %v3794
    %v3808 = vsel %vm3764, %v3802, %v3807
    %v3809 = vsel %vm3766, %v3806, %v3808
    %3810 = vrot.lane.b32.xlu0 %v3809, 64
    %v3811 = vpop.permute.xlu0 %3810
    %v3813 = vlaneseq
    %v3814 = vshrl.u32 %v3813, 7
    %v3815 = vsub.s32 3, %v3814
    %v3816 = vrot.slane %v3740, %v3815
    %v3817 = vlaneseq
    %v3818 = vshrl.u32 %v3817, 7
    %v3819 = vsub.s32 3, %v3818
    %v3820 = vrot.slane %v3744, %v3819
    %v3821 = vlaneseq
    %v3822 = vshrl.u32 %v3821, 7
    %v3823 = vsub.s32 3, %v3822
    %v3824 = vrot.slane %v3741, %v3823
    %v3825 = vlaneseq
    %v3826 = vshrl.u32 %v3825, 7
    %v3827 = vsub.s32 3, %v3826
    %v3828 = vrot.slane %v3745, %v3827
    %v3829 = vsel %vm3762, %v3820, %v3816
    %v3830 = vsel %vm3764, %v3824, %v3829
    %v3831 = vsel %vm3766, %v3828, %v3830
    %3832 = vrot.lane.b32.xlu0 %v3831, 96
    %v3833 = vpop.permute.xlu0 %3832
    %v3835 = vsel %vm107, %v3767, %v3789
    %v3836 = vsel %vm1789, %v3835, %v3811
    %vm3837 = vcmask 785408
    %v3838 = vsel %vm3837, %v3836, %v3833
    %3839 = vst [vmem:[#allocation8] sm:$0xf] %v3838
    // Predicated region
    $region30: #{tpu_custom_call.1} parent=1 // pred_check
      _
    $region31: #{tpu_custom_call.1} parent=1 // pred_check_branch
      %3841 = sbr.rel (0) target = $region33
    $region32: #{tpu_custom_call.1} parent=1 // pred_region
      %s3843 = ssub.s32 64, 64
      %3844 = vsyncadd [#allocation4], %s3843
      %s3846 = sshll.u32 [#allocation8], 4
      %s3847 = int_to_ptr.vmem [resolvable:$true] %s3846
      %3849 = dma.vmem_to_hbm [thread:$0]  %s3847, 64, %s4, [#allocation4]
    $region33: #{tpu_custom_call.1} parent=1 // pred_fallthru
      _
    // Predicated region
    $region34: #{tpu_custom_call.1} parent=1 // pred_check
      _
    $region35: #{tpu_custom_call.1} parent=1 // pred_check_branch
      %3851 = sbr.rel (0) target = $region37
    $region36: #{tpu_custom_call.1} parent=1 // pred_region
      %3852 = dma.done [#allocation4], 64
    $region37: #{tpu_custom_call.1} parent=1 // pred_fallthru
      _
    %3853 = vsyncpa [#allocation3], 1
    %3854 = vsyncpa [#allocation6], 1
    %3855 = vsyncpa [#allocation4], 1

</llo_original>
